<compile_context>
chip_gen: v5e
topology: v5e:2x2
jax: 0.10.0
libtpu: 0.0.40
codegen_flags: <defaults>
</compile_context>

<pallas_src>
import functools

import jax
import jax.numpy as jnp
from jax.experimental import pallas as pl
from jax.experimental.pallas import tpu as pltpu


# ------------------------------ Pallas kernel -------------------------------

def _bidir_stack_kernel(x_ref, *refs, hidden_size, num_layers, batch):
    """One direction (selected by the grid index via the BlockSpecs) of the full
    multi-layer peephole-LSTM stack; time loop fully unrolled, all data VMEM."""
    H = hidden_size
    B = batch
    w_refs = refs[: 4 * num_layers]
    out_ref = refs[4 * num_layers]              # (T*B, H) last layer's hidden seq
    hseq_sc = refs[4 * num_layers + 1]          # (T*B, H) scratch: layer l's seq

    TB = x_ref.shape[0]
    T = TB // B

    xin = x_ref[...]                            # (T*B, Din) layer-0 input
    for layer in range(num_layers):
        u_ref, w_ref, b_ref, v_ref = w_refs[4 * layer: 4 * layer + 4]
        if layer > 0:
            xin = hseq_sc[...]                  # previous layer's hidden sequence

        # Hoisted input projection for ALL timesteps: one MXU matmul per layer.
        z_x = (jnp.dot(xin, u_ref[...], preferred_element_type=jnp.float32)
               + b_ref[...])                    # (T*B, 4H), gate order [f,i,c,o]

        w_rec = w_ref[...]                      # (H, 4H) recurrent weights
        v = v_ref[...]                          # (1, 3H) peepholes [f, i, o]
        v_f = v[:, 0:H]
        v_i = v[:, H:2 * H]
        v_o = v[:, 2 * H:3 * H]

        h = jnp.zeros((B, H), jnp.float32)      # zero initial states
        c = jnp.zeros((B, H), jnp.float32)
        last = layer == num_layers - 1
        for p in range(T):                      # static trip count -> unrolled
            z = (z_x[p * B:(p + 1) * B, :]
                 + jnp.dot(h, w_rec, preferred_element_type=jnp.float32))
            z_f = z[:, 0:H]
            z_i = z[:, H:2 * H]
            z_c = z[:, 2 * H:3 * H]
            z_o = z[:, 3 * H:4 * H]
            f = jax.nn.sigmoid(z_f + v_f * c)      # peephole on c_{t-1}
            i = jax.nn.sigmoid(z_i + v_i * c)      # peephole on c_{t-1}
            c = f * c + i * jnp.tanh(z_c)
            o = jax.nn.sigmoid(z_o + v_o * c)      # peephole on new c_t
            h = o * jnp.tanh(c)
            if last:
                out_ref[pl.ds(p * B, B), :] = h
            else:
                hseq_sc[pl.ds(p * B, B), :] = h


# ------------------------------ wrapper --------------------------------------

def custom_lstm_peephole_bid(x, params, *, hidden_size, num_layers):
    """Forward pass of CustomLSTM_With_Peephole (bidirectional, zero init).

    x: (B, T, input_size) -> returns (B, T, 2*hidden_size)."""
    B, T, d_in0 = x.shape
    H = hidden_size

    # Time-major, flattened 2-D slabs; direction 1 sees the sequence reversed
    # (backward pass, outputs kept in processing order like the reference).
    x_tm = jnp.transpose(x, (1, 0, 2))                       # (T, B, Din)
    x_stack = jnp.stack([x_tm.reshape(T * B, d_in0),
                         x_tm[::-1].reshape(T * B, d_in0)], axis=0)

    inputs = [x_stack]
    in_specs = [pl.BlockSpec((None, T * B, d_in0), lambda d: (d, 0, 0))]
    for layer in range(num_layers):
        u, w, b, v = params["layers"][layer]     # each stacked as (2, ...) fwd/bwd
        d_in = u.shape[1]
        inputs += [u, w, b, v]
        in_specs += [
            pl.BlockSpec((None, d_in, 4 * H), lambda d: (d, 0, 0)),
            pl.BlockSpec((None, H, 4 * H), lambda d: (d, 0, 0)),
            pl.BlockSpec((None, 1, 4 * H), lambda d: (d, 0, 0)),
            pl.BlockSpec((None, 1, 3 * H), lambda d: (d, 0, 0)),
        ]

    out_stack = pl.pallas_call(
        functools.partial(_bidir_stack_kernel, hidden_size=H,
                          num_layers=num_layers, batch=B),
        out_shape=jax.ShapeDtypeStruct((2, T * B, H), jnp.float32),
        grid_spec=pltpu.PrefetchScalarGridSpec(
            num_scalar_prefetch=0,
            grid=(2,),                         # grid axis = direction (fwd, bwd)
            in_specs=in_specs,
            out_specs=pl.BlockSpec((None, T * B, H), lambda d: (d, 0, 0)),
            scratch_shapes=[pltpu.VMEM((T * B, H), jnp.float32)],
        ),
        compiler_params=pltpu.CompilerParams(
            # Independent direction stacks -> split across the 2 TCs on v7x;
            # plain sequential 2-step grid on v5e/v6e.
            dimension_semantics=("parallel",)),
    )(*inputs)

    # (2, T*B, H) -> (B, T, 2H): forward features first, backward second
    # (backward kept in processing order, matching torch.cat((f, b), dim=2)).
    out_tm = jnp.concatenate([out_stack[0], out_stack[1]], axis=-1)
    return jnp.transpose(out_tm.reshape(T, B, 2 * H), (1, 0, 2))


# --------------------------- parameter init ----------------------------------

def _xavier_normal(key, shape):
    fan_in, fan_out = shape
    std = (2.0 / (fan_in + fan_out)) ** 0.5
    return std * jax.random.normal(key, shape, dtype=jnp.float32)


def _cell_params(key, input_sz, hidden_sz):
    """One LSTMCellWithPeephole: U (Din,4H), W (H,4H), b (1,4H), V (1,3H).
    Gate order [f, i, c, o]; peephole order [f, i, o]; b, V zero-init (as in
    the reference init_weights: xavier for matrices, zeros for vectors)."""
    ks = jax.random.split(key, 8)
    U = jnp.concatenate([_xavier_normal(ks[g], (input_sz, hidden_sz))
                         for g in range(4)], axis=1)
    W = jnp.concatenate([_xavier_normal(ks[4 + g], (hidden_sz, hidden_sz))
                         for g in range(4)], axis=1)
    b = jnp.zeros((1, 4 * hidden_sz), jnp.float32)
    V = jnp.zeros((1, 3 * hidden_sz), jnp.float32)
    return U, W, b, V


def init_params(key, input_size, hidden_size, num_layers):
    keys = jax.random.split(key, 2 * num_layers)
    layers = []
    for layer in range(num_layers):
        d_in = input_size if layer == 0 else hidden_size
        Uf, Wf, bf, Vf = _cell_params(keys[2 * layer], d_in, hidden_size)
        Ub, Wb, bb, Vb = _cell_params(keys[2 * layer + 1], d_in, hidden_size)
        layers.append((jnp.stack([Uf, Ub]), jnp.stack([Wf, Wb]),
                       jnp.stack([bf, bb]), jnp.stack([Vf, Vb])))
    return {"layers": layers}


# ----------------------- pure-JAX reference (for check) ----------------------

def _reference_forward(x, params, hidden_size, num_layers):
    B, T, _ = x.shape
    H = hidden_size

    def cell(xt, h, c, U, W, b, V):
        z = xt @ U + h @ W + b
        z_f, z_i, z_c, z_o = z[:, :H], z[:, H:2 * H], z[:, 2 * H:3 * H], z[:, 3 * H:]
        v_f, v_i, v_o = V[:, :H], V[:, H:2 * H], V[:, 2 * H:]
        f = jax.nn.sigmoid(z_f + v_f * c)
        i = jax.nn.sigmoid(z_i + v_i * c)
        c = f * c + i * jnp.tanh(z_c)
        o = jax.nn.sigmoid(z_o + v_o * c)
        return o * jnp.tanh(c), c

    fwd_seqs = []
    for layer in range(num_layers):
        U, W, b, V = [p[0] for p in params["layers"][layer]]
        h = jnp.zeros((B, H)); c = jnp.zeros((B, H)); outs = []
        for t in range(T):
            xt = x[:, t, :] if layer == 0 else fwd_seqs[layer - 1][:, t, :]
            h, c = cell(xt, h, c, U, W, b, V)
            outs.append(h)
        fwd_seqs.append(jnp.stack(outs, axis=1))

    bwd_seqs = []
    for layer in range(num_layers):
        U, W, b, V = [p[1] for p in params["layers"][layer]]
        h = jnp.zeros((B, H)); c = jnp.zeros((B, H)); outs = []
        for t in range(T - 1, -1, -1):
            xt = x[:, t, :] if layer == 0 else bwd_seqs[layer - 1][:, T - 1 - t, :]
            h, c = cell(xt, h, c, U, W, b, V)
            outs.append(h)
        bwd_seqs.append(jnp.stack(outs, axis=1))

    return jnp.concatenate([fwd_seqs[-1], bwd_seqs[-1]], axis=2)


# ----------------------------------- main ------------------------------------

if __name__ == "__main__":
    input_size = 4
    hidden_size = 32
    num_layers = 2
    batch = 2
    seq = 8

    key = jax.random.PRNGKey(0)
    kx, kp = jax.random.split(key)
    x = jax.random.normal(kx, (batch, seq, input_size), dtype=jnp.float32)
    params = init_params(kp, input_size, hidden_size, num_layers)

    fwd = jax.jit(functools.partial(custom_lstm_peephole_bid,
                                    hidden_size=hidden_size,
                                    num_layers=num_layers))
    out = jax.block_until_ready(fwd(x, params))

    assert out.shape == (batch, seq, 2 * hidden_size)
    assert bool(jnp.all(jnp.isfinite(out)))

    ref = _reference_forward(x, params, hidden_size, num_layers)
    max_err = float(jnp.max(jnp.abs(out - ref)))
    assert jnp.allclose(out, ref, atol=2e-3, rtol=2e-3), max_err

    print("KERNEL_OK")
</pallas_src>

<mosaic_0001>
module attributes {stable_mosaic.version = 11 : i64} {
  func.func @_bidir_stack_kernel(%arg0: i32, %arg1: memref<1x16x4xf32, #tpu.memory_space<vmem>>, %arg2: memref<1x4x128xf32, #tpu.memory_space<vmem>>, %arg3: memref<1x32x128xf32, #tpu.memory_space<vmem>>, %arg4: memref<1x1x128xf32, #tpu.memory_space<vmem>>, %arg5: memref<1x1x96xf32, #tpu.memory_space<vmem>>, %arg6: memref<1x32x128xf32, #tpu.memory_space<vmem>>, %arg7: memref<1x32x128xf32, #tpu.memory_space<vmem>>, %arg8: memref<1x1x128xf32, #tpu.memory_space<vmem>>, %arg9: memref<1x1x96xf32, #tpu.memory_space<vmem>>, %arg10: memref<1x16x32xf32, #tpu.memory_space<vmem>>, %arg11: memref<16x32xf32, #tpu.memory_space<vmem>>) attributes {dimension_semantics = [#tpu.dimension_semantics<parallel>], iteration_bounds = array<i64: 2>, scalar_prefetch = 0 : i64, scratch_operands = 1 : i64, tpu.core_type = #tpu.core_type<tc>, window_params = [{transform_indices = @transform_0, window_bounds = array<i64: 1, 16, 4>}, {transform_indices = @transform_1, window_bounds = array<i64: 1, 4, 128>}, {transform_indices = @transform_2, window_bounds = array<i64: 1, 32, 128>}, {transform_indices = @transform_3, window_bounds = array<i64: 1, 1, 128>}, {transform_indices = @transform_4, window_bounds = array<i64: 1, 1, 96>}, {transform_indices = @transform_5, window_bounds = array<i64: 1, 32, 128>}, {transform_indices = @transform_6, window_bounds = array<i64: 1, 32, 128>}, {transform_indices = @transform_7, window_bounds = array<i64: 1, 1, 128>}, {transform_indices = @transform_8, window_bounds = array<i64: 1, 1, 96>}, {transform_indices = @transform_9, window_bounds = array<i64: 1, 16, 32>}]} {
    %c0 = arith.constant 0 : index
    %c0_0 = arith.constant 0 : index
    %c0_1 = arith.constant 0 : index
    %0 = vector.load %arg1[%c0, %c0_0, %c0_1] : memref<1x16x4xf32, #tpu.memory_space<vmem>>, vector<1x16x4xf32>
    %1 = vector.shape_cast %0 : vector<1x16x4xf32> to vector<16x4xf32>
    %c0_2 = arith.constant 0 : index
    %c0_3 = arith.constant 0 : index
    %c0_4 = arith.constant 0 : index
    %2 = vector.load %arg2[%c0_2, %c0_3, %c0_4] : memref<1x4x128xf32, #tpu.memory_space<vmem>>, vector<1x4x128xf32>
    %3 = vector.shape_cast %2 : vector<1x4x128xf32> to vector<4x128xf32>
    %cst = arith.constant dense<0.000000e+00> : vector<16x128xf32>
    %4 = tpu.matmul %1, %3, %cst {dimension_numbers = #tpu.dot_dimension_numbers<[1], [0], [0], [1], [0, 0, 1, 1], [], []>} : vector<16x4xf32>, vector<4x128xf32>, vector<16x128xf32> -> vector<16x128xf32>
    %c0_5 = arith.constant 0 : index
    %c0_6 = arith.constant 0 : index
    %c0_7 = arith.constant 0 : index
    %5 = vector.load %arg4[%c0_5, %c0_6, %c0_7] : memref<1x1x128xf32, #tpu.memory_space<vmem>>, vector<1x1x128xf32>
    %6 = vector.shape_cast %5 : vector<1x1x128xf32> to vector<1x128xf32>
    %7 = vector.broadcast %6 : vector<1x128xf32> to vector<16x128xf32>
    %8 = arith.addf %4, %7 : vector<16x128xf32>
    %c0_8 = arith.constant 0 : index
    %c0_9 = arith.constant 0 : index
    %c0_10 = arith.constant 0 : index
    %9 = vector.load %arg3[%c0_8, %c0_9, %c0_10] : memref<1x32x128xf32, #tpu.memory_space<vmem>>, vector<1x32x128xf32>
    %10 = vector.shape_cast %9 : vector<1x32x128xf32> to vector<32x128xf32>
    %c0_11 = arith.constant 0 : index
    %c0_12 = arith.constant 0 : index
    %c0_13 = arith.constant 0 : index
    %11 = vector.load %arg5[%c0_11, %c0_12, %c0_13] : memref<1x1x96xf32, #tpu.memory_space<vmem>>, vector<1x1x96xf32>
    %12 = vector.shape_cast %11 : vector<1x1x96xf32> to vector<1x96xf32>
    %13 = vector.extract_strided_slice %12 {offsets = [0, 0], sizes = [1, 32], strides = [1, 1]} : vector<1x96xf32> to vector<1x32xf32>
    %14 = vector.extract_strided_slice %12 {offsets = [0, 32], sizes = [1, 32], strides = [1, 1]} : vector<1x96xf32> to vector<1x32xf32>
    %15 = vector.extract_strided_slice %12 {offsets = [0, 64], sizes = [1, 32], strides = [1, 1]} : vector<1x96xf32> to vector<1x32xf32>
    %cst_14 = arith.constant 0.000000e+00 : f32
    %16 = vector.broadcast %cst_14 : f32 to vector<2x32xf32>
    %cst_15 = arith.constant 0.000000e+00 : f32
    %17 = vector.broadcast %cst_15 : f32 to vector<2x32xf32>
    %18 = vector.extract_strided_slice %8 {offsets = [0, 0], sizes = [2, 128], strides = [1, 1]} : vector<16x128xf32> to vector<2x128xf32>
    %cst_16 = arith.constant dense<0.000000e+00> : vector<2x128xf32>
    %19 = tpu.matmul %16, %10, %cst_16 {dimension_numbers = #tpu.dot_dimension_numbers<[1], [0], [0], [1], [0, 0, 1, 1], [], []>} : vector<2x32xf32>, vector<32x128xf32>, vector<2x128xf32> -> vector<2x128xf32>
    %20 = arith.addf %18, %19 : vector<2x128xf32>
    %21 = vector.extract_strided_slice %20 {offsets = [0, 0], sizes = [2, 32], strides = [1, 1]} : vector<2x128xf32> to vector<2x32xf32>
    %22 = vector.extract_strided_slice %20 {offsets = [0, 32], sizes = [2, 32], strides = [1, 1]} : vector<2x128xf32> to vector<2x32xf32>
    %23 = vector.extract_strided_slice %20 {offsets = [0, 64], sizes = [2, 32], strides = [1, 1]} : vector<2x128xf32> to vector<2x32xf32>
    %24 = vector.extract_strided_slice %20 {offsets = [0, 96], sizes = [2, 32], strides = [1, 1]} : vector<2x128xf32> to vector<2x32xf32>
    %25 = vector.broadcast %13 : vector<1x32xf32> to vector<2x32xf32>
    %26 = arith.mulf %25, %17 : vector<2x32xf32>
    %27 = arith.addf %21, %26 : vector<2x32xf32>
    %28 = arith.negf %27 : vector<2x32xf32>
    %29 = math.exp %28 : vector<2x32xf32>
    %cst_17 = arith.constant 1.000000e+00 : f32
    %30 = vector.broadcast %cst_17 : f32 to vector<2x32xf32>
    %31 = arith.addf %30, %29 : vector<2x32xf32>
    %32 = arith.divf %30, %31 : vector<2x32xf32>
    %33 = vector.broadcast %14 : vector<1x32xf32> to vector<2x32xf32>
    %34 = arith.mulf %33, %17 : vector<2x32xf32>
    %35 = arith.addf %22, %34 : vector<2x32xf32>
    %36 = arith.negf %35 : vector<2x32xf32>
    %37 = math.exp %36 : vector<2x32xf32>
    %cst_18 = arith.constant 1.000000e+00 : f32
    %38 = vector.broadcast %cst_18 : f32 to vector<2x32xf32>
    %39 = arith.addf %38, %37 : vector<2x32xf32>
    %40 = arith.divf %38, %39 : vector<2x32xf32>
    %41 = arith.mulf %32, %17 : vector<2x32xf32>
    %42 = math.tanh %23 : vector<2x32xf32>
    %43 = arith.mulf %40, %42 : vector<2x32xf32>
    %44 = arith.addf %41, %43 : vector<2x32xf32>
    %45 = vector.broadcast %15 : vector<1x32xf32> to vector<2x32xf32>
    %46 = arith.mulf %45, %44 : vector<2x32xf32>
    %47 = arith.addf %24, %46 : vector<2x32xf32>
    %48 = arith.negf %47 : vector<2x32xf32>
    %49 = math.exp %48 : vector<2x32xf32>
    %cst_19 = arith.constant 1.000000e+00 : f32
    %50 = vector.broadcast %cst_19 : f32 to vector<2x32xf32>
    %51 = arith.addf %50, %49 : vector<2x32xf32>
    %52 = arith.divf %50, %51 : vector<2x32xf32>
    %53 = math.tanh %44 : vector<2x32xf32>
    %54 = arith.mulf %52, %53 : vector<2x32xf32>
    %c0_20 = arith.constant 0 : index
    %c0_21 = arith.constant 0 : index
    %55 = vector.load %arg11[%c0_20, %c0_21] : memref<16x32xf32, #tpu.memory_space<vmem>>, vector<2x32xf32>
    tpu.vector_store %arg11[%c0_20, %c0_21], %54 {strides = array<i32>} : memref<16x32xf32, #tpu.memory_space<vmem>>, vector<2x32xf32>,
    %56 = vector.extract_strided_slice %8 {offsets = [2, 0], sizes = [2, 128], strides = [1, 1]} : vector<16x128xf32> to vector<2x128xf32>
    %cst_22 = arith.constant dense<0.000000e+00> : vector<2x128xf32>
    %57 = tpu.matmul %54, %10, %cst_22 {dimension_numbers = #tpu.dot_dimension_numbers<[1], [0], [0], [1], [0, 0, 1, 1], [], []>} : vector<2x32xf32>, vector<32x128xf32>, vector<2x128xf32> -> vector<2x128xf32>
    %58 = arith.addf %56, %57 : vector<2x128xf32>
    %59 = vector.extract_strided_slice %58 {offsets = [0, 0], sizes = [2, 32], strides = [1, 1]} : vector<2x128xf32> to vector<2x32xf32>
    %60 = vector.extract_strided_slice %58 {offsets = [0, 32], sizes = [2, 32], strides = [1, 1]} : vector<2x128xf32> to vector<2x32xf32>
    %61 = vector.extract_strided_slice %58 {offsets = [0, 64], sizes = [2, 32], strides = [1, 1]} : vector<2x128xf32> to vector<2x32xf32>
    %62 = vector.extract_strided_slice %58 {offsets = [0, 96], sizes = [2, 32], strides = [1, 1]} : vector<2x128xf32> to vector<2x32xf32>
    %63 = vector.broadcast %13 : vector<1x32xf32> to vector<2x32xf32>
    %64 = arith.mulf %63, %44 : vector<2x32xf32>
    %65 = arith.addf %59, %64 : vector<2x32xf32>
    %66 = arith.negf %65 : vector<2x32xf32>
    %67 = math.exp %66 : vector<2x32xf32>
    %cst_23 = arith.constant 1.000000e+00 : f32
    %68 = vector.broadcast %cst_23 : f32 to vector<2x32xf32>
    %69 = arith.addf %68, %67 : vector<2x32xf32>
    %70 = arith.divf %68, %69 : vector<2x32xf32>
    %71 = vector.broadcast %14 : vector<1x32xf32> to vector<2x32xf32>
    %72 = arith.mulf %71, %44 : vector<2x32xf32>
    %73 = arith.addf %60, %72 : vector<2x32xf32>
    %74 = arith.negf %73 : vector<2x32xf32>
    %75 = math.exp %74 : vector<2x32xf32>
    %cst_24 = arith.constant 1.000000e+00 : f32
    %76 = vector.broadcast %cst_24 : f32 to vector<2x32xf32>
    %77 = arith.addf %76, %75 : vector<2x32xf32>
    %78 = arith.divf %76, %77 : vector<2x32xf32>
    %79 = arith.mulf %70, %44 : vector<2x32xf32>
    %80 = math.tanh %61 : vector<2x32xf32>
    %81 = arith.mulf %78, %80 : vector<2x32xf32>
    %82 = arith.addf %79, %81 : vector<2x32xf32>
    %83 = vector.broadcast %15 : vector<1x32xf32> to vector<2x32xf32>
    %84 = arith.mulf %83, %82 : vector<2x32xf32>
    %85 = arith.addf %62, %84 : vector<2x32xf32>
    %86 = arith.negf %85 : vector<2x32xf32>
    %87 = math.exp %86 : vector<2x32xf32>
    %cst_25 = arith.constant 1.000000e+00 : f32
    %88 = vector.broadcast %cst_25 : f32 to vector<2x32xf32>
    %89 = arith.addf %88, %87 : vector<2x32xf32>
    %90 = arith.divf %88, %89 : vector<2x32xf32>
    %91 = math.tanh %82 : vector<2x32xf32>
    %92 = arith.mulf %90, %91 : vector<2x32xf32>
    %c2 = arith.constant 2 : index
    %c0_26 = arith.constant 0 : index
    %93 = vector.load %arg11[%c2, %c0_26] : memref<16x32xf32, #tpu.memory_space<vmem>>, vector<2x32xf32>
    tpu.vector_store %arg11[%c2, %c0_26], %92 {strides = array<i32>} : memref<16x32xf32, #tpu.memory_space<vmem>>, vector<2x32xf32>,
    %94 = vector.extract_strided_slice %8 {offsets = [4, 0], sizes = [2, 128], strides = [1, 1]} : vector<16x128xf32> to vector<2x128xf32>
    %cst_27 = arith.constant dense<0.000000e+00> : vector<2x128xf32>
    %95 = tpu.matmul %92, %10, %cst_27 {dimension_numbers = #tpu.dot_dimension_numbers<[1], [0], [0], [1], [0, 0, 1, 1], [], []>} : vector<2x32xf32>, vector<32x128xf32>, vector<2x128xf32> -> vector<2x128xf32>
    %96 = arith.addf %94, %95 : vector<2x128xf32>
    %97 = vector.extract_strided_slice %96 {offsets = [0, 0], sizes = [2, 32], strides = [1, 1]} : vector<2x128xf32> to vector<2x32xf32>
    %98 = vector.extract_strided_slice %96 {offsets = [0, 32], sizes = [2, 32], strides = [1, 1]} : vector<2x128xf32> to vector<2x32xf32>
    %99 = vector.extract_strided_slice %96 {offsets = [0, 64], sizes = [2, 32], strides = [1, 1]} : vector<2x128xf32> to vector<2x32xf32>
    %100 = vector.extract_strided_slice %96 {offsets = [0, 96], sizes = [2, 32], strides = [1, 1]} : vector<2x128xf32> to vector<2x32xf32>
    %101 = vector.broadcast %13 : vector<1x32xf32> to vector<2x32xf32>
    %102 = arith.mulf %101, %82 : vector<2x32xf32>
    %103 = arith.addf %97, %102 : vector<2x32xf32>
    %104 = arith.negf %103 : vector<2x32xf32>
    %105 = math.exp %104 : vector<2x32xf32>
    %cst_28 = arith.constant 1.000000e+00 : f32
    %106 = vector.broadcast %cst_28 : f32 to vector<2x32xf32>
    %107 = arith.addf %106, %105 : vector<2x32xf32>
    %108 = arith.divf %106, %107 : vector<2x32xf32>
    %109 = vector.broadcast %14 : vector<1x32xf32> to vector<2x32xf32>
    %110 = arith.mulf %109, %82 : vector<2x32xf32>
    %111 = arith.addf %98, %110 : vector<2x32xf32>
    %112 = arith.negf %111 : vector<2x32xf32>
    %113 = math.exp %112 : vector<2x32xf32>
    %cst_29 = arith.constant 1.000000e+00 : f32
    %114 = vector.broadcast %cst_29 : f32 to vector<2x32xf32>
    %115 = arith.addf %114, %113 : vector<2x32xf32>
    %116 = arith.divf %114, %115 : vector<2x32xf32>
    %117 = arith.mulf %108, %82 : vector<2x32xf32>
    %118 = math.tanh %99 : vector<2x32xf32>
    %119 = arith.mulf %116, %118 : vector<2x32xf32>
    %120 = arith.addf %117, %119 : vector<2x32xf32>
    %121 = vector.broadcast %15 : vector<1x32xf32> to vector<2x32xf32>
    %122 = arith.mulf %121, %120 : vector<2x32xf32>
    %123 = arith.addf %100, %122 : vector<2x32xf32>
    %124 = arith.negf %123 : vector<2x32xf32>
    %125 = math.exp %124 : vector<2x32xf32>
    %cst_30 = arith.constant 1.000000e+00 : f32
    %126 = vector.broadcast %cst_30 : f32 to vector<2x32xf32>
    %127 = arith.addf %126, %125 : vector<2x32xf32>
    %128 = arith.divf %126, %127 : vector<2x32xf32>
    %129 = math.tanh %120 : vector<2x32xf32>
    %130 = arith.mulf %128, %129 : vector<2x32xf32>
    %c4 = arith.constant 4 : index
    %c0_31 = arith.constant 0 : index
    %131 = vector.load %arg11[%c4, %c0_31] : memref<16x32xf32, #tpu.memory_space<vmem>>, vector<2x32xf32>
    tpu.vector_store %arg11[%c4, %c0_31], %130 {strides = array<i32>} : memref<16x32xf32, #tpu.memory_space<vmem>>, vector<2x32xf32>,
    %132 = vector.extract_strided_slice %8 {offsets = [6, 0], sizes = [2, 128], strides = [1, 1]} : vector<16x128xf32> to vector<2x128xf32>
    %cst_32 = arith.constant dense<0.000000e+00> : vector<2x128xf32>
    %133 = tpu.matmul %130, %10, %cst_32 {dimension_numbers = #tpu.dot_dimension_numbers<[1], [0], [0], [1], [0, 0, 1, 1], [], []>} : vector<2x32xf32>, vector<32x128xf32>, vector<2x128xf32> -> vector<2x128xf32>
    %134 = arith.addf %132, %133 : vector<2x128xf32>
    %135 = vector.extract_strided_slice %134 {offsets = [0, 0], sizes = [2, 32], strides = [1, 1]} : vector<2x128xf32> to vector<2x32xf32>
    %136 = vector.extract_strided_slice %134 {offsets = [0, 32], sizes = [2, 32], strides = [1, 1]} : vector<2x128xf32> to vector<2x32xf32>
    %137 = vector.extract_strided_slice %134 {offsets = [0, 64], sizes = [2, 32], strides = [1, 1]} : vector<2x128xf32> to vector<2x32xf32>
    %138 = vector.extract_strided_slice %134 {offsets = [0, 96], sizes = [2, 32], strides = [1, 1]} : vector<2x128xf32> to vector<2x32xf32>
    %139 = vector.broadcast %13 : vector<1x32xf32> to vector<2x32xf32>
    %140 = arith.mulf %139, %120 : vector<2x32xf32>
    %141 = arith.addf %135, %140 : vector<2x32xf32>
    %142 = arith.negf %141 : vector<2x32xf32>
    %143 = math.exp %142 : vector<2x32xf32>
    %cst_33 = arith.constant 1.000000e+00 : f32
    %144 = vector.broadcast %cst_33 : f32 to vector<2x32xf32>
    %145 = arith.addf %144, %143 : vector<2x32xf32>
    %146 = arith.divf %144, %145 : vector<2x32xf32>
    %147 = vector.broadcast %14 : vector<1x32xf32> to vector<2x32xf32>
    %148 = arith.mulf %147, %120 : vector<2x32xf32>
    %149 = arith.addf %136, %148 : vector<2x32xf32>
    %150 = arith.negf %149 : vector<2x32xf32>
    %151 = math.exp %150 : vector<2x32xf32>
    %cst_34 = arith.constant 1.000000e+00 : f32
    %152 = vector.broadcast %cst_34 : f32 to vector<2x32xf32>
    %153 = arith.addf %152, %151 : vector<2x32xf32>
    %154 = arith.divf %152, %153 : vector<2x32xf32>
    %155 = arith.mulf %146, %120 : vector<2x32xf32>
    %156 = math.tanh %137 : vector<2x32xf32>
    %157 = arith.mulf %154, %156 : vector<2x32xf32>
    %158 = arith.addf %155, %157 : vector<2x32xf32>
    %159 = vector.broadcast %15 : vector<1x32xf32> to vector<2x32xf32>
    %160 = arith.mulf %159, %158 : vector<2x32xf32>
    %161 = arith.addf %138, %160 : vector<2x32xf32>
    %162 = arith.negf %161 : vector<2x32xf32>
    %163 = math.exp %162 : vector<2x32xf32>
    %cst_35 = arith.constant 1.000000e+00 : f32
    %164 = vector.broadcast %cst_35 : f32 to vector<2x32xf32>
    %165 = arith.addf %164, %163 : vector<2x32xf32>
    %166 = arith.divf %164, %165 : vector<2x32xf32>
    %167 = math.tanh %158 : vector<2x32xf32>
    %168 = arith.mulf %166, %167 : vector<2x32xf32>
    %c6 = arith.constant 6 : index
    %c0_36 = arith.constant 0 : index
    %169 = vector.load %arg11[%c6, %c0_36] : memref<16x32xf32, #tpu.memory_space<vmem>>, vector<2x32xf32>
    tpu.vector_store %arg11[%c6, %c0_36], %168 {strides = array<i32>} : memref<16x32xf32, #tpu.memory_space<vmem>>, vector<2x32xf32>,
    %170 = vector.extract_strided_slice %8 {offsets = [8, 0], sizes = [2, 128], strides = [1, 1]} : vector<16x128xf32> to vector<2x128xf32>
    %cst_37 = arith.constant dense<0.000000e+00> : vector<2x128xf32>
    %171 = tpu.matmul %168, %10, %cst_37 {dimension_numbers = #tpu.dot_dimension_numbers<[1], [0], [0], [1], [0, 0, 1, 1], [], []>} : vector<2x32xf32>, vector<32x128xf32>, vector<2x128xf32> -> vector<2x128xf32>
    %172 = arith.addf %170, %171 : vector<2x128xf32>
    %173 = vector.extract_strided_slice %172 {offsets = [0, 0], sizes = [2, 32], strides = [1, 1]} : vector<2x128xf32> to vector<2x32xf32>
    %174 = vector.extract_strided_slice %172 {offsets = [0, 32], sizes = [2, 32], strides = [1, 1]} : vector<2x128xf32> to vector<2x32xf32>
    %175 = vector.extract_strided_slice %172 {offsets = [0, 64], sizes = [2, 32], strides = [1, 1]} : vector<2x128xf32> to vector<2x32xf32>
    %176 = vector.extract_strided_slice %172 {offsets = [0, 96], sizes = [2, 32], strides = [1, 1]} : vector<2x128xf32> to vector<2x32xf32>
    %177 = vector.broadcast %13 : vector<1x32xf32> to vector<2x32xf32>
    %178 = arith.mulf %177, %158 : vector<2x32xf32>
    %179 = arith.addf %173, %178 : vector<2x32xf32>
    %180 = arith.negf %179 : vector<2x32xf32>
    %181 = math.exp %180 : vector<2x32xf32>
    %cst_38 = arith.constant 1.000000e+00 : f32
    %182 = vector.broadcast %cst_38 : f32 to vector<2x32xf32>
    %183 = arith.addf %182, %181 : vector<2x32xf32>
    %184 = arith.divf %182, %183 : vector<2x32xf32>
    %185 = vector.broadcast %14 : vector<1x32xf32> to vector<2x32xf32>
    %186 = arith.mulf %185, %158 : vector<2x32xf32>
    %187 = arith.addf %174, %186 : vector<2x32xf32>
    %188 = arith.negf %187 : vector<2x32xf32>
    %189 = math.exp %188 : vector<2x32xf32>
    %cst_39 = arith.constant 1.000000e+00 : f32
    %190 = vector.broadcast %cst_39 : f32 to vector<2x32xf32>
    %191 = arith.addf %190, %189 : vector<2x32xf32>
    %192 = arith.divf %190, %191 : vector<2x32xf32>
    %193 = arith.mulf %184, %158 : vector<2x32xf32>
    %194 = math.tanh %175 : vector<2x32xf32>
    %195 = arith.mulf %192, %194 : vector<2x32xf32>
    %196 = arith.addf %193, %195 : vector<2x32xf32>
    %197 = vector.broadcast %15 : vector<1x32xf32> to vector<2x32xf32>
    %198 = arith.mulf %197, %196 : vector<2x32xf32>
    %199 = arith.addf %176, %198 : vector<2x32xf32>
    %200 = arith.negf %199 : vector<2x32xf32>
    %201 = math.exp %200 : vector<2x32xf32>
    %cst_40 = arith.constant 1.000000e+00 : f32
    %202 = vector.broadcast %cst_40 : f32 to vector<2x32xf32>
    %203 = arith.addf %202, %201 : vector<2x32xf32>
    %204 = arith.divf %202, %203 : vector<2x32xf32>
    %205 = math.tanh %196 : vector<2x32xf32>
    %206 = arith.mulf %204, %205 : vector<2x32xf32>
    %c8 = arith.constant 8 : index
    %c0_41 = arith.constant 0 : index
    %207 = vector.load %arg11[%c8, %c0_41] : memref<16x32xf32, #tpu.memory_space<vmem>>, vector<2x32xf32>
    tpu.vector_store %arg11[%c8, %c0_41], %206 {strides = array<i32>} : memref<16x32xf32, #tpu.memory_space<vmem>>, vector<2x32xf32>,
    %208 = vector.extract_strided_slice %8 {offsets = [10, 0], sizes = [2, 128], strides = [1, 1]} : vector<16x128xf32> to vector<2x128xf32>
    %cst_42 = arith.constant dense<0.000000e+00> : vector<2x128xf32>
    %209 = tpu.matmul %206, %10, %cst_42 {dimension_numbers = #tpu.dot_dimension_numbers<[1], [0], [0], [1], [0, 0, 1, 1], [], []>} : vector<2x32xf32>, vector<32x128xf32>, vector<2x128xf32> -> vector<2x128xf32>
    %210 = arith.addf %208, %209 : vector<2x128xf32>
    %211 = vector.extract_strided_slice %210 {offsets = [0, 0], sizes = [2, 32], strides = [1, 1]} : vector<2x128xf32> to vector<2x32xf32>
    %212 = vector.extract_strided_slice %210 {offsets = [0, 32], sizes = [2, 32], strides = [1, 1]} : vector<2x128xf32> to vector<2x32xf32>
    %213 = vector.extract_strided_slice %210 {offsets = [0, 64], sizes = [2, 32], strides = [1, 1]} : vector<2x128xf32> to vector<2x32xf32>
    %214 = vector.extract_strided_slice %210 {offsets = [0, 96], sizes = [2, 32], strides = [1, 1]} : vector<2x128xf32> to vector<2x32xf32>
    %215 = vector.broadcast %13 : vector<1x32xf32> to vector<2x32xf32>
    %216 = arith.mulf %215, %196 : vector<2x32xf32>
    %217 = arith.addf %211, %216 : vector<2x32xf32>
    %218 = arith.negf %217 : vector<2x32xf32>
    %219 = math.exp %218 : vector<2x32xf32>
    %cst_43 = arith.constant 1.000000e+00 : f32
    %220 = vector.broadcast %cst_43 : f32 to vector<2x32xf32>
    %221 = arith.addf %220, %219 : vector<2x32xf32>
    %222 = arith.divf %220, %221 : vector<2x32xf32>
    %223 = vector.broadcast %14 : vector<1x32xf32> to vector<2x32xf32>
    %224 = arith.mulf %223, %196 : vector<2x32xf32>
    %225 = arith.addf %212, %224 : vector<2x32xf32>
    %226 = arith.negf %225 : vector<2x32xf32>
    %227 = math.exp %226 : vector<2x32xf32>
    %cst_44 = arith.constant 1.000000e+00 : f32
    %228 = vector.broadcast %cst_44 : f32 to vector<2x32xf32>
    %229 = arith.addf %228, %227 : vector<2x32xf32>
    %230 = arith.divf %228, %229 : vector<2x32xf32>
    %231 = arith.mulf %222, %196 : vector<2x32xf32>
    %232 = math.tanh %213 : vector<2x32xf32>
    %233 = arith.mulf %230, %232 : vector<2x32xf32>
    %234 = arith.addf %231, %233 : vector<2x32xf32>
    %235 = vector.broadcast %15 : vector<1x32xf32> to vector<2x32xf32>
    %236 = arith.mulf %235, %234 : vector<2x32xf32>
    %237 = arith.addf %214, %236 : vector<2x32xf32>
    %238 = arith.negf %237 : vector<2x32xf32>
    %239 = math.exp %238 : vector<2x32xf32>
    %cst_45 = arith.constant 1.000000e+00 : f32
    %240 = vector.broadcast %cst_45 : f32 to vector<2x32xf32>
    %241 = arith.addf %240, %239 : vector<2x32xf32>
    %242 = arith.divf %240, %241 : vector<2x32xf32>
    %243 = math.tanh %234 : vector<2x32xf32>
    %244 = arith.mulf %242, %243 : vector<2x32xf32>
    %c10 = arith.constant 10 : index
    %c0_46 = arith.constant 0 : index
    %245 = vector.load %arg11[%c10, %c0_46] : memref<16x32xf32, #tpu.memory_space<vmem>>, vector<2x32xf32>
    tpu.vector_store %arg11[%c10, %c0_46], %244 {strides = array<i32>} : memref<16x32xf32, #tpu.memory_space<vmem>>, vector<2x32xf32>,
    %246 = vector.extract_strided_slice %8 {offsets = [12, 0], sizes = [2, 128], strides = [1, 1]} : vector<16x128xf32> to vector<2x128xf32>
    %cst_47 = arith.constant dense<0.000000e+00> : vector<2x128xf32>
    %247 = tpu.matmul %244, %10, %cst_47 {dimension_numbers = #tpu.dot_dimension_numbers<[1], [0], [0], [1], [0, 0, 1, 1], [], []>} : vector<2x32xf32>, vector<32x128xf32>, vector<2x128xf32> -> vector<2x128xf32>
    %248 = arith.addf %246, %247 : vector<2x128xf32>
    %249 = vector.extract_strided_slice %248 {offsets = [0, 0], sizes = [2, 32], strides = [1, 1]} : vector<2x128xf32> to vector<2x32xf32>
    %250 = vector.extract_strided_slice %248 {offsets = [0, 32], sizes = [2, 32], strides = [1, 1]} : vector<2x128xf32> to vector<2x32xf32>
    %251 = vector.extract_strided_slice %248 {offsets = [0, 64], sizes = [2, 32], strides = [1, 1]} : vector<2x128xf32> to vector<2x32xf32>
    %252 = vector.extract_strided_slice %248 {offsets = [0, 96], sizes = [2, 32], strides = [1, 1]} : vector<2x128xf32> to vector<2x32xf32>
    %253 = vector.broadcast %13 : vector<1x32xf32> to vector<2x32xf32>
    %254 = arith.mulf %253, %234 : vector<2x32xf32>
    %255 = arith.addf %249, %254 : vector<2x32xf32>
    %256 = arith.negf %255 : vector<2x32xf32>
    %257 = math.exp %256 : vector<2x32xf32>
    %cst_48 = arith.constant 1.000000e+00 : f32
    %258 = vector.broadcast %cst_48 : f32 to vector<2x32xf32>
    %259 = arith.addf %258, %257 : vector<2x32xf32>
    %260 = arith.divf %258, %259 : vector<2x32xf32>
    %261 = vector.broadcast %14 : vector<1x32xf32> to vector<2x32xf32>
    %262 = arith.mulf %261, %234 : vector<2x32xf32>
    %263 = arith.addf %250, %262 : vector<2x32xf32>
    %264 = arith.negf %263 : vector<2x32xf32>
    %265 = math.exp %264 : vector<2x32xf32>
    %cst_49 = arith.constant 1.000000e+00 : f32
    %266 = vector.broadcast %cst_49 : f32 to vector<2x32xf32>
    %267 = arith.addf %266, %265 : vector<2x32xf32>
    %268 = arith.divf %266, %267 : vector<2x32xf32>
    %269 = arith.mulf %260, %234 : vector<2x32xf32>
    %270 = math.tanh %251 : vector<2x32xf32>
    %271 = arith.mulf %268, %270 : vector<2x32xf32>
    %272 = arith.addf %269, %271 : vector<2x32xf32>
    %273 = vector.broadcast %15 : vector<1x32xf32> to vector<2x32xf32>
    %274 = arith.mulf %273, %272 : vector<2x32xf32>
    %275 = arith.addf %252, %274 : vector<2x32xf32>
    %276 = arith.negf %275 : vector<2x32xf32>
    %277 = math.exp %276 : vector<2x32xf32>
    %cst_50 = arith.constant 1.000000e+00 : f32
    %278 = vector.broadcast %cst_50 : f32 to vector<2x32xf32>
    %279 = arith.addf %278, %277 : vector<2x32xf32>
    %280 = arith.divf %278, %279 : vector<2x32xf32>
    %281 = math.tanh %272 : vector<2x32xf32>
    %282 = arith.mulf %280, %281 : vector<2x32xf32>
    %c12 = arith.constant 12 : index
    %c0_51 = arith.constant 0 : index
    %283 = vector.load %arg11[%c12, %c0_51] : memref<16x32xf32, #tpu.memory_space<vmem>>, vector<2x32xf32>
    tpu.vector_store %arg11[%c12, %c0_51], %282 {strides = array<i32>} : memref<16x32xf32, #tpu.memory_space<vmem>>, vector<2x32xf32>,
    %284 = vector.extract_strided_slice %8 {offsets = [14, 0], sizes = [2, 128], strides = [1, 1]} : vector<16x128xf32> to vector<2x128xf32>
    %cst_52 = arith.constant dense<0.000000e+00> : vector<2x128xf32>
    %285 = tpu.matmul %282, %10, %cst_52 {dimension_numbers = #tpu.dot_dimension_numbers<[1], [0], [0], [1], [0, 0, 1, 1], [], []>} : vector<2x32xf32>, vector<32x128xf32>, vector<2x128xf32> -> vector<2x128xf32>
    %286 = arith.addf %284, %285 : vector<2x128xf32>
    %287 = vector.extract_strided_slice %286 {offsets = [0, 0], sizes = [2, 32], strides = [1, 1]} : vector<2x128xf32> to vector<2x32xf32>
    %288 = vector.extract_strided_slice %286 {offsets = [0, 32], sizes = [2, 32], strides = [1, 1]} : vector<2x128xf32> to vector<2x32xf32>
    %289 = vector.extract_strided_slice %286 {offsets = [0, 64], sizes = [2, 32], strides = [1, 1]} : vector<2x128xf32> to vector<2x32xf32>
    %290 = vector.extract_strided_slice %286 {offsets = [0, 96], sizes = [2, 32], strides = [1, 1]} : vector<2x128xf32> to vector<2x32xf32>
    %291 = vector.broadcast %13 : vector<1x32xf32> to vector<2x32xf32>
    %292 = arith.mulf %291, %272 : vector<2x32xf32>
    %293 = arith.addf %287, %292 : vector<2x32xf32>
    %294 = arith.negf %293 : vector<2x32xf32>
    %295 = math.exp %294 : vector<2x32xf32>
    %cst_53 = arith.constant 1.000000e+00 : f32
    %296 = vector.broadcast %cst_53 : f32 to vector<2x32xf32>
    %297 = arith.addf %296, %295 : vector<2x32xf32>
    %298 = arith.divf %296, %297 : vector<2x32xf32>
    %299 = vector.broadcast %14 : vector<1x32xf32> to vector<2x32xf32>
    %300 = arith.mulf %299, %272 : vector<2x32xf32>
    %301 = arith.addf %288, %300 : vector<2x32xf32>
    %302 = arith.negf %301 : vector<2x32xf32>
    %303 = math.exp %302 : vector<2x32xf32>
    %cst_54 = arith.constant 1.000000e+00 : f32
    %304 = vector.broadcast %cst_54 : f32 to vector<2x32xf32>
    %305 = arith.addf %304, %303 : vector<2x32xf32>
    %306 = arith.divf %304, %305 : vector<2x32xf32>
    %307 = arith.mulf %298, %272 : vector<2x32xf32>
    %308 = math.tanh %289 : vector<2x32xf32>
    %309 = arith.mulf %306, %308 : vector<2x32xf32>
    %310 = arith.addf %307, %309 : vector<2x32xf32>
    %311 = vector.broadcast %15 : vector<1x32xf32> to vector<2x32xf32>
    %312 = arith.mulf %311, %310 : vector<2x32xf32>
    %313 = arith.addf %290, %312 : vector<2x32xf32>
    %314 = arith.negf %313 : vector<2x32xf32>
    %315 = math.exp %314 : vector<2x32xf32>
    %cst_55 = arith.constant 1.000000e+00 : f32
    %316 = vector.broadcast %cst_55 : f32 to vector<2x32xf32>
    %317 = arith.addf %316, %315 : vector<2x32xf32>
    %318 = arith.divf %316, %317 : vector<2x32xf32>
    %319 = math.tanh %310 : vector<2x32xf32>
    %320 = arith.mulf %318, %319 : vector<2x32xf32>
    %c14 = arith.constant 14 : index
    %c0_56 = arith.constant 0 : index
    %321 = vector.load %arg11[%c14, %c0_56] : memref<16x32xf32, #tpu.memory_space<vmem>>, vector<2x32xf32>
    tpu.vector_store %arg11[%c14, %c0_56], %320 {strides = array<i32>} : memref<16x32xf32, #tpu.memory_space<vmem>>, vector<2x32xf32>,
    %c0_57 = arith.constant 0 : index
    %c0_58 = arith.constant 0 : index
    %322 = vector.load %arg11[%c0_57, %c0_58] : memref<16x32xf32, #tpu.memory_space<vmem>>, vector<16x32xf32>
    %c0_59 = arith.constant 0 : index
    %c0_60 = arith.constant 0 : index
    %c0_61 = arith.constant 0 : index
    %323 = vector.load %arg6[%c0_59, %c0_60, %c0_61] : memref<1x32x128xf32, #tpu.memory_space<vmem>>, vector<1x32x128xf32>
    %324 = vector.shape_cast %323 : vector<1x32x128xf32> to vector<32x128xf32>
    %cst_62 = arith.constant dense<0.000000e+00> : vector<16x128xf32>
    %325 = tpu.matmul %322, %324, %cst_62 {dimension_numbers = #tpu.dot_dimension_numbers<[1], [0], [0], [1], [0, 0, 1, 1], [], []>} : vector<16x32xf32>, vector<32x128xf32>, vector<16x128xf32> -> vector<16x128xf32>
    %c0_63 = arith.constant 0 : index
    %c0_64 = arith.constant 0 : index
    %c0_65 = arith.constant 0 : index
    %326 = vector.load %arg8[%c0_63, %c0_64, %c0_65] : memref<1x1x128xf32, #tpu.memory_space<vmem>>, vector<1x1x128xf32>
    %327 = vector.shape_cast %326 : vector<1x1x128xf32> to vector<1x128xf32>
    %328 = vector.broadcast %327 : vector<1x128xf32> to vector<16x128xf32>
    %329 = arith.addf %325, %328 : vector<16x128xf32>
    %c0_66 = arith.constant 0 : index
    %c0_67 = arith.constant 0 : index
    %c0_68 = arith.constant 0 : index
    %330 = vector.load %arg7[%c0_66, %c0_67, %c0_68] : memref<1x32x128xf32, #tpu.memory_space<vmem>>, vector<1x32x128xf32>
    %331 = vector.shape_cast %330 : vector<1x32x128xf32> to vector<32x128xf32>
    %c0_69 = arith.constant 0 : index
    %c0_70 = arith.constant 0 : index
    %c0_71 = arith.constant 0 : index
    %332 = vector.load %arg9[%c0_69, %c0_70, %c0_71] : memref<1x1x96xf32, #tpu.memory_space<vmem>>, vector<1x1x96xf32>
    %333 = vector.shape_cast %332 : vector<1x1x96xf32> to vector<1x96xf32>
    %334 = vector.extract_strided_slice %333 {offsets = [0, 0], sizes = [1, 32], strides = [1, 1]} : vector<1x96xf32> to vector<1x32xf32>
    %335 = vector.extract_strided_slice %333 {offsets = [0, 32], sizes = [1, 32], strides = [1, 1]} : vector<1x96xf32> to vector<1x32xf32>
    %336 = vector.extract_strided_slice %333 {offsets = [0, 64], sizes = [1, 32], strides = [1, 1]} : vector<1x96xf32> to vector<1x32xf32>
    %cst_72 = arith.constant 0.000000e+00 : f32
    %337 = vector.broadcast %cst_72 : f32 to vector<2x32xf32>
    %cst_73 = arith.constant 0.000000e+00 : f32
    %338 = vector.broadcast %cst_73 : f32 to vector<2x32xf32>
    %339 = vector.extract_strided_slice %329 {offsets = [0, 0], sizes = [2, 128], strides = [1, 1]} : vector<16x128xf32> to vector<2x128xf32>
    %cst_74 = arith.constant dense<0.000000e+00> : vector<2x128xf32>
    %340 = tpu.matmul %337, %331, %cst_74 {dimension_numbers = #tpu.dot_dimension_numbers<[1], [0], [0], [1], [0, 0, 1, 1], [], []>} : vector<2x32xf32>, vector<32x128xf32>, vector<2x128xf32> -> vector<2x128xf32>
    %341 = arith.addf %339, %340 : vector<2x128xf32>
    %342 = vector.extract_strided_slice %341 {offsets = [0, 0], sizes = [2, 32], strides = [1, 1]} : vector<2x128xf32> to vector<2x32xf32>
    %343 = vector.extract_strided_slice %341 {offsets = [0, 32], sizes = [2, 32], strides = [1, 1]} : vector<2x128xf32> to vector<2x32xf32>
    %344 = vector.extract_strided_slice %341 {offsets = [0, 64], sizes = [2, 32], strides = [1, 1]} : vector<2x128xf32> to vector<2x32xf32>
    %345 = vector.extract_strided_slice %341 {offsets = [0, 96], sizes = [2, 32], strides = [1, 1]} : vector<2x128xf32> to vector<2x32xf32>
    %346 = vector.broadcast %334 : vector<1x32xf32> to vector<2x32xf32>
    %347 = arith.mulf %346, %338 : vector<2x32xf32>
    %348 = arith.addf %342, %347 : vector<2x32xf32>
    %349 = arith.negf %348 : vector<2x32xf32>
    %350 = math.exp %349 : vector<2x32xf32>
    %cst_75 = arith.constant 1.000000e+00 : f32
    %351 = vector.broadcast %cst_75 : f32 to vector<2x32xf32>
    %352 = arith.addf %351, %350 : vector<2x32xf32>
    %353 = arith.divf %351, %352 : vector<2x32xf32>
    %354 = vector.broadcast %335 : vector<1x32xf32> to vector<2x32xf32>
    %355 = arith.mulf %354, %338 : vector<2x32xf32>
    %356 = arith.addf %343, %355 : vector<2x32xf32>
    %357 = arith.negf %356 : vector<2x32xf32>
    %358 = math.exp %357 : vector<2x32xf32>
    %cst_76 = arith.constant 1.000000e+00 : f32
    %359 = vector.broadcast %cst_76 : f32 to vector<2x32xf32>
    %360 = arith.addf %359, %358 : vector<2x32xf32>
    %361 = arith.divf %359, %360 : vector<2x32xf32>
    %362 = arith.mulf %353, %338 : vector<2x32xf32>
    %363 = math.tanh %344 : vector<2x32xf32>
    %364 = arith.mulf %361, %363 : vector<2x32xf32>
    %365 = arith.addf %362, %364 : vector<2x32xf32>
    %366 = vector.broadcast %336 : vector<1x32xf32> to vector<2x32xf32>
    %367 = arith.mulf %366, %365 : vector<2x32xf32>
    %368 = arith.addf %345, %367 : vector<2x32xf32>
    %369 = arith.negf %368 : vector<2x32xf32>
    %370 = math.exp %369 : vector<2x32xf32>
    %cst_77 = arith.constant 1.000000e+00 : f32
    %371 = vector.broadcast %cst_77 : f32 to vector<2x32xf32>
    %372 = arith.addf %371, %370 : vector<2x32xf32>
    %373 = arith.divf %371, %372 : vector<2x32xf32>
    %374 = math.tanh %365 : vector<2x32xf32>
    %375 = arith.mulf %373, %374 : vector<2x32xf32>
    %c0_78 = arith.constant 0 : index
    %c0_79 = arith.constant 0 : index
    %c0_80 = arith.constant 0 : index
    %376 = vector.load %arg10[%c0_78, %c0_79, %c0_80] : memref<1x16x32xf32, #tpu.memory_space<vmem>>, vector<1x2x32xf32>
    %377 = vector.shape_cast %376 : vector<1x2x32xf32> to vector<2x32xf32>
    %378 = vector.shape_cast %375 : vector<2x32xf32> to vector<1x2x32xf32>
    tpu.vector_store %arg10[%c0_78, %c0_79, %c0_80], %378 {strides = array<i32>} : memref<1x16x32xf32, #tpu.memory_space<vmem>>, vector<1x2x32xf32>,
    %379 = vector.extract_strided_slice %329 {offsets = [2, 0], sizes = [2, 128], strides = [1, 1]} : vector<16x128xf32> to vector<2x128xf32>
    %cst_81 = arith.constant dense<0.000000e+00> : vector<2x128xf32>
    %380 = tpu.matmul %375, %331, %cst_81 {dimension_numbers = #tpu.dot_dimension_numbers<[1], [0], [0], [1], [0, 0, 1, 1], [], []>} : vector<2x32xf32>, vector<32x128xf32>, vector<2x128xf32> -> vector<2x128xf32>
    %381 = arith.addf %379, %380 : vector<2x128xf32>
    %382 = vector.extract_strided_slice %381 {offsets = [0, 0], sizes = [2, 32], strides = [1, 1]} : vector<2x128xf32> to vector<2x32xf32>
    %383 = vector.extract_strided_slice %381 {offsets = [0, 32], sizes = [2, 32], strides = [1, 1]} : vector<2x128xf32> to vector<2x32xf32>
    %384 = vector.extract_strided_slice %381 {offsets = [0, 64], sizes = [2, 32], strides = [1, 1]} : vector<2x128xf32> to vector<2x32xf32>
    %385 = vector.extract_strided_slice %381 {offsets = [0, 96], sizes = [2, 32], strides = [1, 1]} : vector<2x128xf32> to vector<2x32xf32>
    %386 = vector.broadcast %334 : vector<1x32xf32> to vector<2x32xf32>
    %387 = arith.mulf %386, %365 : vector<2x32xf32>
    %388 = arith.addf %382, %387 : vector<2x32xf32>
    %389 = arith.negf %388 : vector<2x32xf32>
    %390 = math.exp %389 : vector<2x32xf32>
    %cst_82 = arith.constant 1.000000e+00 : f32
    %391 = vector.broadcast %cst_82 : f32 to vector<2x32xf32>
    %392 = arith.addf %391, %390 : vector<2x32xf32>
    %393 = arith.divf %391, %392 : vector<2x32xf32>
    %394 = vector.broadcast %335 : vector<1x32xf32> to vector<2x32xf32>
    %395 = arith.mulf %394, %365 : vector<2x32xf32>
    %396 = arith.addf %383, %395 : vector<2x32xf32>
    %397 = arith.negf %396 : vector<2x32xf32>
    %398 = math.exp %397 : vector<2x32xf32>
    %cst_83 = arith.constant 1.000000e+00 : f32
    %399 = vector.broadcast %cst_83 : f32 to vector<2x32xf32>
    %400 = arith.addf %399, %398 : vector<2x32xf32>
    %401 = arith.divf %399, %400 : vector<2x32xf32>
    %402 = arith.mulf %393, %365 : vector<2x32xf32>
    %403 = math.tanh %384 : vector<2x32xf32>
    %404 = arith.mulf %401, %403 : vector<2x32xf32>
    %405 = arith.addf %402, %404 : vector<2x32xf32>
    %406 = vector.broadcast %336 : vector<1x32xf32> to vector<2x32xf32>
    %407 = arith.mulf %406, %405 : vector<2x32xf32>
    %408 = arith.addf %385, %407 : vector<2x32xf32>
    %409 = arith.negf %408 : vector<2x32xf32>
    %410 = math.exp %409 : vector<2x32xf32>
    %cst_84 = arith.constant 1.000000e+00 : f32
    %411 = vector.broadcast %cst_84 : f32 to vector<2x32xf32>
    %412 = arith.addf %411, %410 : vector<2x32xf32>
    %413 = arith.divf %411, %412 : vector<2x32xf32>
    %414 = math.tanh %405 : vector<2x32xf32>
    %415 = arith.mulf %413, %414 : vector<2x32xf32>
    %c0_85 = arith.constant 0 : index
    %c2_86 = arith.constant 2 : index
    %c0_87 = arith.constant 0 : index
    %416 = vector.load %arg10[%c0_85, %c2_86, %c0_87] : memref<1x16x32xf32, #tpu.memory_space<vmem>>, vector<1x2x32xf32>
    %417 = vector.shape_cast %416 : vector<1x2x32xf32> to vector<2x32xf32>
    %418 = vector.shape_cast %415 : vector<2x32xf32> to vector<1x2x32xf32>
    tpu.vector_store %arg10[%c0_85, %c2_86, %c0_87], %418 {strides = array<i32>} : memref<1x16x32xf32, #tpu.memory_space<vmem>>, vector<1x2x32xf32>,
    %419 = vector.extract_strided_slice %329 {offsets = [4, 0], sizes = [2, 128], strides = [1, 1]} : vector<16x128xf32> to vector<2x128xf32>
    %cst_88 = arith.constant dense<0.000000e+00> : vector<2x128xf32>
    %420 = tpu.matmul %415, %331, %cst_88 {dimension_numbers = #tpu.dot_dimension_numbers<[1], [0], [0], [1], [0, 0, 1, 1], [], []>} : vector<2x32xf32>, vector<32x128xf32>, vector<2x128xf32> -> vector<2x128xf32>
    %421 = arith.addf %419, %420 : vector<2x128xf32>
    %422 = vector.extract_strided_slice %421 {offsets = [0, 0], sizes = [2, 32], strides = [1, 1]} : vector<2x128xf32> to vector<2x32xf32>
    %423 = vector.extract_strided_slice %421 {offsets = [0, 32], sizes = [2, 32], strides = [1, 1]} : vector<2x128xf32> to vector<2x32xf32>
    %424 = vector.extract_strided_slice %421 {offsets = [0, 64], sizes = [2, 32], strides = [1, 1]} : vector<2x128xf32> to vector<2x32xf32>
    %425 = vector.extract_strided_slice %421 {offsets = [0, 96], sizes = [2, 32], strides = [1, 1]} : vector<2x128xf32> to vector<2x32xf32>
    %426 = vector.broadcast %334 : vector<1x32xf32> to vector<2x32xf32>
    %427 = arith.mulf %426, %405 : vector<2x32xf32>
    %428 = arith.addf %422, %427 : vector<2x32xf32>
    %429 = arith.negf %428 : vector<2x32xf32>
    %430 = math.exp %429 : vector<2x32xf32>
    %cst_89 = arith.constant 1.000000e+00 : f32
    %431 = vector.broadcast %cst_89 : f32 to vector<2x32xf32>
    %432 = arith.addf %431, %430 : vector<2x32xf32>
    %433 = arith.divf %431, %432 : vector<2x32xf32>
    %434 = vector.broadcast %335 : vector<1x32xf32> to vector<2x32xf32>
    %435 = arith.mulf %434, %405 : vector<2x32xf32>
    %436 = arith.addf %423, %435 : vector<2x32xf32>
    %437 = arith.negf %436 : vector<2x32xf32>
    %438 = math.exp %437 : vector<2x32xf32>
    %cst_90 = arith.constant 1.000000e+00 : f32
    %439 = vector.broadcast %cst_90 : f32 to vector<2x32xf32>
    %440 = arith.addf %439, %438 : vector<2x32xf32>
    %441 = arith.divf %439, %440 : vector<2x32xf32>
    %442 = arith.mulf %433, %405 : vector<2x32xf32>
    %443 = math.tanh %424 : vector<2x32xf32>
    %444 = arith.mulf %441, %443 : vector<2x32xf32>
    %445 = arith.addf %442, %444 : vector<2x32xf32>
    %446 = vector.broadcast %336 : vector<1x32xf32> to vector<2x32xf32>
    %447 = arith.mulf %446, %445 : vector<2x32xf32>
    %448 = arith.addf %425, %447 : vector<2x32xf32>
    %449 = arith.negf %448 : vector<2x32xf32>
    %450 = math.exp %449 : vector<2x32xf32>
    %cst_91 = arith.constant 1.000000e+00 : f32
    %451 = vector.broadcast %cst_91 : f32 to vector<2x32xf32>
    %452 = arith.addf %451, %450 : vector<2x32xf32>
    %453 = arith.divf %451, %452 : vector<2x32xf32>
    %454 = math.tanh %445 : vector<2x32xf32>
    %455 = arith.mulf %453, %454 : vector<2x32xf32>
    %c0_92 = arith.constant 0 : index
    %c4_93 = arith.constant 4 : index
    %c0_94 = arith.constant 0 : index
    %456 = vector.load %arg10[%c0_92, %c4_93, %c0_94] : memref<1x16x32xf32, #tpu.memory_space<vmem>>, vector<1x2x32xf32>
    %457 = vector.shape_cast %456 : vector<1x2x32xf32> to vector<2x32xf32>
    %458 = vector.shape_cast %455 : vector<2x32xf32> to vector<1x2x32xf32>
    tpu.vector_store %arg10[%c0_92, %c4_93, %c0_94], %458 {strides = array<i32>} : memref<1x16x32xf32, #tpu.memory_space<vmem>>, vector<1x2x32xf32>,
    %459 = vector.extract_strided_slice %329 {offsets = [6, 0], sizes = [2, 128], strides = [1, 1]} : vector<16x128xf32> to vector<2x128xf32>
    %cst_95 = arith.constant dense<0.000000e+00> : vector<2x128xf32>
    %460 = tpu.matmul %455, %331, %cst_95 {dimension_numbers = #tpu.dot_dimension_numbers<[1], [0], [0], [1], [0, 0, 1, 1], [], []>} : vector<2x32xf32>, vector<32x128xf32>, vector<2x128xf32> -> vector<2x128xf32>
    %461 = arith.addf %459, %460 : vector<2x128xf32>
    %462 = vector.extract_strided_slice %461 {offsets = [0, 0], sizes = [2, 32], strides = [1, 1]} : vector<2x128xf32> to vector<2x32xf32>
    %463 = vector.extract_strided_slice %461 {offsets = [0, 32], sizes = [2, 32], strides = [1, 1]} : vector<2x128xf32> to vector<2x32xf32>
    %464 = vector.extract_strided_slice %461 {offsets = [0, 64], sizes = [2, 32], strides = [1, 1]} : vector<2x128xf32> to vector<2x32xf32>
    %465 = vector.extract_strided_slice %461 {offsets = [0, 96], sizes = [2, 32], strides = [1, 1]} : vector<2x128xf32> to vector<2x32xf32>
    %466 = vector.broadcast %334 : vector<1x32xf32> to vector<2x32xf32>
    %467 = arith.mulf %466, %445 : vector<2x32xf32>
    %468 = arith.addf %462, %467 : vector<2x32xf32>
    %469 = arith.negf %468 : vector<2x32xf32>
    %470 = math.exp %469 : vector<2x32xf32>
    %cst_96 = arith.constant 1.000000e+00 : f32
    %471 = vector.broadcast %cst_96 : f32 to vector<2x32xf32>
    %472 = arith.addf %471, %470 : vector<2x32xf32>
    %473 = arith.divf %471, %472 : vector<2x32xf32>
    %474 = vector.broadcast %335 : vector<1x32xf32> to vector<2x32xf32>
    %475 = arith.mulf %474, %445 : vector<2x32xf32>
    %476 = arith.addf %463, %475 : vector<2x32xf32>
    %477 = arith.negf %476 : vector<2x32xf32>
    %478 = math.exp %477 : vector<2x32xf32>
    %cst_97 = arith.constant 1.000000e+00 : f32
    %479 = vector.broadcast %cst_97 : f32 to vector<2x32xf32>
    %480 = arith.addf %479, %478 : vector<2x32xf32>
    %481 = arith.divf %479, %480 : vector<2x32xf32>
    %482 = arith.mulf %473, %445 : vector<2x32xf32>
    %483 = math.tanh %464 : vector<2x32xf32>
    %484 = arith.mulf %481, %483 : vector<2x32xf32>
    %485 = arith.addf %482, %484 : vector<2x32xf32>
    %486 = vector.broadcast %336 : vector<1x32xf32> to vector<2x32xf32>
    %487 = arith.mulf %486, %485 : vector<2x32xf32>
    %488 = arith.addf %465, %487 : vector<2x32xf32>
    %489 = arith.negf %488 : vector<2x32xf32>
    %490 = math.exp %489 : vector<2x32xf32>
    %cst_98 = arith.constant 1.000000e+00 : f32
    %491 = vector.broadcast %cst_98 : f32 to vector<2x32xf32>
    %492 = arith.addf %491, %490 : vector<2x32xf32>
    %493 = arith.divf %491, %492 : vector<2x32xf32>
    %494 = math.tanh %485 : vector<2x32xf32>
    %495 = arith.mulf %493, %494 : vector<2x32xf32>
    %c0_99 = arith.constant 0 : index
    %c6_100 = arith.constant 6 : index
    %c0_101 = arith.constant 0 : index
    %496 = vector.load %arg10[%c0_99, %c6_100, %c0_101] : memref<1x16x32xf32, #tpu.memory_space<vmem>>, vector<1x2x32xf32>
    %497 = vector.shape_cast %496 : vector<1x2x32xf32> to vector<2x32xf32>
    %498 = vector.shape_cast %495 : vector<2x32xf32> to vector<1x2x32xf32>
    tpu.vector_store %arg10[%c0_99, %c6_100, %c0_101], %498 {strides = array<i32>} : memref<1x16x32xf32, #tpu.memory_space<vmem>>, vector<1x2x32xf32>,
    %499 = vector.extract_strided_slice %329 {offsets = [8, 0], sizes = [2, 128], strides = [1, 1]} : vector<16x128xf32> to vector<2x128xf32>
    %cst_102 = arith.constant dense<0.000000e+00> : vector<2x128xf32>
    %500 = tpu.matmul %495, %331, %cst_102 {dimension_numbers = #tpu.dot_dimension_numbers<[1], [0], [0], [1], [0, 0, 1, 1], [], []>} : vector<2x32xf32>, vector<32x128xf32>, vector<2x128xf32> -> vector<2x128xf32>
    %501 = arith.addf %499, %500 : vector<2x128xf32>
    %502 = vector.extract_strided_slice %501 {offsets = [0, 0], sizes = [2, 32], strides = [1, 1]} : vector<2x128xf32> to vector<2x32xf32>
    %503 = vector.extract_strided_slice %501 {offsets = [0, 32], sizes = [2, 32], strides = [1, 1]} : vector<2x128xf32> to vector<2x32xf32>
    %504 = vector.extract_strided_slice %501 {offsets = [0, 64], sizes = [2, 32], strides = [1, 1]} : vector<2x128xf32> to vector<2x32xf32>
    %505 = vector.extract_strided_slice %501 {offsets = [0, 96], sizes = [2, 32], strides = [1, 1]} : vector<2x128xf32> to vector<2x32xf32>
    %506 = vector.broadcast %334 : vector<1x32xf32> to vector<2x32xf32>
    %507 = arith.mulf %506, %485 : vector<2x32xf32>
    %508 = arith.addf %502, %507 : vector<2x32xf32>
    %509 = arith.negf %508 : vector<2x32xf32>
    %510 = math.exp %509 : vector<2x32xf32>
    %cst_103 = arith.constant 1.000000e+00 : f32
    %511 = vector.broadcast %cst_103 : f32 to vector<2x32xf32>
    %512 = arith.addf %511, %510 : vector<2x32xf32>
    %513 = arith.divf %511, %512 : vector<2x32xf32>
    %514 = vector.broadcast %335 : vector<1x32xf32> to vector<2x32xf32>
    %515 = arith.mulf %514, %485 : vector<2x32xf32>
    %516 = arith.addf %503, %515 : vector<2x32xf32>
    %517 = arith.negf %516 : vector<2x32xf32>
    %518 = math.exp %517 : vector<2x32xf32>
    %cst_104 = arith.constant 1.000000e+00 : f32
    %519 = vector.broadcast %cst_104 : f32 to vector<2x32xf32>
    %520 = arith.addf %519, %518 : vector<2x32xf32>
    %521 = arith.divf %519, %520 : vector<2x32xf32>
    %522 = arith.mulf %513, %485 : vector<2x32xf32>
    %523 = math.tanh %504 : vector<2x32xf32>
    %524 = arith.mulf %521, %523 : vector<2x32xf32>
    %525 = arith.addf %522, %524 : vector<2x32xf32>
    %526 = vector.broadcast %336 : vector<1x32xf32> to vector<2x32xf32>
    %527 = arith.mulf %526, %525 : vector<2x32xf32>
    %528 = arith.addf %505, %527 : vector<2x32xf32>
    %529 = arith.negf %528 : vector<2x32xf32>
    %530 = math.exp %529 : vector<2x32xf32>
    %cst_105 = arith.constant 1.000000e+00 : f32
    %531 = vector.broadcast %cst_105 : f32 to vector<2x32xf32>
    %532 = arith.addf %531, %530 : vector<2x32xf32>
    %533 = arith.divf %531, %532 : vector<2x32xf32>
    %534 = math.tanh %525 : vector<2x32xf32>
    %535 = arith.mulf %533, %534 : vector<2x32xf32>
    %c0_106 = arith.constant 0 : index
    %c8_107 = arith.constant 8 : index
    %c0_108 = arith.constant 0 : index
    %536 = vector.load %arg10[%c0_106, %c8_107, %c0_108] : memref<1x16x32xf32, #tpu.memory_space<vmem>>, vector<1x2x32xf32>
    %537 = vector.shape_cast %536 : vector<1x2x32xf32> to vector<2x32xf32>
    %538 = vector.shape_cast %535 : vector<2x32xf32> to vector<1x2x32xf32>
    tpu.vector_store %arg10[%c0_106, %c8_107, %c0_108], %538 {strides = array<i32>} : memref<1x16x32xf32, #tpu.memory_space<vmem>>, vector<1x2x32xf32>,
    %539 = vector.extract_strided_slice %329 {offsets = [10, 0], sizes = [2, 128], strides = [1, 1]} : vector<16x128xf32> to vector<2x128xf32>
    %cst_109 = arith.constant dense<0.000000e+00> : vector<2x128xf32>
    %540 = tpu.matmul %535, %331, %cst_109 {dimension_numbers = #tpu.dot_dimension_numbers<[1], [0], [0], [1], [0, 0, 1, 1], [], []>} : vector<2x32xf32>, vector<32x128xf32>, vector<2x128xf32> -> vector<2x128xf32>
    %541 = arith.addf %539, %540 : vector<2x128xf32>
    %542 = vector.extract_strided_slice %541 {offsets = [0, 0], sizes = [2, 32], strides = [1, 1]} : vector<2x128xf32> to vector<2x32xf32>
    %543 = vector.extract_strided_slice %541 {offsets = [0, 32], sizes = [2, 32], strides = [1, 1]} : vector<2x128xf32> to vector<2x32xf32>
    %544 = vector.extract_strided_slice %541 {offsets = [0, 64], sizes = [2, 32], strides = [1, 1]} : vector<2x128xf32> to vector<2x32xf32>
    %545 = vector.extract_strided_slice %541 {offsets = [0, 96], sizes = [2, 32], strides = [1, 1]} : vector<2x128xf32> to vector<2x32xf32>
    %546 = vector.broadcast %334 : vector<1x32xf32> to vector<2x32xf32>
    %547 = arith.mulf %546, %525 : vector<2x32xf32>
    %548 = arith.addf %542, %547 : vector<2x32xf32>
    %549 = arith.negf %548 : vector<2x32xf32>
    %550 = math.exp %549 : vector<2x32xf32>
    %cst_110 = arith.constant 1.000000e+00 : f32
    %551 = vector.broadcast %cst_110 : f32 to vector<2x32xf32>
    %552 = arith.addf %551, %550 : vector<2x32xf32>
    %553 = arith.divf %551, %552 : vector<2x32xf32>
    %554 = vector.broadcast %335 : vector<1x32xf32> to vector<2x32xf32>
    %555 = arith.mulf %554, %525 : vector<2x32xf32>
    %556 = arith.addf %543, %555 : vector<2x32xf32>
    %557 = arith.negf %556 : vector<2x32xf32>
    %558 = math.exp %557 : vector<2x32xf32>
    %cst_111 = arith.constant 1.000000e+00 : f32
    %559 = vector.broadcast %cst_111 : f32 to vector<2x32xf32>
    %560 = arith.addf %559, %558 : vector<2x32xf32>
    %561 = arith.divf %559, %560 : vector<2x32xf32>
    %562 = arith.mulf %553, %525 : vector<2x32xf32>
    %563 = math.tanh %544 : vector<2x32xf32>
    %564 = arith.mulf %561, %563 : vector<2x32xf32>
    %565 = arith.addf %562, %564 : vector<2x32xf32>
    %566 = vector.broadcast %336 : vector<1x32xf32> to vector<2x32xf32>
    %567 = arith.mulf %566, %565 : vector<2x32xf32>
    %568 = arith.addf %545, %567 : vector<2x32xf32>
    %569 = arith.negf %568 : vector<2x32xf32>
    %570 = math.exp %569 : vector<2x32xf32>
    %cst_112 = arith.constant 1.000000e+00 : f32
    %571 = vector.broadcast %cst_112 : f32 to vector<2x32xf32>
    %572 = arith.addf %571, %570 : vector<2x32xf32>
    %573 = arith.divf %571, %572 : vector<2x32xf32>
    %574 = math.tanh %565 : vector<2x32xf32>
    %575 = arith.mulf %573, %574 : vector<2x32xf32>
    %c0_113 = arith.constant 0 : index
    %c10_114 = arith.constant 10 : index
    %c0_115 = arith.constant 0 : index
    %576 = vector.load %arg10[%c0_113, %c10_114, %c0_115] : memref<1x16x32xf32, #tpu.memory_space<vmem>>, vector<1x2x32xf32>
    %577 = vector.shape_cast %576 : vector<1x2x32xf32> to vector<2x32xf32>
    %578 = vector.shape_cast %575 : vector<2x32xf32> to vector<1x2x32xf32>
    tpu.vector_store %arg10[%c0_113, %c10_114, %c0_115], %578 {strides = array<i32>} : memref<1x16x32xf32, #tpu.memory_space<vmem>>, vector<1x2x32xf32>,
    %579 = vector.extract_strided_slice %329 {offsets = [12, 0], sizes = [2, 128], strides = [1, 1]} : vector<16x128xf32> to vector<2x128xf32>
    %cst_116 = arith.constant dense<0.000000e+00> : vector<2x128xf32>
    %580 = tpu.matmul %575, %331, %cst_116 {dimension_numbers = #tpu.dot_dimension_numbers<[1], [0], [0], [1], [0, 0, 1, 1], [], []>} : vector<2x32xf32>, vector<32x128xf32>, vector<2x128xf32> -> vector<2x128xf32>
    %581 = arith.addf %579, %580 : vector<2x128xf32>
    %582 = vector.extract_strided_slice %581 {offsets = [0, 0], sizes = [2, 32], strides = [1, 1]} : vector<2x128xf32> to vector<2x32xf32>
    %583 = vector.extract_strided_slice %581 {offsets = [0, 32], sizes = [2, 32], strides = [1, 1]} : vector<2x128xf32> to vector<2x32xf32>
    %584 = vector.extract_strided_slice %581 {offsets = [0, 64], sizes = [2, 32], strides = [1, 1]} : vector<2x128xf32> to vector<2x32xf32>
    %585 = vector.extract_strided_slice %581 {offsets = [0, 96], sizes = [2, 32], strides = [1, 1]} : vector<2x128xf32> to vector<2x32xf32>
    %586 = vector.broadcast %334 : vector<1x32xf32> to vector<2x32xf32>
    %587 = arith.mulf %586, %565 : vector<2x32xf32>
    %588 = arith.addf %582, %587 : vector<2x32xf32>
    %589 = arith.negf %588 : vector<2x32xf32>
    %590 = math.exp %589 : vector<2x32xf32>
    %cst_117 = arith.constant 1.000000e+00 : f32
    %591 = vector.broadcast %cst_117 : f32 to vector<2x32xf32>
    %592 = arith.addf %591, %590 : vector<2x32xf32>
    %593 = arith.divf %591, %592 : vector<2x32xf32>
    %594 = vector.broadcast %335 : vector<1x32xf32> to vector<2x32xf32>
    %595 = arith.mulf %594, %565 : vector<2x32xf32>
    %596 = arith.addf %583, %595 : vector<2x32xf32>
    %597 = arith.negf %596 : vector<2x32xf32>
    %598 = math.exp %597 : vector<2x32xf32>
    %cst_118 = arith.constant 1.000000e+00 : f32
    %599 = vector.broadcast %cst_118 : f32 to vector<2x32xf32>
    %600 = arith.addf %599, %598 : vector<2x32xf32>
    %601 = arith.divf %599, %600 : vector<2x32xf32>
    %602 = arith.mulf %593, %565 : vector<2x32xf32>
    %603 = math.tanh %584 : vector<2x32xf32>
    %604 = arith.mulf %601, %603 : vector<2x32xf32>
    %605 = arith.addf %602, %604 : vector<2x32xf32>
    %606 = vector.broadcast %336 : vector<1x32xf32> to vector<2x32xf32>
    %607 = arith.mulf %606, %605 : vector<2x32xf32>
    %608 = arith.addf %585, %607 : vector<2x32xf32>
    %609 = arith.negf %608 : vector<2x32xf32>
    %610 = math.exp %609 : vector<2x32xf32>
    %cst_119 = arith.constant 1.000000e+00 : f32
    %611 = vector.broadcast %cst_119 : f32 to vector<2x32xf32>
    %612 = arith.addf %611, %610 : vector<2x32xf32>
    %613 = arith.divf %611, %612 : vector<2x32xf32>
    %614 = math.tanh %605 : vector<2x32xf32>
    %615 = arith.mulf %613, %614 : vector<2x32xf32>
    %c0_120 = arith.constant 0 : index
    %c12_121 = arith.constant 12 : index
    %c0_122 = arith.constant 0 : index
    %616 = vector.load %arg10[%c0_120, %c12_121, %c0_122] : memref<1x16x32xf32, #tpu.memory_space<vmem>>, vector<1x2x32xf32>
    %617 = vector.shape_cast %616 : vector<1x2x32xf32> to vector<2x32xf32>
    %618 = vector.shape_cast %615 : vector<2x32xf32> to vector<1x2x32xf32>
    tpu.vector_store %arg10[%c0_120, %c12_121, %c0_122], %618 {strides = array<i32>} : memref<1x16x32xf32, #tpu.memory_space<vmem>>, vector<1x2x32xf32>,
    %619 = vector.extract_strided_slice %329 {offsets = [14, 0], sizes = [2, 128], strides = [1, 1]} : vector<16x128xf32> to vector<2x128xf32>
    %cst_123 = arith.constant dense<0.000000e+00> : vector<2x128xf32>
    %620 = tpu.matmul %615, %331, %cst_123 {dimension_numbers = #tpu.dot_dimension_numbers<[1], [0], [0], [1], [0, 0, 1, 1], [], []>} : vector<2x32xf32>, vector<32x128xf32>, vector<2x128xf32> -> vector<2x128xf32>
    %621 = arith.addf %619, %620 : vector<2x128xf32>
    %622 = vector.extract_strided_slice %621 {offsets = [0, 0], sizes = [2, 32], strides = [1, 1]} : vector<2x128xf32> to vector<2x32xf32>
    %623 = vector.extract_strided_slice %621 {offsets = [0, 32], sizes = [2, 32], strides = [1, 1]} : vector<2x128xf32> to vector<2x32xf32>
    %624 = vector.extract_strided_slice %621 {offsets = [0, 64], sizes = [2, 32], strides = [1, 1]} : vector<2x128xf32> to vector<2x32xf32>
    %625 = vector.extract_strided_slice %621 {offsets = [0, 96], sizes = [2, 32], strides = [1, 1]} : vector<2x128xf32> to vector<2x32xf32>
    %626 = vector.broadcast %334 : vector<1x32xf32> to vector<2x32xf32>
    %627 = arith.mulf %626, %605 : vector<2x32xf32>
    %628 = arith.addf %622, %627 : vector<2x32xf32>
    %629 = arith.negf %628 : vector<2x32xf32>
    %630 = math.exp %629 : vector<2x32xf32>
    %cst_124 = arith.constant 1.000000e+00 : f32
    %631 = vector.broadcast %cst_124 : f32 to vector<2x32xf32>
    %632 = arith.addf %631, %630 : vector<2x32xf32>
    %633 = arith.divf %631, %632 : vector<2x32xf32>
    %634 = vector.broadcast %335 : vector<1x32xf32> to vector<2x32xf32>
    %635 = arith.mulf %634, %605 : vector<2x32xf32>
    %636 = arith.addf %623, %635 : vector<2x32xf32>
    %637 = arith.negf %636 : vector<2x32xf32>
    %638 = math.exp %637 : vector<2x32xf32>
    %cst_125 = arith.constant 1.000000e+00 : f32
    %639 = vector.broadcast %cst_125 : f32 to vector<2x32xf32>
    %640 = arith.addf %639, %638 : vector<2x32xf32>
    %641 = arith.divf %639, %640 : vector<2x32xf32>
    %642 = arith.mulf %633, %605 : vector<2x32xf32>
    %643 = math.tanh %624 : vector<2x32xf32>
    %644 = arith.mulf %641, %643 : vector<2x32xf32>
    %645 = arith.addf %642, %644 : vector<2x32xf32>
    %646 = vector.broadcast %336 : vector<1x32xf32> to vector<2x32xf32>
    %647 = arith.mulf %646, %645 : vector<2x32xf32>
    %648 = arith.addf %625, %647 : vector<2x32xf32>
    %649 = arith.negf %648 : vector<2x32xf32>
    %650 = math.exp %649 : vector<2x32xf32>
    %cst_126 = arith.constant 1.000000e+00 : f32
    %651 = vector.broadcast %cst_126 : f32 to vector<2x32xf32>
    %652 = arith.addf %651, %650 : vector<2x32xf32>
    %653 = arith.divf %651, %652 : vector<2x32xf32>
    %654 = math.tanh %645 : vector<2x32xf32>
    %655 = arith.mulf %653, %654 : vector<2x32xf32>
    %c0_127 = arith.constant 0 : index
    %c14_128 = arith.constant 14 : index
    %c0_129 = arith.constant 0 : index
    %656 = vector.load %arg10[%c0_127, %c14_128, %c0_129] : memref<1x16x32xf32, #tpu.memory_space<vmem>>, vector<1x2x32xf32>
    %657 = vector.shape_cast %656 : vector<1x2x32xf32> to vector<2x32xf32>
    %658 = vector.shape_cast %655 : vector<2x32xf32> to vector<1x2x32xf32>
    tpu.vector_store %arg10[%c0_127, %c14_128, %c0_129], %658 {strides = array<i32>} : memref<1x16x32xf32, #tpu.memory_space<vmem>>, vector<1x2x32xf32>,
    return
  }
  func.func @transform_0(%arg0: i32) -> (i32, i32, i32) {
    %c0_i32 = arith.constant 0 : i32
    %c0_i32_0 = arith.constant 0 : i32
    %c0_i32_1 = arith.constant 0 : i32
    return %arg0, %c0_i32, %c0_i32_0 : i32, i32, i32
  }
  func.func @transform_1(%arg0: i32) -> (i32, i32, i32) {
    %c0_i32 = arith.constant 0 : i32
    %c0_i32_0 = arith.constant 0 : i32
    %c0_i32_1 = arith.constant 0 : i32
    return %arg0, %c0_i32, %c0_i32_0 : i32, i32, i32
  }
  func.func @transform_2(%arg0: i32) -> (i32, i32, i32) {
    %c0_i32 = arith.constant 0 : i32
    %c0_i32_0 = arith.constant 0 : i32
    %c0_i32_1 = arith.constant 0 : i32
    return %arg0, %c0_i32, %c0_i32_0 : i32, i32, i32
  }
  func.func @transform_3(%arg0: i32) -> (i32, i32, i32) {
    %c0_i32 = arith.constant 0 : i32
    %c0_i32_0 = arith.constant 0 : i32
    %c0_i32_1 = arith.constant 0 : i32
    return %arg0, %c0_i32, %c0_i32_0 : i32, i32, i32
  }
  func.func @transform_4(%arg0: i32) -> (i32, i32, i32) {
    %c0_i32 = arith.constant 0 : i32
    %c0_i32_0 = arith.constant 0 : i32
    %c0_i32_1 = arith.constant 0 : i32
    return %arg0, %c0_i32, %c0_i32_0 : i32, i32, i32
  }
  func.func @transform_5(%arg0: i32) -> (i32, i32, i32) {
    %c0_i32 = arith.constant 0 : i32
    %c0_i32_0 = arith.constant 0 : i32
    %c0_i32_1 = arith.constant 0 : i32
    return %arg0, %c0_i32, %c0_i32_0 : i32, i32, i32
  }
  func.func @transform_6(%arg0: i32) -> (i32, i32, i32) {
    %c0_i32 = arith.constant 0 : i32
    %c0_i32_0 = arith.constant 0 : i32
    %c0_i32_1 = arith.constant 0 : i32
    return %arg0, %c0_i32, %c0_i32_0 : i32, i32, i32
  }
  func.func @transform_7(%arg0: i32) -> (i32, i32, i32) {
    %c0_i32 = arith.constant 0 : i32
    %c0_i32_0 = arith.constant 0 : i32
    %c0_i32_1 = arith.constant 0 : i32
    return %arg0, %c0_i32, %c0_i32_0 : i32, i32, i32
  }
  func.func @transform_8(%arg0: i32) -> (i32, i32, i32) {
    %c0_i32 = arith.constant 0 : i32
    %c0_i32_0 = arith.constant 0 : i32
    %c0_i32_1 = arith.constant 0 : i32
    return %arg0, %c0_i32, %c0_i32_0 : i32, i32, i32
  }
  func.func @transform_9(%arg0: i32) -> (i32, i32, i32) {
    %c0_i32 = arith.constant 0 : i32
    %c0_i32_0 = arith.constant 0 : i32
    %c0_i32_1 = arith.constant 0 : i32
    return %arg0, %c0_i32, %c0_i32_0 : i32, i32, i32
  }
}

</mosaic_0001>

<llo_original>
// kernel: custom_lstm_peephole_bid.1
$region0: #{custom_lstm_peephole_bid.1}
  #allocation0 [shape = 'u32[]', space=smem, size = 0x4, offset = 0x4, fixed_abs, tag = 'smem constant byte address 0x4 - core index']
  #allocation1 [shape = 'u32[72,128]{1,0:T(1,128)}', space=vmem, size = 0x9000, scoped, tag = 'internal scratch']
  #allocation2 [shape = 'f32[16,32]{1,0:T(8,128)}', space=vmem, size = 0x2000, scoped, tag = 'scratch operand']
  %s0 = inlined_call_operand.vmem [shape: f32[2,16,4], index: 0, kind: input, shape index: {}]
  %s1 = inlined_call_operand.vmem [shape: f32[2,4,128], index: 1, kind: input, shape index: {}]
  %s2 = inlined_call_operand.vmem [shape: f32[2,32,128], index: 2, kind: input, shape index: {}]
  %s3 = inlined_call_operand.vmem [shape: f32[2,1,128], index: 3, kind: input, shape index: {}]
  %s4 = inlined_call_operand.vmem [shape: f32[2,1,96], index: 4, kind: input, shape index: {}]
  %s5 = inlined_call_operand.hbm [shape: f32[2,32,128], index: 5, kind: input, shape index: {}]
  %s6 = inlined_call_operand.hbm [shape: f32[2,32,128], index: 6, kind: input, shape index: {}]
  %s7 = inlined_call_operand.vmem [shape: f32[2,1,128], index: 7, kind: input, shape index: {}]
  %s8 = inlined_call_operand.vmem [shape: f32[2,1,96], index: 8, kind: input, shape index: {}]
  %s9 = inlined_call_operand.vmem [shape: f32[2,16,32], index: 9, kind: output, shape index: {}]
  %s10 = sld [smem:[#allocation0]]
  $region77: #{custom_lstm_peephole_bid.1} parent=0
    _
  %s12 = ssub.s32 1, %s10
  %s13 = scalar_select 0, %s12, %s10
  $region1: #{custom_lstm_peephole_bid.1} parent=0
    #allocation3 [shape = 'u8[32768]{0}', space=vmem, size = 0x8000, scoped, tag = 'input window, operand 5']
    #allocation4 [shape = 's32[2]{0}', space=sflag, size = 0x8, scoped, tag = 'scoped memory for custom_lstm_peephole_bid.1']
    #allocation5 [shape = 'u8[32768]{0}', space=vmem, size = 0x8000, scoped, tag = 'input window, operand 6']
    #allocation6 [shape = 's32[2]{0}', space=sflag, size = 0x8, scoped, tag = 'scoped memory for custom_lstm_peephole_bid.1']
    %14 = vsyncpa [#allocation4], 0
    %s15 = scalar_lea.sflag [#allocation4], 1
    %16 = vsyncpa %s15, 0
    %17 = vsyncpa [#allocation6], 0
    %s18 = scalar_lea.sflag [#allocation6], 1
    %19 = vsyncpa %s18, 0
    loop: start=0, step=1, limit=4
    $region2: #{custom_lstm_peephole_bid.1} parent=1 // loop_pre_header
      _
    $region3: #{custom_lstm_peephole_bid.1} parent=1 // loop_header
      %s21 = sphi 0, %s25
      %p22 = scmp.ge.s32.totalorder %s21, 4
      %s31 = sphi 0, %s33
      %s34 = sphi 0, %s31
      %s35 = sphi 0, %s34
      %s51 = sphi 0, %s35
      %s57 = sphi 0, %s59
      %s60 = sphi 0, %s57
      %s61 = sphi 0, %s60
      %s77 = sphi 0, %s61
      %s83 = sphi 0, %s85
      %s86 = sphi 0, %s83
      %s87 = sphi 0, %s86
      %s103 = sphi 0, %s87
      %s109 = sphi 0, %s111
      %s112 = sphi 0, %s109
      %s113 = sphi 0, %s112
      %s129 = sphi 0, %s113
      %s135 = sphi 0, %s137
      %s138 = sphi 0, %s135
      %s139 = sphi 0, %s138
      %s155 = sphi 0, %s139
      %s161 = sphi 0, %s163
      %s164 = sphi 0, %s161
      %s165 = sphi 0, %s164
      %s181 = sphi 0, %s165
      %s187 = sphi 0, %s189
      %s190 = sphi 0, %s187
      %s191 = sphi 0, %s190
      %s207 = sphi 0, %s191
      %s213 = sphi 0, %s215
      %s216 = sphi 0, %s213
      %s217 = sphi 0, %s216
      %s233 = sphi 0, %s217
      %s239 = sphi 0, %s241
      %s242 = sphi 0, %s239
      %s243 = sphi 0, %s242
      %s259 = sphi 0, %s243
      %s265 = sphi 0, %s267
      %s268 = sphi 0, %s265
      %s269 = sphi 0, %s268
      %s285 = sphi 0, %s269
    $region4: #{custom_lstm_peephole_bid.1} parent=1 // loop_header_branch
      %24 = sbr.rel (%p22) target = $region8
    $region5: #{custom_lstm_peephole_bid.1} parent=1 // loop_body
      %s26 = ssub.s32 %s21, 1
      %s27 = ssub.s32 %s21, 2
      %s28 = sadd.s32 %s21, 1
      %s29 = ssub.s32 %s21, %s28
      %p30 = scmp.eq.s32.totalorder %s29, 0
      %s32 = sadd.s32 %s31, 1
      %s33 = scalar_select %p30, %s31, %s32
      %p36 = pneg %p30
      %p37 = scmp.eq.s32.totalorder %s21, 1
      %p38 = por %p36, %p37
      %p39 = scmp.ne.s32.totalorder %s31, %s34
      %p40 = scmp.eq.s32.totalorder %s21, 0
      %p41 = por %p39, %p40
      %p42 = scmp.ne.s32.totalorder %s31, %s34
      %p43 = scmp.eq.s32.totalorder %s26, 1
      %p44 = por %p42, %p43
      %p45 = scmp.ne.s32.totalorder %s34, %s35
      %p46 = scmp.eq.s32.totalorder %s26, 0
      %p47 = por %p45, %p46
      %p48 = scmp.ne.s32.totalorder %s34, %s35
      %p49 = scmp.eq.s32.totalorder %s27, 1
      %p50 = por %p48, %p49
      %p52 = scmp.ne.s32.totalorder %s35, %s51
      %p53 = scmp.eq.s32.totalorder %s27, 0
      %p54 = por %p52, %p53
      %s55 = ssub.s32 %s21, %s28
      %p56 = scmp.eq.s32.totalorder %s55, 0
      %s58 = sadd.s32 %s57, 1
      %s59 = scalar_select %p56, %s57, %s58
      %p62 = pneg %p56
      %p63 = scmp.eq.s32.totalorder %s21, 1
      %p64 = por %p62, %p63
      %p65 = scmp.ne.s32.totalorder %s57, %s60
      %p66 = scmp.eq.s32.totalorder %s21, 0
      %p67 = por %p65, %p66
      %p68 = scmp.ne.s32.totalorder %s57, %s60
      %p69 = scmp.eq.s32.totalorder %s26, 1
      %p70 = por %p68, %p69
      %p71 = scmp.ne.s32.totalorder %s60, %s61
      %p72 = scmp.eq.s32.totalorder %s26, 0
      %p73 = por %p71, %p72
      %p74 = scmp.ne.s32.totalorder %s60, %s61
      %p75 = scmp.eq.s32.totalorder %s27, 1
      %p76 = por %p74, %p75
      %p78 = scmp.ne.s32.totalorder %s61, %s77
      %p79 = scmp.eq.s32.totalorder %s27, 0
      %p80 = por %p78, %p79
      %s81 = ssub.s32 %s21, %s28
      %p82 = scmp.eq.s32.totalorder %s81, 0
      %s84 = sadd.s32 %s83, 1
      %s85 = scalar_select %p82, %s83, %s84
      %p88 = pneg %p82
      %p89 = scmp.eq.s32.totalorder %s21, 1
      %p90 = por %p88, %p89
      %p91 = scmp.ne.s32.totalorder %s83, %s86
      %p92 = scmp.eq.s32.totalorder %s21, 0
      %p93 = por %p91, %p92
      %p94 = scmp.ne.s32.totalorder %s83, %s86
      %p95 = scmp.eq.s32.totalorder %s26, 1
      %p96 = por %p94, %p95
      %p97 = scmp.ne.s32.totalorder %s86, %s87
      %p98 = scmp.eq.s32.totalorder %s26, 0
      %p99 = por %p97, %p98
      %p100 = scmp.ne.s32.totalorder %s86, %s87
      %p101 = scmp.eq.s32.totalorder %s27, 1
      %p102 = por %p100, %p101
      %p104 = scmp.ne.s32.totalorder %s87, %s103
      %p105 = scmp.eq.s32.totalorder %s27, 0
      %p106 = por %p104, %p105
      %s107 = ssub.s32 %s21, %s28
      %p108 = scmp.eq.s32.totalorder %s107, 0
      %s110 = sadd.s32 %s109, 1
      %s111 = scalar_select %p108, %s109, %s110
      %p114 = pneg %p108
      %p115 = scmp.eq.s32.totalorder %s21, 1
      %p116 = por %p114, %p115
      %p117 = scmp.ne.s32.totalorder %s109, %s112
      %p118 = scmp.eq.s32.totalorder %s21, 0
      %p119 = por %p117, %p118
      %p120 = scmp.ne.s32.totalorder %s109, %s112
      %p121 = scmp.eq.s32.totalorder %s26, 1
      %p122 = por %p120, %p121
      %p123 = scmp.ne.s32.totalorder %s112, %s113
      %p124 = scmp.eq.s32.totalorder %s26, 0
      %p125 = por %p123, %p124
      %p126 = scmp.ne.s32.totalorder %s112, %s113
      %p127 = scmp.eq.s32.totalorder %s27, 1
      %p128 = por %p126, %p127
      %p130 = scmp.ne.s32.totalorder %s113, %s129
      %p131 = scmp.eq.s32.totalorder %s27, 0
      %p132 = por %p130, %p131
      %s133 = ssub.s32 %s21, %s28
      %p134 = scmp.eq.s32.totalorder %s133, 0
      %s136 = sadd.s32 %s135, 1
      %s137 = scalar_select %p134, %s135, %s136
      %p140 = pneg %p134
      %p141 = scmp.eq.s32.totalorder %s21, 1
      %p142 = por %p140, %p141
      %p143 = scmp.ne.s32.totalorder %s135, %s138
      %p144 = scmp.eq.s32.totalorder %s21, 0
      %p145 = por %p143, %p144
      %p146 = scmp.ne.s32.totalorder %s135, %s138
      %p147 = scmp.eq.s32.totalorder %s26, 1
      %p148 = por %p146, %p147
      %p149 = scmp.ne.s32.totalorder %s138, %s139
      %p150 = scmp.eq.s32.totalorder %s26, 0
      %p151 = por %p149, %p150
      %p152 = scmp.ne.s32.totalorder %s138, %s139
      %p153 = scmp.eq.s32.totalorder %s27, 1
      %p154 = por %p152, %p153
      %p156 = scmp.ne.s32.totalorder %s139, %s155
      %p157 = scmp.eq.s32.totalorder %s27, 0
      %p158 = por %p156, %p157
      %s159 = ssub.s32 %s21, %s28
      %p160 = scmp.eq.s32.totalorder %s159, 0
      %s162 = sadd.s32 %s161, 1
      %s163 = scalar_select %p160, %s161, %s162
      %p166 = pneg %p160
      %p167 = scmp.eq.s32.totalorder %s21, 1
      %p168 = por %p166, %p167
      %p169 = scmp.ne.s32.totalorder %s161, %s164
      %p170 = scmp.eq.s32.totalorder %s21, 0
      %p171 = por %p169, %p170
      %p172 = scmp.ne.s32.totalorder %s161, %s164
      %p173 = scmp.eq.s32.totalorder %s26, 1
      %p174 = por %p172, %p173
      %p175 = scmp.ne.s32.totalorder %s164, %s165
      %p176 = scmp.eq.s32.totalorder %s26, 0
      %p177 = por %p175, %p176
      %p178 = scmp.ne.s32.totalorder %s164, %s165
      %p179 = scmp.eq.s32.totalorder %s27, 1
      %p180 = por %p178, %p179
      %p182 = scmp.ne.s32.totalorder %s165, %s181
      %p183 = scmp.eq.s32.totalorder %s27, 0
      %p184 = por %p182, %p183
      %s185 = ssub.s32 %s21, %s28
      %p186 = scmp.eq.s32.totalorder %s185, 0
      %s188 = sadd.s32 %s187, 1
      %s189 = scalar_select %p186, %s187, %s188
      %p192 = pneg %p186
      %p193 = scmp.eq.s32.totalorder %s21, 1
      %p194 = por %p192, %p193
      %p195 = scmp.ne.s32.totalorder %s187, %s190
      %p196 = scmp.eq.s32.totalorder %s21, 0
      %p197 = por %p195, %p196
      %p198 = scmp.ne.s32.totalorder %s187, %s190
      %p199 = scmp.eq.s32.totalorder %s26, 1
      %p200 = por %p198, %p199
      %p201 = scmp.ne.s32.totalorder %s190, %s191
      %p202 = scmp.eq.s32.totalorder %s26, 0
      %p203 = por %p201, %p202
      %p204 = scmp.ne.s32.totalorder %s190, %s191
      %p205 = scmp.eq.s32.totalorder %s27, 1
      %p206 = por %p204, %p205
      %p208 = scmp.ne.s32.totalorder %s191, %s207
      %p209 = scmp.eq.s32.totalorder %s27, 0
      %p210 = por %p208, %p209
      %s211 = ssub.s32 %s21, %s28
      %p212 = scmp.eq.s32.totalorder %s211, 0
      %s214 = sadd.s32 %s213, 1
      %s215 = scalar_select %p212, %s213, %s214
      %p218 = pneg %p212
      %p219 = scmp.eq.s32.totalorder %s21, 1
      %p220 = por %p218, %p219
      %p221 = scmp.ne.s32.totalorder %s213, %s216
      %p222 = scmp.eq.s32.totalorder %s21, 0
      %p223 = por %p221, %p222
      %p224 = scmp.ne.s32.totalorder %s213, %s216
      %p225 = scmp.eq.s32.totalorder %s26, 1
      %p226 = por %p224, %p225
      %p227 = scmp.ne.s32.totalorder %s216, %s217
      %p228 = scmp.eq.s32.totalorder %s26, 0
      %p229 = por %p227, %p228
      %p230 = scmp.ne.s32.totalorder %s216, %s217
      %p231 = scmp.eq.s32.totalorder %s27, 1
      %p232 = por %p230, %p231
      %p234 = scmp.ne.s32.totalorder %s217, %s233
      %p235 = scmp.eq.s32.totalorder %s27, 0
      %p236 = por %p234, %p235
      %s237 = ssub.s32 %s21, %s28
      %p238 = scmp.eq.s32.totalorder %s237, 0
      %s240 = sadd.s32 %s239, 1
      %s241 = scalar_select %p238, %s239, %s240
      %p244 = pneg %p238
      %p245 = scmp.eq.s32.totalorder %s21, 1
      %p246 = por %p244, %p245
      %p247 = scmp.ne.s32.totalorder %s239, %s242
      %p248 = scmp.eq.s32.totalorder %s21, 0
      %p249 = por %p247, %p248
      %p250 = scmp.ne.s32.totalorder %s239, %s242
      %p251 = scmp.eq.s32.totalorder %s26, 1
      %p252 = por %p250, %p251
      %p253 = scmp.ne.s32.totalorder %s242, %s243
      %p254 = scmp.eq.s32.totalorder %s26, 0
      %p255 = por %p253, %p254
      %p256 = scmp.ne.s32.totalorder %s242, %s243
      %p257 = scmp.eq.s32.totalorder %s27, 1
      %p258 = por %p256, %p257
      %p260 = scmp.ne.s32.totalorder %s243, %s259
      %p261 = scmp.eq.s32.totalorder %s27, 0
      %p262 = por %p260, %p261
      %s263 = ssub.s32 %s21, %s28
      %p264 = scmp.eq.s32.totalorder %s263, 0
      %s266 = sadd.s32 %s265, 1
      %s267 = scalar_select %p264, %s265, %s266
      %p270 = pneg %p264
      %p271 = scmp.eq.s32.totalorder %s21, 1
      %p272 = por %p270, %p271
      %p273 = scmp.ne.s32.totalorder %s265, %s268
      %p274 = scmp.eq.s32.totalorder %s21, 0
      %p275 = por %p273, %p274
      %p276 = scmp.ne.s32.totalorder %s265, %s268
      %p277 = scmp.eq.s32.totalorder %s26, 1
      %p278 = por %p276, %p277
      %p279 = scmp.ne.s32.totalorder %s268, %s269
      %p280 = scmp.eq.s32.totalorder %s26, 0
      %p281 = por %p279, %p280
      %p282 = scmp.ne.s32.totalorder %s268, %s269
      %p283 = scmp.eq.s32.totalorder %s27, 1
      %p284 = por %p282, %p283
      %p286 = scmp.ne.s32.totalorder %s269, %s285
      %p287 = scmp.eq.s32.totalorder %s27, 0
      %p288 = por %p286, %p287
      %p289 = scmp.le.s32.totalorder 1, %s21
      %p290 = scmp.lt.s32.totalorder %s21, 3
      %p291 = pnand %p289, %p290
      %p292 = pneg %p291
      // Predicated region
      $region9: #{custom_lstm_peephole_bid.1} parent=5 // pred_check
        _
      $region10: #{custom_lstm_peephole_bid.1} parent=5 // pred_check_branch
        %294 = sbr.rel (%p291) target = $region12
      $region11: #{custom_lstm_peephole_bid.1} parent=5 // pred_region
        %s295 = ssub.s32 %s21, 1
      $region12: #{custom_lstm_peephole_bid.1} parent=5 // pred_fallthru
        _
      %p296 = scmp.lt.s32.totalorder %s21, 2
      // Predicated region
      $region13: #{custom_lstm_peephole_bid.1} parent=5 // pred_check
        %p297 = pneg %p296
      $region14: #{custom_lstm_peephole_bid.1} parent=5 // pred_check_branch
        %299 = sbr.rel (%p297) target = $region16
      $region15: #{custom_lstm_peephole_bid.1} parent=5 // pred_region
        // Predicated region
        $region17: #{custom_lstm_peephole_bid.1} parent=15 // pred_check
          %p300 = pneg %p41
        $region18: #{custom_lstm_peephole_bid.1} parent=15 // pred_check_branch
          %302 = sbr.rel (%p300) target = $region20
        $region19: #{custom_lstm_peephole_bid.1} parent=15 // pred_region
          %p303 = scmp.lt.s32.totalorder %s21, 1
          %s304 = scalar_select %p303, %s21, 1
          %s305 = smul.addr %s304, 2
          %s306 = smul.addr %s305, 8
          %s307 = scalar_lea.vmem %s0, %s306
        $region20: #{custom_lstm_peephole_bid.1} parent=15 // pred_fallthru
          _
        // Predicated region
        $region21: #{custom_lstm_peephole_bid.1} parent=15 // pred_check
          %p308 = pneg %p67
        $region22: #{custom_lstm_peephole_bid.1} parent=15 // pred_check_branch
          %310 = sbr.rel (%p308) target = $region24
        $region23: #{custom_lstm_peephole_bid.1} parent=15 // pred_region
          %p311 = scmp.lt.s32.totalorder %s21, 1
          %s312 = scalar_select %p311, %s21, 1
          %s313 = smul.addr %s312, 4
          %s314 = scalar_lea.vmem %s1, %s313
        $region24: #{custom_lstm_peephole_bid.1} parent=15 // pred_fallthru
          _
        // Predicated region
        $region25: #{custom_lstm_peephole_bid.1} parent=15 // pred_check
          %p315 = pneg %p93
        $region26: #{custom_lstm_peephole_bid.1} parent=15 // pred_check_branch
          %317 = sbr.rel (%p315) target = $region28
        $region27: #{custom_lstm_peephole_bid.1} parent=15 // pred_region
          %p318 = scmp.lt.s32.totalorder %s21, 1
          %s319 = scalar_select %p318, %s21, 1
          %s320 = smul.addr %s319, 4
          %s321 = smul.addr %s320, 8
          %s322 = scalar_lea.vmem %s2, %s321
        $region28: #{custom_lstm_peephole_bid.1} parent=15 // pred_fallthru
          _
        // Predicated region
        $region29: #{custom_lstm_peephole_bid.1} parent=15 // pred_check
          %p323 = pneg %p119
        $region30: #{custom_lstm_peephole_bid.1} parent=15 // pred_check_branch
          %325 = sbr.rel (%p323) target = $region32
        $region31: #{custom_lstm_peephole_bid.1} parent=15 // pred_region
          %p326 = scmp.lt.s32.totalorder %s21, 1
          %s327 = scalar_select %p326, %s21, 1
          %s328 = scalar_lea.vmem %s3, %s327
        $region32: #{custom_lstm_peephole_bid.1} parent=15 // pred_fallthru
          _
        // Predicated region
        $region33: #{custom_lstm_peephole_bid.1} parent=15 // pred_check
          %p329 = pneg %p145
        $region34: #{custom_lstm_peephole_bid.1} parent=15 // pred_check_branch
          %331 = sbr.rel (%p329) target = $region36
        $region35: #{custom_lstm_peephole_bid.1} parent=15 // pred_region
          %p332 = scmp.lt.s32.totalorder %s21, 1
          %s333 = scalar_select %p332, %s21, 1
          %s334 = scalar_lea.vmem %s4, %s333
        $region36: #{custom_lstm_peephole_bid.1} parent=15 // pred_fallthru
          _
        // Predicated region
        $region37: #{custom_lstm_peephole_bid.1} parent=15 // pred_check
          %p335 = pneg %p171
        $region38: #{custom_lstm_peephole_bid.1} parent=15 // pred_check_branch
          %337 = sbr.rel (%p335) target = $region40
        $region39: #{custom_lstm_peephole_bid.1} parent=15 // pred_region
          %s338 = sand.u32 %s161, 1
          %s339 = scalar_lea.sflag [#allocation4], %s338
          %s340 = sand.u32 %s161, 1
          %s341 = smul.addr %s340, 32
          %s342 = scalar_lea.vmem [#allocation3], %s341
          %344 = vsyncadd %s339, 0
          %s345 = smul.addr %s21, 4
          %s346 = smul.addr %s345, 8
          %s347 = scalar_lea.hbm %s5, %s346
          %s348 = sshll.u32 %s347, 4
          %s349 = int_to_ptr.hbm [resolvable:$true] %s348
          %s350 = sshll.u32 %s342, 4
          %s351 = int_to_ptr.vmem [resolvable:$true] %s350
          %356 = dma.hbm_to_vmem [thread:$0]  %s349, 512, %s351, %s339, 128, 128, 8
        $region40: #{custom_lstm_peephole_bid.1} parent=15 // pred_fallthru
          _
        // Predicated region
        $region41: #{custom_lstm_peephole_bid.1} parent=15 // pred_check
          %p357 = pneg %p197
        $region42: #{custom_lstm_peephole_bid.1} parent=15 // pred_check_branch
          %359 = sbr.rel (%p357) target = $region44
        $region43: #{custom_lstm_peephole_bid.1} parent=15 // pred_region
          %s360 = sand.u32 %s187, 1
          %s361 = scalar_lea.sflag [#allocation6], %s360
          %s362 = sand.u32 %s187, 1
          %s363 = smul.addr %s362, 32
          %s364 = scalar_lea.vmem [#allocation5], %s363
          %366 = vsyncadd %s361, 0
          %s367 = smul.addr %s21, 4
          %s368 = smul.addr %s367, 8
          %s369 = scalar_lea.hbm %s6, %s368
          %s370 = sshll.u32 %s369, 4
          %s371 = int_to_ptr.hbm [resolvable:$true] %s370
          %s372 = sshll.u32 %s364, 4
          %s373 = int_to_ptr.vmem [resolvable:$true] %s372
          %378 = dma.hbm_to_vmem [thread:$0]  %s371, 512, %s373, %s361, 128, 128, 8
        $region44: #{custom_lstm_peephole_bid.1} parent=15 // pred_fallthru
          _
        // Predicated region
        $region45: #{custom_lstm_peephole_bid.1} parent=15 // pred_check
          %p379 = pneg %p223
        $region46: #{custom_lstm_peephole_bid.1} parent=15 // pred_check_branch
          %381 = sbr.rel (%p379) target = $region48
        $region47: #{custom_lstm_peephole_bid.1} parent=15 // pred_region
          %p382 = scmp.lt.s32.totalorder %s21, 1
          %s383 = scalar_select %p382, %s21, 1
          %s384 = scalar_lea.vmem %s7, %s383
        $region48: #{custom_lstm_peephole_bid.1} parent=15 // pred_fallthru
          _
        // Predicated region
        $region49: #{custom_lstm_peephole_bid.1} parent=15 // pred_check
          %p385 = pneg %p249
        $region50: #{custom_lstm_peephole_bid.1} parent=15 // pred_check_branch
          %387 = sbr.rel (%p385) target = $region52
        $region51: #{custom_lstm_peephole_bid.1} parent=15 // pred_region
          %p388 = scmp.lt.s32.totalorder %s21, 1
          %s389 = scalar_select %p388, %s21, 1
          %s390 = scalar_lea.vmem %s8, %s389
        $region52: #{custom_lstm_peephole_bid.1} parent=15 // pred_fallthru
          _
      $region16: #{custom_lstm_peephole_bid.1} parent=5 // pred_fallthru
        _
      %p391 = scmp.le.s32.totalorder 1, %s21
      %p392 = scmp.lt.s32.totalorder %s21, 3
      %p393 = pnand %p391, %p392
      %p394 = pneg %p393
      // Predicated region
      $region53: #{custom_lstm_peephole_bid.1} parent=5 // pred_check
        _
      $region54: #{custom_lstm_peephole_bid.1} parent=5 // pred_check_branch
        %396 = sbr.rel (%p393) target = $region56
      $region55: #{custom_lstm_peephole_bid.1} parent=5 // pred_region
        %s397 = ssub.s32 %s21, 1
        %s398 = sand.u32 %s164, 1
        %s399 = scalar_lea.sflag [#allocation4], %s398
        %s400 = sand.u32 %s164, 1
        %s401 = smul.addr %s400, 32
        %s402 = scalar_lea.vmem [#allocation3], %s401
        // Predicated region
        $region57: #{custom_lstm_peephole_bid.1} parent=55 // pred_check
          %p403 = pneg %p177
        $region58: #{custom_lstm_peephole_bid.1} parent=55 // pred_check_branch
          %405 = sbr.rel (%p403) target = $region60
        $region59: #{custom_lstm_peephole_bid.1} parent=55 // pred_region
          %407 = dma.done %s399, 512
        $region60: #{custom_lstm_peephole_bid.1} parent=55 // pred_fallthru
          _
        %s408 = sand.u32 %s190, 1
        %s409 = scalar_lea.sflag [#allocation6], %s408
        %s410 = sand.u32 %s190, 1
        %s411 = smul.addr %s410, 32
        %s412 = scalar_lea.vmem [#allocation5], %s411
        // Predicated region
        $region61: #{custom_lstm_peephole_bid.1} parent=55 // pred_check
          %p413 = pneg %p203
        $region62: #{custom_lstm_peephole_bid.1} parent=55 // pred_check_branch
          %415 = sbr.rel (%p413) target = $region64
        $region63: #{custom_lstm_peephole_bid.1} parent=55 // pred_region
          %417 = dma.done %s409, 512
        $region64: #{custom_lstm_peephole_bid.1} parent=55 // pred_fallthru
          _
        %p418 = scmp.lt.s32.totalorder %s26, 1
        %s419 = scalar_select %p418, %s26, 1
        %s420 = smul.addr %s419, 2
        %s421 = smul.addr %s420, 8
        %s422 = scalar_lea.vmem %s0, %s421
        %p423 = pneg %p47
        %p424 = pneg %p44
        %p425 = scmp.lt.s32.totalorder %s26, 1
        %s426 = scalar_select %p425, %s26, 1
        %s427 = smul.addr %s426, 4
        %s428 = scalar_lea.vmem %s1, %s427
        %p429 = pneg %p73
        %p430 = pneg %p70
        %p431 = scmp.lt.s32.totalorder %s26, 1
        %s432 = scalar_select %p431, %s26, 1
        %s433 = smul.addr %s432, 4
        %s434 = smul.addr %s433, 8
        %s435 = scalar_lea.vmem %s2, %s434
        %p436 = pneg %p99
        %p437 = pneg %p96
        %p438 = scmp.lt.s32.totalorder %s26, 1
        %s439 = scalar_select %p438, %s26, 1
        %s440 = scalar_lea.vmem %s3, %s439
        %p441 = pneg %p125
        %p442 = pneg %p122
        %p443 = scmp.lt.s32.totalorder %s26, 1
        %s444 = scalar_select %p443, %s26, 1
        %s445 = scalar_lea.vmem %s4, %s444
        %p446 = pneg %p151
        %p447 = pneg %p148
        %s448 = sand.u32 %s164, 1
        %s449 = scalar_lea.sflag [#allocation4], %s448
        %s450 = sand.u32 %s164, 1
        %s451 = smul.addr %s450, 32
        %s452 = scalar_lea.vmem [#allocation3], %s451
        %p453 = pneg %p177
        %p454 = pneg %p174
        %s455 = sand.u32 %s190, 1
        %s456 = scalar_lea.sflag [#allocation6], %s455
        %s457 = sand.u32 %s190, 1
        %s458 = smul.addr %s457, 32
        %s459 = scalar_lea.vmem [#allocation5], %s458
        %p460 = pneg %p203
        %p461 = pneg %p200
        %p462 = scmp.lt.s32.totalorder %s26, 1
        %s463 = scalar_select %p462, %s26, 1
        %s464 = scalar_lea.vmem %s7, %s463
        %p465 = pneg %p229
        %p466 = pneg %p226
        %p467 = scmp.lt.s32.totalorder %s26, 1
        %s468 = scalar_select %p467, %s26, 1
        %s469 = scalar_lea.vmem %s8, %s468
        %p470 = pneg %p255
        %p471 = pneg %p252
        %p472 = pneg %p281
        %p473 = pneg %p278
        %p474 = scmp.lt.s32.totalorder %s26, 1
        %s475 = scalar_select %p474, %s26, 1
        %s476 = smul.addr %s475, 2
        %s477 = smul.addr %s476, 8
        %s478 = scalar_lea.vmem %s9, %s477
        %p479 = scmp.lt.s32.totalorder %s26, 1
        %s480 = scalar_select %p479, %s26, 1
        %s481 = smul.addr %s480, 2
        %s482 = smul.addr %s481, 8
        %s483 = scalar_lea.vmem %s0, %s482
        %p484 = scmp.lt.s32.totalorder %s26, 1
        %s485 = scalar_select %p484, %s26, 1
        %s486 = smul.addr %s485, 4
        %s487 = scalar_lea.vmem %s1, %s486
        %p488 = scmp.lt.s32.totalorder %s26, 1
        %s489 = scalar_select %p488, %s26, 1
        %s490 = smul.addr %s489, 4
        %s491 = smul.addr %s490, 8
        %s492 = scalar_lea.vmem %s2, %s491
        %p493 = scmp.lt.s32.totalorder %s26, 1
        %s494 = scalar_select %p493, %s26, 1
        %s495 = scalar_lea.vmem %s3, %s494
        %p496 = scmp.lt.s32.totalorder %s26, 1
        %s497 = scalar_select %p496, %s26, 1
        %s498 = scalar_lea.vmem %s4, %s497
        %p499 = scmp.lt.s32.totalorder %s26, 1
        %s500 = scalar_select %p499, %s26, 1
        %s501 = scalar_lea.vmem %s7, %s500
        %p502 = scmp.lt.s32.totalorder %s26, 1
        %s503 = scalar_select %p502, %s26, 1
        %s504 = scalar_lea.vmem %s8, %s503
        %p505 = scmp.lt.s32.totalorder %s26, 1
        %s506 = scalar_select %p505, %s26, 1
        %s507 = smul.addr %s506, 2
        %s508 = smul.addr %s507, 8
        %s509 = scalar_lea.vmem %s9, %s508
        %v510 = vld [vmem:[%s483] sm:$0xff]
        %v511 = vld [vmem:[%s483 + $0x8] sm:$0xff]
        %v512 = vld [vmem:[%s487] sm:$0xf]
        %v513 = vld [vmem:[%s495] sm:$0x1]
        %v515 = vperm.slane %v513, 0
        %vm517 = vcmask 31744
        %v519 = vsel %vm517, %v510, 0
        %v522 = vsel %vm517, %v511, 0
        %vm524 = vcmask 1043456
        %v526 = vsel %vm524, %v512, 0
        %528 = vmatpush.msra.mxu0 0.0
        %529 = vmatpush.msra.mxu0 0.0
        %530 = vmatpush.msra.mxu0 0.0
        %531 = vmatpush.msra.mxu0 0.0
        %532 = vmatpush.msra.mxu0 0.0
        %533 = vmatpush.msra.mxu0 0.0
        %534 = vmatpush.msra.mxu0 0.0
        %535 = vmatpush.msra.mxu0 0.0
        %536 = vmatpush.msra.mxu0 0.0
        %537 = vmatpush.msra.mxu0 0.0
        %538 = vmatpush.msra.mxu0 0.0
        %539 = vmatpush.msra.mxu0 0.0
        %540 = vmatpush.msra.mxu0 0.0
        %541 = vmatpush.msra.mxu0 0.0
        %542 = vmatpush.msra.mxu0 0.0
        %543 = vmatpush.msra.mxu0 %v526
        %544 = vmatmul.f32.gmra.mxu0 %v519
        %v545 = vpop.f32.mrf.mxu0
        %v546 = vadd.f32 %v515, %v545
        %547 = vmatmul.f32.gmra.mxu0 %v522
        %v548 = vpop.f32.mrf.mxu0
        %v549 = vadd.f32 %v515, %v548
        %550 = vdwg.mxu0
        %v551 = vld [vmem:[%s492] sm:$0xff]
        %v552 = vld [vmem:[%s492 + $0x8] sm:$0xff]
        %v553 = vld [vmem:[%s492 + $0x10] sm:$0xff]
        %v554 = vld [vmem:[%s492 + $0x18] sm:$0xff]
        %v555 = vld [vmem:[%s498] sm:$0x1]
        %vm556 = vcmask 261120
        %v558 = vsel %vm556, 0.0, 0
        %560 = vmatpush.msra.mxu0 0.0
        %561 = vmatpush.msra.mxu0 0.0
        %562 = vmatpush.msra.mxu0 0.0
        %563 = vmatpush.msra.mxu0 0.0
        %564 = vmatpush.msra.mxu0 0.0
        %565 = vmatpush.msra.mxu0 0.0
        %566 = vmatpush.msra.mxu0 0.0
        %567 = vmatpush.msra.mxu0 0.0
        %568 = vmatpush.msra.mxu0 0.0
        %569 = vmatpush.msra.mxu0 0.0
        %570 = vmatpush.msra.mxu0 0.0
        %571 = vmatpush.msra.mxu0 0.0
        %572 = vmatpush.msra.mxu0 %v554
        %573 = vmatpush.msra.mxu0 %v553
        %574 = vmatpush.msra.mxu0 %v552
        %575 = vmatpush.msra.mxu0 %v551
        %576 = vmatmul.f32.gmra.mxu0 %v558
        %v577 = vpop.f32.mrf.mxu0
        %v578 = vadd.f32 0.0, %v577
        %579 = vdwg.mxu0
        %v580 = vadd.f32 %v546, %v578
        %v582 = vperm.slane %v555, 0
        %v584 = vmul.f32 %v582, 0.0
        %v585 = vadd.f32 %v580, %v584
        %v586 = vxor.u32 %v585, 2147483648
        %v587 = vmul.f32 %v586, 1.442695
        %v588 = vpow.pop %v587
        %v589 = vadd.f32 %v588, 1.0
        %v590 = vrcp.pop %v589
        %v591 = vmul.f32 %v589, %v590
        %v592 = vsub.f32 1.0, %v591
        %v593 = vmul.f32 %v590, %v592
        %v594 = vadd.f32 %v590, %v593
        %vm595 = vweird.f32 %v589
        %vm596 = vweird.f32 %v590
        %vm597 = vmor %vm595, %vm596
        %v598 = vsel %vm597, %v590, %v594
        %v599 = vand.u32 2147483647, %v589
        %vm600 = vcmp.eq.f32.partialorder %v599, 8.507059e+37
        %v601 = vand.u32 %v589, 2147483648
        %v602 = vor.u32 1.1754944e-38, %v601
        %v603 = vsel %vm600, %v602, %v598
        %v604 = vmul.f32 1.0, %v603
        %v605 = vmul.f32 %v604, 0.0
        %v606 = vtanh.pop %v580
        %608 = vrot.lane.b32.xlu0 %v606, 96
        %v609 = vpop.permute.xlu0 %608
        %v611 = vmul.f32 %v604, %v609
        %613 = vrot.lane.b32.xlu0 %v611, 96
        %v614 = vpop.permute.xlu0 %613
        %v616 = vadd.f32 %v605, %v614
        %618 = vrot.lane.b32.xlu0 %v616, 64
        %v619 = vpop.permute.xlu0 %618
        %v621 = vmul.f32 %v582, %v619
        %623 = vrot.lane.b32.xlu0 %v621, 32
        %v624 = vpop.permute.xlu0 %623
        %v626 = vadd.f32 %v580, %v624
        %v627 = vxor.u32 %v626, 2147483648
        %v628 = vmul.f32 %v627, 1.442695
        %v629 = vpow.pop %v628
        %v630 = vadd.f32 %v629, 1.0
        %v631 = vrcp.pop %v630
        %v632 = vmul.f32 %v630, %v631
        %v633 = vsub.f32 1.0, %v632
        %v634 = vmul.f32 %v631, %v633
        %v635 = vadd.f32 %v631, %v634
        %vm636 = vweird.f32 %v630
        %vm637 = vweird.f32 %v631
        %vm638 = vmor %vm636, %vm637
        %v639 = vsel %vm638, %v631, %v635
        %v640 = vand.u32 2147483647, %v630
        %vm641 = vcmp.eq.f32.partialorder %v640, 8.507059e+37
        %v642 = vand.u32 %v630, 2147483648
        %v643 = vor.u32 1.1754944e-38, %v642
        %v644 = vsel %vm641, %v643, %v639
        %v645 = vmul.f32 1.0, %v644
        %v646 = vtanh.pop %v616
        %648 = vrot.lane.b32.xlu0 %v646, 96
        %v649 = vpop.permute.xlu0 %648
        %v651 = vmul.f32 %v645, %v649
        %653 = vrot.lane.b32.xlu0 %v651, 32
        %v654 = vpop.permute.xlu0 %653
        %vm656 = vcmask 254976
        %657 = vst.msk [vmem:[#allocation2] sm:$0x3] %vm656, %v654
        %v658 = vsel %vm556, %v654, 0
        %660 = vmatpush.msra.mxu0 0.0
        %661 = vmatpush.msra.mxu0 0.0
        %662 = vmatpush.msra.mxu0 0.0
        %663 = vmatpush.msra.mxu0 0.0
        %664 = vmatpush.msra.mxu0 0.0
        %665 = vmatpush.msra.mxu0 0.0
        %666 = vmatpush.msra.mxu0 0.0
        %667 = vmatpush.msra.mxu0 0.0
        %668 = vmatpush.msra.mxu0 0.0
        %669 = vmatpush.msra.mxu0 0.0
        %670 = vmatpush.msra.mxu0 0.0
        %671 = vmatpush.msra.mxu0 0.0
        %672 = vmatpush.msra.mxu0 %v554
        %673 = vmatpush.msra.mxu0 %v553
        %674 = vmatpush.msra.mxu0 %v552
        %675 = vmatpush.msra.mxu0 %v551
        %676 = vmatmul.f32.gmra.mxu0 %v658
        %v677 = vpop.f32.mrf.mxu0
        %v678 = vadd.f32 0.0, %v677
        %679 = vdwg.mxu0
        %v681 = vrot.slane %v678, 6
        %v683 = vadd.f32 %v546, %v681
        %v684 = vmul.f32 %v582, %v616
        %v686 = vrot.slane %v684, 6
        %v688 = vadd.f32 %v683, %v686
        %v689 = vxor.u32 %v688, 2147483648
        %v690 = vmul.f32 %v689, 1.442695
        %v691 = vpow.pop %v690
        %v692 = vadd.f32 %v691, 1.0
        %v693 = vrcp.pop %v692
        %v694 = vmul.f32 %v692, %v693
        %v695 = vsub.f32 1.0, %v694
        %v696 = vmul.f32 %v693, %v695
        %v697 = vadd.f32 %v693, %v696
        %vm698 = vweird.f32 %v692
        %vm699 = vweird.f32 %v693
        %vm700 = vmor %vm698, %vm699
        %v701 = vsel %vm700, %v693, %v697
        %v702 = vand.u32 2147483647, %v692
        %vm703 = vcmp.eq.f32.partialorder %v702, 8.507059e+37
        %v704 = vand.u32 %v692, 2147483648
        %v705 = vor.u32 1.1754944e-38, %v704
        %v706 = vsel %vm703, %v705, %v701
        %v707 = vmul.f32 1.0, %v706
        %708 = vrot.lane.b32.xlu0 %v616, 32
        %v709 = vpop.permute.xlu0 %708
        %v711 = vmul.f32 %v582, %v709
        %v713 = vrot.slane %v711, 6
        %v715 = vadd.f32 %v683, %v713
        %v716 = vxor.u32 %v715, 2147483648
        %v717 = vmul.f32 %v716, 1.442695
        %v718 = vpow.pop %v717
        %v719 = vadd.f32 %v718, 1.0
        %v720 = vrcp.pop %v719
        %v721 = vmul.f32 %v719, %v720
        %v722 = vsub.f32 1.0, %v721
        %v723 = vmul.f32 %v720, %v722
        %v724 = vadd.f32 %v720, %v723
        %vm725 = vweird.f32 %v719
        %vm726 = vweird.f32 %v720
        %vm727 = vmor %vm725, %vm726
        %v728 = vsel %vm727, %v720, %v724
        %v729 = vand.u32 2147483647, %v719
        %vm730 = vcmp.eq.f32.partialorder %v729, 8.507059e+37
        %v731 = vand.u32 %v719, 2147483648
        %v732 = vor.u32 1.1754944e-38, %v731
        %v733 = vsel %vm730, %v732, %v728
        %v734 = vmul.f32 1.0, %v733
        %v735 = vrot.slane %v616, 6
        %v737 = vmul.f32 %v707, %v735
        %v738 = vtanh.pop %v683
        %740 = vrot.lane.b32.xlu0 %v738, 96
        %v741 = vpop.permute.xlu0 %740
        %v743 = vmul.f32 %v734, %v741
        %745 = vrot.lane.b32.xlu0 %v743, 96
        %v746 = vpop.permute.xlu0 %745
        %v748 = vadd.f32 %v737, %v746
        %v750 = vrot.slane %v748, 2
        %751 = vrot.lane.b32.xlu0 %v750, 64
        %v752 = vpop.permute.xlu0 %751
        %v754 = vmul.f32 %v582, %v752
        %v756 = vrot.slane %v754, 6
        %757 = vrot.lane.b32.xlu0 %v756, 32
        %v758 = vpop.permute.xlu0 %757
        %v760 = vadd.f32 %v683, %v758
        %v761 = vxor.u32 %v760, 2147483648
        %v762 = vmul.f32 %v761, 1.442695
        %v763 = vpow.pop %v762
        %v764 = vadd.f32 %v763, 1.0
        %v765 = vrcp.pop %v764
        %v766 = vmul.f32 %v764, %v765
        %v767 = vsub.f32 1.0, %v766
        %v768 = vmul.f32 %v765, %v767
        %v769 = vadd.f32 %v765, %v768
        %vm770 = vweird.f32 %v764
        %vm771 = vweird.f32 %v765
        %vm772 = vmor %vm770, %vm771
        %v773 = vsel %vm772, %v765, %v769
        %v774 = vand.u32 2147483647, %v764
        %vm775 = vcmp.eq.f32.partialorder %v774, 8.507059e+37
        %v776 = vand.u32 %v764, 2147483648
        %v777 = vor.u32 1.1754944e-38, %v776
        %v778 = vsel %vm775, %v777, %v773
        %v779 = vmul.f32 1.0, %v778
        %v780 = vtanh.pop %v748
        %782 = vrot.lane.b32.xlu0 %v780, 96
        %v783 = vpop.permute.xlu0 %782
        %v785 = vmul.f32 %v779, %v783
        %787 = vrot.lane.b32.xlu0 %v785, 32
        %v788 = vpop.permute.xlu0 %787
        %vm790 = vcmask 257026
        %791 = vst.msk [vmem:[#allocation2] sm:$0xc] %vm790, %v788
        %v792 = vrot.slane %v785, 2
        %793 = vrot.lane.b32.xlu0 %v792, 32
        %v794 = vpop.permute.xlu0 %793
        %v795 = vsel %vm556, %v794, 0
        %797 = vmatpush.msra.mxu0 0.0
        %798 = vmatpush.msra.mxu0 0.0
        %799 = vmatpush.msra.mxu0 0.0
        %800 = vmatpush.msra.mxu0 0.0
        %801 = vmatpush.msra.mxu0 0.0
        %802 = vmatpush.msra.mxu0 0.0
        %803 = vmatpush.msra.mxu0 0.0
        %804 = vmatpush.msra.mxu0 0.0
        %805 = vmatpush.msra.mxu0 0.0
        %806 = vmatpush.msra.mxu0 0.0
        %807 = vmatpush.msra.mxu0 0.0
        %808 = vmatpush.msra.mxu0 0.0
        %809 = vmatpush.msra.mxu0 %v554
        %810 = vmatpush.msra.mxu0 %v553
        %811 = vmatpush.msra.mxu0 %v552
        %812 = vmatpush.msra.mxu0 %v551
        %813 = vmatmul.f32.gmra.mxu0 %v795
        %v814 = vpop.f32.mrf.mxu0
        %v815 = vadd.f32 0.0, %v814
        %816 = vdwg.mxu0
        %v818 = vrot.slane %v815, 4
        %v820 = vadd.f32 %v546, %v818
        %v821 = vmul.f32 %v582, %v748
        %v823 = vrot.slane %v821, 6
        %v825 = vadd.f32 %v820, %v823
        %v826 = vxor.u32 %v825, 2147483648
        %v827 = vmul.f32 %v826, 1.442695
        %v828 = vpow.pop %v827
        %v829 = vadd.f32 %v828, 1.0
        %v830 = vrcp.pop %v829
        %v831 = vmul.f32 %v829, %v830
        %v832 = vsub.f32 1.0, %v831
        %v833 = vmul.f32 %v830, %v832
        %v834 = vadd.f32 %v830, %v833
        %vm835 = vweird.f32 %v829
        %vm836 = vweird.f32 %v830
        %vm837 = vmor %vm835, %vm836
        %v838 = vsel %vm837, %v830, %v834
        %v839 = vand.u32 2147483647, %v829
        %vm840 = vcmp.eq.f32.partialorder %v839, 8.507059e+37
        %v841 = vand.u32 %v829, 2147483648
        %v842 = vor.u32 1.1754944e-38, %v841
        %v843 = vsel %vm840, %v842, %v838
        %v844 = vmul.f32 1.0, %v843
        %845 = vrot.lane.b32.xlu0 %v750, 32
        %v846 = vpop.permute.xlu0 %845
        %v848 = vmul.f32 %v582, %v846
        %v850 = vrot.slane %v848, 4
        %v852 = vadd.f32 %v820, %v850
        %v853 = vxor.u32 %v852, 2147483648
        %v854 = vmul.f32 %v853, 1.442695
        %v855 = vpow.pop %v854
        %v856 = vadd.f32 %v855, 1.0
        %v857 = vrcp.pop %v856
        %v858 = vmul.f32 %v856, %v857
        %v859 = vsub.f32 1.0, %v858
        %v860 = vmul.f32 %v857, %v859
        %v861 = vadd.f32 %v857, %v860
        %vm862 = vweird.f32 %v856
        %vm863 = vweird.f32 %v857
        %vm864 = vmor %vm862, %vm863
        %v865 = vsel %vm864, %v857, %v861
        %v866 = vand.u32 2147483647, %v856
        %vm867 = vcmp.eq.f32.partialorder %v866, 8.507059e+37
        %v868 = vand.u32 %v856, 2147483648
        %v869 = vor.u32 1.1754944e-38, %v868
        %v870 = vsel %vm867, %v869, %v865
        %v871 = vmul.f32 1.0, %v870
        %v872 = vrot.slane %v748, 6
        %v874 = vmul.f32 %v844, %v872
        %v875 = vtanh.pop %v820
        %877 = vrot.lane.b32.xlu0 %v875, 96
        %v878 = vpop.permute.xlu0 %877
        %v880 = vmul.f32 %v871, %v878
        %882 = vrot.lane.b32.xlu0 %v880, 96
        %v883 = vpop.permute.xlu0 %882
        %v885 = vadd.f32 %v874, %v883
        %v887 = vrot.slane %v885, 4
        %888 = vrot.lane.b32.xlu0 %v887, 64
        %v889 = vpop.permute.xlu0 %888
        %v891 = vmul.f32 %v582, %v889
        %v893 = vrot.slane %v891, 4
        %894 = vrot.lane.b32.xlu0 %v893, 32
        %v895 = vpop.permute.xlu0 %894
        %v897 = vadd.f32 %v820, %v895
        %v898 = vxor.u32 %v897, 2147483648
        %v899 = vmul.f32 %v898, 1.442695
        %v900 = vpow.pop %v899
        %v901 = vadd.f32 %v900, 1.0
        %v902 = vrcp.pop %v901
        %v903 = vmul.f32 %v901, %v902
        %v904 = vsub.f32 1.0, %v903
        %v905 = vmul.f32 %v902, %v904
        %v906 = vadd.f32 %v902, %v905
        %vm907 = vweird.f32 %v901
        %vm908 = vweird.f32 %v902
        %vm909 = vmor %vm907, %vm908
        %v910 = vsel %vm909, %v902, %v906
        %v911 = vand.u32 2147483647, %v901
        %vm912 = vcmp.eq.f32.partialorder %v911, 8.507059e+37
        %v913 = vand.u32 %v901, 2147483648
        %v914 = vor.u32 1.1754944e-38, %v913
        %v915 = vsel %vm912, %v914, %v910
        %v916 = vmul.f32 1.0, %v915
        %v917 = vtanh.pop %v885
        %919 = vrot.lane.b32.xlu0 %v917, 96
        %v920 = vpop.permute.xlu0 %919
        %v922 = vmul.f32 %v916, %v920
        %924 = vrot.lane.b32.xlu0 %v922, 32
        %v925 = vpop.permute.xlu0 %924
        %vm927 = vcmask 259076
        %928 = vst.msk [vmem:[#allocation2] sm:$0x30] %vm927, %v925
        %v929 = vrot.slane %v922, 4
        %930 = vrot.lane.b32.xlu0 %v929, 32
        %v931 = vpop.permute.xlu0 %930
        %v932 = vsel %vm556, %v931, 0
        %934 = vmatpush.msra.mxu0 0.0
        %935 = vmatpush.msra.mxu0 0.0
        %936 = vmatpush.msra.mxu0 0.0
        %937 = vmatpush.msra.mxu0 0.0
        %938 = vmatpush.msra.mxu0 0.0
        %939 = vmatpush.msra.mxu0 0.0
        %940 = vmatpush.msra.mxu0 0.0
        %941 = vmatpush.msra.mxu0 0.0
        %942 = vmatpush.msra.mxu0 0.0
        %943 = vmatpush.msra.mxu0 0.0
        %944 = vmatpush.msra.mxu0 0.0
        %945 = vmatpush.msra.mxu0 0.0
        %946 = vmatpush.msra.mxu0 %v554
        %947 = vmatpush.msra.mxu0 %v553
        %948 = vmatpush.msra.mxu0 %v552
        %949 = vmatpush.msra.mxu0 %v551
        %950 = vmatmul.f32.gmra.mxu0 %v932
        %v951 = vpop.f32.mrf.mxu0
        %v952 = vadd.f32 0.0, %v951
        %953 = vdwg.mxu0
        %v955 = vrot.slane %v952, 2
        %v957 = vadd.f32 %v546, %v955
        %v958 = vmul.f32 %v582, %v885
        %v960 = vrot.slane %v958, 6
        %v962 = vadd.f32 %v957, %v960
        %v963 = vxor.u32 %v962, 2147483648
        %v964 = vmul.f32 %v963, 1.442695
        %v965 = vpow.pop %v964
        %v966 = vadd.f32 %v965, 1.0
        %v967 = vrcp.pop %v966
        %v968 = vmul.f32 %v966, %v967
        %v969 = vsub.f32 1.0, %v968
        %v970 = vmul.f32 %v967, %v969
        %v971 = vadd.f32 %v967, %v970
        %vm972 = vweird.f32 %v966
        %vm973 = vweird.f32 %v967
        %vm974 = vmor %vm972, %vm973
        %v975 = vsel %vm974, %v967, %v971
        %v976 = vand.u32 2147483647, %v966
        %vm977 = vcmp.eq.f32.partialorder %v976, 8.507059e+37
        %v978 = vand.u32 %v966, 2147483648
        %v979 = vor.u32 1.1754944e-38, %v978
        %v980 = vsel %vm977, %v979, %v975
        %v981 = vmul.f32 1.0, %v980
        %982 = vrot.lane.b32.xlu0 %v887, 32
        %v983 = vpop.permute.xlu0 %982
        %v985 = vmul.f32 %v582, %v983
        %v987 = vrot.slane %v985, 2
        %v989 = vadd.f32 %v957, %v987
        %v990 = vxor.u32 %v989, 2147483648
        %v991 = vmul.f32 %v990, 1.442695
        %v992 = vpow.pop %v991
        %v993 = vadd.f32 %v992, 1.0
        %v994 = vrcp.pop %v993
        %v995 = vmul.f32 %v993, %v994
        %v996 = vsub.f32 1.0, %v995
        %v997 = vmul.f32 %v994, %v996
        %v998 = vadd.f32 %v994, %v997
        %vm999 = vweird.f32 %v993
        %vm1000 = vweird.f32 %v994
        %vm1001 = vmor %vm999, %vm1000
        %v1002 = vsel %vm1001, %v994, %v998
        %v1003 = vand.u32 2147483647, %v993
        %vm1004 = vcmp.eq.f32.partialorder %v1003, 8.507059e+37
        %v1005 = vand.u32 %v993, 2147483648
        %v1006 = vor.u32 1.1754944e-38, %v1005
        %v1007 = vsel %vm1004, %v1006, %v1002
        %v1008 = vmul.f32 1.0, %v1007
        %v1009 = vrot.slane %v885, 6
        %v1011 = vmul.f32 %v981, %v1009
        %v1012 = vtanh.pop %v957
        %1014 = vrot.lane.b32.xlu0 %v1012, 96
        %v1015 = vpop.permute.xlu0 %1014
        %v1017 = vmul.f32 %v1008, %v1015
        %1019 = vrot.lane.b32.xlu0 %v1017, 96
        %v1020 = vpop.permute.xlu0 %1019
        %v1022 = vadd.f32 %v1011, %v1020
        %v1024 = vrot.slane %v1022, 6
        %1025 = vrot.lane.b32.xlu0 %v1024, 64
        %v1026 = vpop.permute.xlu0 %1025
        %v1028 = vmul.f32 %v582, %v1026
        %v1030 = vrot.slane %v1028, 2
        %1031 = vrot.lane.b32.xlu0 %v1030, 32
        %v1032 = vpop.permute.xlu0 %1031
        %v1034 = vadd.f32 %v957, %v1032
        %v1035 = vxor.u32 %v1034, 2147483648
        %v1036 = vmul.f32 %v1035, 1.442695
        %v1037 = vpow.pop %v1036
        %v1038 = vadd.f32 %v1037, 1.0
        %v1039 = vrcp.pop %v1038
        %v1040 = vmul.f32 %v1038, %v1039
        %v1041 = vsub.f32 1.0, %v1040
        %v1042 = vmul.f32 %v1039, %v1041
        %v1043 = vadd.f32 %v1039, %v1042
        %vm1044 = vweird.f32 %v1038
        %vm1045 = vweird.f32 %v1039
        %vm1046 = vmor %vm1044, %vm1045
        %v1047 = vsel %vm1046, %v1039, %v1043
        %v1048 = vand.u32 2147483647, %v1038
        %vm1049 = vcmp.eq.f32.partialorder %v1048, 8.507059e+37
        %v1050 = vand.u32 %v1038, 2147483648
        %v1051 = vor.u32 1.1754944e-38, %v1050
        %v1052 = vsel %vm1049, %v1051, %v1047
        %v1053 = vmul.f32 1.0, %v1052
        %v1054 = vtanh.pop %v1022
        %1056 = vrot.lane.b32.xlu0 %v1054, 96
        %v1057 = vpop.permute.xlu0 %1056
        %v1059 = vmul.f32 %v1053, %v1057
        %1061 = vrot.lane.b32.xlu0 %v1059, 32
        %v1062 = vpop.permute.xlu0 %1061
        %vm1064 = vcmask 261126
        %1065 = vst.msk [vmem:[#allocation2] sm:$0xc0] %vm1064, %v1062
        %v1066 = vrot.slane %v1059, 6
        %1067 = vrot.lane.b32.xlu0 %v1066, 32
        %v1068 = vpop.permute.xlu0 %1067
        %v1069 = vsel %vm556, %v1068, 0
        %1071 = vmatpush.msra.mxu0 0.0
        %1072 = vmatpush.msra.mxu0 0.0
        %1073 = vmatpush.msra.mxu0 0.0
        %1074 = vmatpush.msra.mxu0 0.0
        %1075 = vmatpush.msra.mxu0 0.0
        %1076 = vmatpush.msra.mxu0 0.0
        %1077 = vmatpush.msra.mxu0 0.0
        %1078 = vmatpush.msra.mxu0 0.0
        %1079 = vmatpush.msra.mxu0 0.0
        %1080 = vmatpush.msra.mxu0 0.0
        %1081 = vmatpush.msra.mxu0 0.0
        %1082 = vmatpush.msra.mxu0 0.0
        %1083 = vmatpush.msra.mxu0 %v554
        %1084 = vmatpush.msra.mxu0 %v553
        %1085 = vmatpush.msra.mxu0 %v552
        %1086 = vmatpush.msra.mxu0 %v551
        %1087 = vmatmul.f32.gmra.mxu0 %v1069
        %v1088 = vpop.f32.mrf.mxu0
        %v1089 = vadd.f32 0.0, %v1088
        %1090 = vdwg.mxu0
        %v1091 = vadd.f32 %v549, %v1089
        %v1092 = vmul.f32 %v582, %v1022
        %v1094 = vrot.slane %v1092, 6
        %v1096 = vadd.f32 %v1091, %v1094
        %v1097 = vxor.u32 %v1096, 2147483648
        %v1098 = vmul.f32 %v1097, 1.442695
        %v1099 = vpow.pop %v1098
        %v1100 = vadd.f32 %v1099, 1.0
        %v1101 = vrcp.pop %v1100
        %v1102 = vmul.f32 %v1100, %v1101
        %v1103 = vsub.f32 1.0, %v1102
        %v1104 = vmul.f32 %v1101, %v1103
        %v1105 = vadd.f32 %v1101, %v1104
        %vm1106 = vweird.f32 %v1100
        %vm1107 = vweird.f32 %v1101
        %vm1108 = vmor %vm1106, %vm1107
        %v1109 = vsel %vm1108, %v1101, %v1105
        %v1110 = vand.u32 2147483647, %v1100
        %vm1111 = vcmp.eq.f32.partialorder %v1110, 8.507059e+37
        %v1112 = vand.u32 %v1100, 2147483648
        %v1113 = vor.u32 1.1754944e-38, %v1112
        %v1114 = vsel %vm1111, %v1113, %v1109
        %v1115 = vmul.f32 1.0, %v1114
        %1116 = vrot.lane.b32.xlu0 %v1024, 32
        %v1117 = vpop.permute.xlu0 %1116
        %v1119 = vmul.f32 %v582, %v1117
        %v1120 = vadd.f32 %v1091, %v1119
        %v1121 = vxor.u32 %v1120, 2147483648
        %v1122 = vmul.f32 %v1121, 1.442695
        %v1123 = vpow.pop %v1122
        %v1124 = vadd.f32 %v1123, 1.0
        %v1125 = vrcp.pop %v1124
        %v1126 = vmul.f32 %v1124, %v1125
        %v1127 = vsub.f32 1.0, %v1126
        %v1128 = vmul.f32 %v1125, %v1127
        %v1129 = vadd.f32 %v1125, %v1128
        %vm1130 = vweird.f32 %v1124
        %vm1131 = vweird.f32 %v1125
        %vm1132 = vmor %vm1130, %vm1131
        %v1133 = vsel %vm1132, %v1125, %v1129
        %v1134 = vand.u32 2147483647, %v1124
        %vm1135 = vcmp.eq.f32.partialorder %v1134, 8.507059e+37
        %v1136 = vand.u32 %v1124, 2147483648
        %v1137 = vor.u32 1.1754944e-38, %v1136
        %v1138 = vsel %vm1135, %v1137, %v1133
        %v1139 = vmul.f32 1.0, %v1138
        %v1141 = vmul.f32 %v1115, %v1024
        %v1142 = vtanh.pop %v1091
        %1144 = vrot.lane.b32.xlu0 %v1142, 96
        %v1145 = vpop.permute.xlu0 %1144
        %v1147 = vmul.f32 %v1139, %v1145
        %1149 = vrot.lane.b32.xlu0 %v1147, 96
        %v1150 = vpop.permute.xlu0 %1149
        %v1152 = vadd.f32 %v1141, %v1150
        %1154 = vrot.lane.b32.xlu0 %v1152, 64
        %v1155 = vpop.permute.xlu0 %1154
        %v1157 = vmul.f32 %v582, %v1155
        %1159 = vrot.lane.b32.xlu0 %v1157, 32
        %v1160 = vpop.permute.xlu0 %1159
        %v1162 = vadd.f32 %v1091, %v1160
        %v1163 = vxor.u32 %v1162, 2147483648
        %v1164 = vmul.f32 %v1163, 1.442695
        %v1165 = vpow.pop %v1164
        %v1166 = vadd.f32 %v1165, 1.0
        %v1167 = vrcp.pop %v1166
        %v1168 = vmul.f32 %v1166, %v1167
        %v1169 = vsub.f32 1.0, %v1168
        %v1170 = vmul.f32 %v1167, %v1169
        %v1171 = vadd.f32 %v1167, %v1170
        %vm1172 = vweird.f32 %v1166
        %vm1173 = vweird.f32 %v1167
        %vm1174 = vmor %vm1172, %vm1173
        %v1175 = vsel %vm1174, %v1167, %v1171
        %v1176 = vand.u32 2147483647, %v1166
        %vm1177 = vcmp.eq.f32.partialorder %v1176, 8.507059e+37
        %v1178 = vand.u32 %v1166, 2147483648
        %v1179 = vor.u32 1.1754944e-38, %v1178
        %v1180 = vsel %vm1177, %v1179, %v1175
        %v1181 = vmul.f32 1.0, %v1180
        %v1182 = vtanh.pop %v1152
        %1184 = vrot.lane.b32.xlu0 %v1182, 96
        %v1185 = vpop.permute.xlu0 %1184
        %v1187 = vmul.f32 %v1181, %v1185
        %1189 = vrot.lane.b32.xlu0 %v1187, 32
        %v1190 = vpop.permute.xlu0 %1189
        %1192 = vst.msk [vmem:[#allocation2 + $0x8] sm:$0x3] %vm656, %v1190
        %v1193 = vsel %vm556, %v1190, 0
        %1195 = vmatpush.msra.mxu0 0.0
        %1196 = vmatpush.msra.mxu0 0.0
        %1197 = vmatpush.msra.mxu0 0.0
        %1198 = vmatpush.msra.mxu0 0.0
        %1199 = vmatpush.msra.mxu0 0.0
        %1200 = vmatpush.msra.mxu0 0.0
        %1201 = vmatpush.msra.mxu0 0.0
        %1202 = vmatpush.msra.mxu0 0.0
        %1203 = vmatpush.msra.mxu0 0.0
        %1204 = vmatpush.msra.mxu0 0.0
        %1205 = vmatpush.msra.mxu0 0.0
        %1206 = vmatpush.msra.mxu0 0.0
        %1207 = vmatpush.msra.mxu0 %v554
        %1208 = vmatpush.msra.mxu0 %v553
        %1209 = vmatpush.msra.mxu0 %v552
        %1210 = vmatpush.msra.mxu0 %v551
        %1211 = vmatmul.f32.gmra.mxu0 %v1193
        %v1212 = vpop.f32.mrf.mxu0
        %v1213 = vadd.f32 0.0, %v1212
        %1214 = vdwg.mxu0
        %v1216 = vrot.slane %v1213, 6
        %v1218 = vadd.f32 %v549, %v1216
        %v1219 = vmul.f32 %v582, %v1152
        %v1221 = vrot.slane %v1219, 6
        %v1223 = vadd.f32 %v1218, %v1221
        %v1224 = vxor.u32 %v1223, 2147483648
        %v1225 = vmul.f32 %v1224, 1.442695
        %v1226 = vpow.pop %v1225
        %v1227 = vadd.f32 %v1226, 1.0
        %v1228 = vrcp.pop %v1227
        %v1229 = vmul.f32 %v1227, %v1228
        %v1230 = vsub.f32 1.0, %v1229
        %v1231 = vmul.f32 %v1228, %v1230
        %v1232 = vadd.f32 %v1228, %v1231
        %vm1233 = vweird.f32 %v1227
        %vm1234 = vweird.f32 %v1228
        %vm1235 = vmor %vm1233, %vm1234
        %v1236 = vsel %vm1235, %v1228, %v1232
        %v1237 = vand.u32 2147483647, %v1227
        %vm1238 = vcmp.eq.f32.partialorder %v1237, 8.507059e+37
        %v1239 = vand.u32 %v1227, 2147483648
        %v1240 = vor.u32 1.1754944e-38, %v1239
        %v1241 = vsel %vm1238, %v1240, %v1236
        %v1242 = vmul.f32 1.0, %v1241
        %1243 = vrot.lane.b32.xlu0 %v1152, 32
        %v1244 = vpop.permute.xlu0 %1243
        %v1246 = vmul.f32 %v582, %v1244
        %v1248 = vrot.slane %v1246, 6
        %v1250 = vadd.f32 %v1218, %v1248
        %v1251 = vxor.u32 %v1250, 2147483648
        %v1252 = vmul.f32 %v1251, 1.442695
        %v1253 = vpow.pop %v1252
        %v1254 = vadd.f32 %v1253, 1.0
        %v1255 = vrcp.pop %v1254
        %v1256 = vmul.f32 %v1254, %v1255
        %v1257 = vsub.f32 1.0, %v1256
        %v1258 = vmul.f32 %v1255, %v1257
        %v1259 = vadd.f32 %v1255, %v1258
        %vm1260 = vweird.f32 %v1254
        %vm1261 = vweird.f32 %v1255
        %vm1262 = vmor %vm1260, %vm1261
        %v1263 = vsel %vm1262, %v1255, %v1259
        %v1264 = vand.u32 2147483647, %v1254
        %vm1265 = vcmp.eq.f32.partialorder %v1264, 8.507059e+37
        %v1266 = vand.u32 %v1254, 2147483648
        %v1267 = vor.u32 1.1754944e-38, %v1266
        %v1268 = vsel %vm1265, %v1267, %v1263
        %v1269 = vmul.f32 1.0, %v1268
        %v1270 = vrot.slane %v1152, 6
        %v1272 = vmul.f32 %v1242, %v1270
        %v1273 = vtanh.pop %v1218
        %1275 = vrot.lane.b32.xlu0 %v1273, 96
        %v1276 = vpop.permute.xlu0 %1275
        %v1278 = vmul.f32 %v1269, %v1276
        %1280 = vrot.lane.b32.xlu0 %v1278, 96
        %v1281 = vpop.permute.xlu0 %1280
        %v1283 = vadd.f32 %v1272, %v1281
        %v1285 = vrot.slane %v1283, 2
        %1286 = vrot.lane.b32.xlu0 %v1285, 64
        %v1287 = vpop.permute.xlu0 %1286
        %v1289 = vmul.f32 %v582, %v1287
        %v1291 = vrot.slane %v1289, 6
        %1292 = vrot.lane.b32.xlu0 %v1291, 32
        %v1293 = vpop.permute.xlu0 %1292
        %v1295 = vadd.f32 %v1218, %v1293
        %v1296 = vxor.u32 %v1295, 2147483648
        %v1297 = vmul.f32 %v1296, 1.442695
        %v1298 = vpow.pop %v1297
        %v1299 = vadd.f32 %v1298, 1.0
        %v1300 = vrcp.pop %v1299
        %v1301 = vmul.f32 %v1299, %v1300
        %v1302 = vsub.f32 1.0, %v1301
        %v1303 = vmul.f32 %v1300, %v1302
        %v1304 = vadd.f32 %v1300, %v1303
        %vm1305 = vweird.f32 %v1299
        %vm1306 = vweird.f32 %v1300
        %vm1307 = vmor %vm1305, %vm1306
        %v1308 = vsel %vm1307, %v1300, %v1304
        %v1309 = vand.u32 2147483647, %v1299
        %vm1310 = vcmp.eq.f32.partialorder %v1309, 8.507059e+37
        %v1311 = vand.u32 %v1299, 2147483648
        %v1312 = vor.u32 1.1754944e-38, %v1311
        %v1313 = vsel %vm1310, %v1312, %v1308
        %v1314 = vmul.f32 1.0, %v1313
        %v1315 = vtanh.pop %v1283
        %1317 = vrot.lane.b32.xlu0 %v1315, 96
        %v1318 = vpop.permute.xlu0 %1317
        %v1320 = vmul.f32 %v1314, %v1318
        %1322 = vrot.lane.b32.xlu0 %v1320, 32
        %v1323 = vpop.permute.xlu0 %1322
        %1325 = vst.msk [vmem:[#allocation2 + $0x8] sm:$0xc] %vm790, %v1323
        %v1326 = vrot.slane %v1320, 2
        %1327 = vrot.lane.b32.xlu0 %v1326, 32
        %v1328 = vpop.permute.xlu0 %1327
        %v1329 = vsel %vm556, %v1328, 0
        %1331 = vmatpush.msra.mxu0 0.0
        %1332 = vmatpush.msra.mxu0 0.0
        %1333 = vmatpush.msra.mxu0 0.0
        %1334 = vmatpush.msra.mxu0 0.0
        %1335 = vmatpush.msra.mxu0 0.0
        %1336 = vmatpush.msra.mxu0 0.0
        %1337 = vmatpush.msra.mxu0 0.0
        %1338 = vmatpush.msra.mxu0 0.0
        %1339 = vmatpush.msra.mxu0 0.0
        %1340 = vmatpush.msra.mxu0 0.0
        %1341 = vmatpush.msra.mxu0 0.0
        %1342 = vmatpush.msra.mxu0 0.0
        %1343 = vmatpush.msra.mxu0 %v554
        %1344 = vmatpush.msra.mxu0 %v553
        %1345 = vmatpush.msra.mxu0 %v552
        %1346 = vmatpush.msra.mxu0 %v551
        %1347 = vmatmul.f32.gmra.mxu0 %v1329
        %v1348 = vpop.f32.mrf.mxu0
        %v1349 = vadd.f32 0.0, %v1348
        %1350 = vdwg.mxu0
        %v1352 = vrot.slane %v1349, 4
        %v1354 = vadd.f32 %v549, %v1352
        %v1355 = vmul.f32 %v582, %v1283
        %v1357 = vrot.slane %v1355, 6
        %v1359 = vadd.f32 %v1354, %v1357
        %v1360 = vxor.u32 %v1359, 2147483648
        %v1361 = vmul.f32 %v1360, 1.442695
        %v1362 = vpow.pop %v1361
        %v1363 = vadd.f32 %v1362, 1.0
        %v1364 = vrcp.pop %v1363
        %v1365 = vmul.f32 %v1363, %v1364
        %v1366 = vsub.f32 1.0, %v1365
        %v1367 = vmul.f32 %v1364, %v1366
        %v1368 = vadd.f32 %v1364, %v1367
        %vm1369 = vweird.f32 %v1363
        %vm1370 = vweird.f32 %v1364
        %vm1371 = vmor %vm1369, %vm1370
        %v1372 = vsel %vm1371, %v1364, %v1368
        %v1373 = vand.u32 2147483647, %v1363
        %vm1374 = vcmp.eq.f32.partialorder %v1373, 8.507059e+37
        %v1375 = vand.u32 %v1363, 2147483648
        %v1376 = vor.u32 1.1754944e-38, %v1375
        %v1377 = vsel %vm1374, %v1376, %v1372
        %v1378 = vmul.f32 1.0, %v1377
        %1379 = vrot.lane.b32.xlu0 %v1285, 32
        %v1380 = vpop.permute.xlu0 %1379
        %v1382 = vmul.f32 %v582, %v1380
        %v1384 = vrot.slane %v1382, 4
        %v1386 = vadd.f32 %v1354, %v1384
        %v1387 = vxor.u32 %v1386, 2147483648
        %v1388 = vmul.f32 %v1387, 1.442695
        %v1389 = vpow.pop %v1388
        %v1390 = vadd.f32 %v1389, 1.0
        %v1391 = vrcp.pop %v1390
        %v1392 = vmul.f32 %v1390, %v1391
        %v1393 = vsub.f32 1.0, %v1392
        %v1394 = vmul.f32 %v1391, %v1393
        %v1395 = vadd.f32 %v1391, %v1394
        %vm1396 = vweird.f32 %v1390
        %vm1397 = vweird.f32 %v1391
        %vm1398 = vmor %vm1396, %vm1397
        %v1399 = vsel %vm1398, %v1391, %v1395
        %v1400 = vand.u32 2147483647, %v1390
        %vm1401 = vcmp.eq.f32.partialorder %v1400, 8.507059e+37
        %v1402 = vand.u32 %v1390, 2147483648
        %v1403 = vor.u32 1.1754944e-38, %v1402
        %v1404 = vsel %vm1401, %v1403, %v1399
        %v1405 = vmul.f32 1.0, %v1404
        %v1406 = vrot.slane %v1283, 6
        %v1408 = vmul.f32 %v1378, %v1406
        %v1409 = vtanh.pop %v1354
        %1411 = vrot.lane.b32.xlu0 %v1409, 96
        %v1412 = vpop.permute.xlu0 %1411
        %v1414 = vmul.f32 %v1405, %v1412
        %1416 = vrot.lane.b32.xlu0 %v1414, 96
        %v1417 = vpop.permute.xlu0 %1416
        %v1419 = vadd.f32 %v1408, %v1417
        %v1421 = vrot.slane %v1419, 4
        %1422 = vrot.lane.b32.xlu0 %v1421, 64
        %v1423 = vpop.permute.xlu0 %1422
        %v1425 = vmul.f32 %v582, %v1423
        %v1427 = vrot.slane %v1425, 4
        %1428 = vrot.lane.b32.xlu0 %v1427, 32
        %v1429 = vpop.permute.xlu0 %1428
        %v1431 = vadd.f32 %v1354, %v1429
        %v1432 = vxor.u32 %v1431, 2147483648
        %v1433 = vmul.f32 %v1432, 1.442695
        %v1434 = vpow.pop %v1433
        %v1435 = vadd.f32 %v1434, 1.0
        %v1436 = vrcp.pop %v1435
        %v1437 = vmul.f32 %v1435, %v1436
        %v1438 = vsub.f32 1.0, %v1437
        %v1439 = vmul.f32 %v1436, %v1438
        %v1440 = vadd.f32 %v1436, %v1439
        %vm1441 = vweird.f32 %v1435
        %vm1442 = vweird.f32 %v1436
        %vm1443 = vmor %vm1441, %vm1442
        %v1444 = vsel %vm1443, %v1436, %v1440
        %v1445 = vand.u32 2147483647, %v1435
        %vm1446 = vcmp.eq.f32.partialorder %v1445, 8.507059e+37
        %v1447 = vand.u32 %v1435, 2147483648
        %v1448 = vor.u32 1.1754944e-38, %v1447
        %v1449 = vsel %vm1446, %v1448, %v1444
        %v1450 = vmul.f32 1.0, %v1449
        %v1451 = vtanh.pop %v1419
        %1453 = vrot.lane.b32.xlu0 %v1451, 96
        %v1454 = vpop.permute.xlu0 %1453
        %v1456 = vmul.f32 %v1450, %v1454
        %1458 = vrot.lane.b32.xlu0 %v1456, 32
        %v1459 = vpop.permute.xlu0 %1458
        %1461 = vst.msk [vmem:[#allocation2 + $0x8] sm:$0x30] %vm927, %v1459
        %v1462 = vrot.slane %v1456, 4
        %1463 = vrot.lane.b32.xlu0 %v1462, 32
        %v1464 = vpop.permute.xlu0 %1463
        %v1465 = vsel %vm556, %v1464, 0
        %1467 = vmatpush.msra.mxu0 0.0
        %1468 = vmatpush.msra.mxu0 0.0
        %1469 = vmatpush.msra.mxu0 0.0
        %1470 = vmatpush.msra.mxu0 0.0
        %1471 = vmatpush.msra.mxu0 0.0
        %1472 = vmatpush.msra.mxu0 0.0
        %1473 = vmatpush.msra.mxu0 0.0
        %1474 = vmatpush.msra.mxu0 0.0
        %1475 = vmatpush.msra.mxu0 0.0
        %1476 = vmatpush.msra.mxu0 0.0
        %1477 = vmatpush.msra.mxu0 0.0
        %1478 = vmatpush.msra.mxu0 0.0
        %1479 = vmatpush.msra.mxu0 %v554
        %1480 = vmatpush.msra.mxu0 %v553
        %1481 = vmatpush.msra.mxu0 %v552
        %1482 = vmatpush.msra.mxu0 %v551
        %1483 = vmatmul.f32.gmra.mxu0 %v1465
        %v1484 = vpop.f32.mrf.mxu0
        %v1485 = vadd.f32 0.0, %v1484
        %1486 = vdwg.mxu0
        %v1488 = vrot.slane %v1485, 2
        %v1490 = vadd.f32 %v549, %v1488
        %v1491 = vmul.f32 %v582, %v1419
        %v1493 = vrot.slane %v1491, 6
        %v1495 = vadd.f32 %v1490, %v1493
        %v1496 = vxor.u32 %v1495, 2147483648
        %v1497 = vmul.f32 %v1496, 1.442695
        %v1498 = vpow.pop %v1497
        %v1499 = vadd.f32 %v1498, 1.0
        %v1500 = vrcp.pop %v1499
        %v1501 = vmul.f32 %v1499, %v1500
        %v1502 = vsub.f32 1.0, %v1501
        %v1503 = vmul.f32 %v1500, %v1502
        %v1504 = vadd.f32 %v1500, %v1503
        %vm1505 = vweird.f32 %v1499
        %vm1506 = vweird.f32 %v1500
        %vm1507 = vmor %vm1505, %vm1506
        %v1508 = vsel %vm1507, %v1500, %v1504
        %v1509 = vand.u32 2147483647, %v1499
        %vm1510 = vcmp.eq.f32.partialorder %v1509, 8.507059e+37
        %v1511 = vand.u32 %v1499, 2147483648
        %v1512 = vor.u32 1.1754944e-38, %v1511
        %v1513 = vsel %vm1510, %v1512, %v1508
        %v1514 = vmul.f32 1.0, %v1513
        %1515 = vrot.lane.b32.xlu0 %v1421, 32
        %v1516 = vpop.permute.xlu0 %1515
        %v1518 = vmul.f32 %v582, %v1516
        %v1520 = vrot.slane %v1518, 2
        %v1522 = vadd.f32 %v1490, %v1520
        %v1523 = vxor.u32 %v1522, 2147483648
        %v1524 = vmul.f32 %v1523, 1.442695
        %v1525 = vpow.pop %v1524
        %v1526 = vadd.f32 %v1525, 1.0
        %v1527 = vrcp.pop %v1526
        %v1528 = vmul.f32 %v1526, %v1527
        %v1529 = vsub.f32 1.0, %v1528
        %v1530 = vmul.f32 %v1527, %v1529
        %v1531 = vadd.f32 %v1527, %v1530
        %vm1532 = vweird.f32 %v1526
        %vm1533 = vweird.f32 %v1527
        %vm1534 = vmor %vm1532, %vm1533
        %v1535 = vsel %vm1534, %v1527, %v1531
        %v1536 = vand.u32 2147483647, %v1526
        %vm1537 = vcmp.eq.f32.partialorder %v1536, 8.507059e+37
        %v1538 = vand.u32 %v1526, 2147483648
        %v1539 = vor.u32 1.1754944e-38, %v1538
        %v1540 = vsel %vm1537, %v1539, %v1535
        %v1541 = vmul.f32 1.0, %v1540
        %v1542 = vrot.slane %v1419, 6
        %v1544 = vmul.f32 %v1514, %v1542
        %v1545 = vtanh.pop %v1490
        %1547 = vrot.lane.b32.xlu0 %v1545, 96
        %v1548 = vpop.permute.xlu0 %1547
        %v1550 = vmul.f32 %v1541, %v1548
        %1552 = vrot.lane.b32.xlu0 %v1550, 96
        %v1553 = vpop.permute.xlu0 %1552
        %v1555 = vadd.f32 %v1544, %v1553
        %v1557 = vrot.slane %v1555, 6
        %1558 = vrot.lane.b32.xlu0 %v1557, 64
        %v1559 = vpop.permute.xlu0 %1558
        %v1561 = vmul.f32 %v582, %v1559
        %v1563 = vrot.slane %v1561, 2
        %1564 = vrot.lane.b32.xlu0 %v1563, 32
        %v1565 = vpop.permute.xlu0 %1564
        %v1567 = vadd.f32 %v1490, %v1565
        %v1568 = vxor.u32 %v1567, 2147483648
        %v1569 = vmul.f32 %v1568, 1.442695
        %v1570 = vpow.pop %v1569
        %v1571 = vadd.f32 %v1570, 1.0
        %v1572 = vrcp.pop %v1571
        %v1573 = vmul.f32 %v1571, %v1572
        %v1574 = vsub.f32 1.0, %v1573
        %v1575 = vmul.f32 %v1572, %v1574
        %v1576 = vadd.f32 %v1572, %v1575
        %vm1577 = vweird.f32 %v1571
        %vm1578 = vweird.f32 %v1572
        %vm1579 = vmor %vm1577, %vm1578
        %v1580 = vsel %vm1579, %v1572, %v1576
        %v1581 = vand.u32 2147483647, %v1571
        %vm1582 = vcmp.eq.f32.partialorder %v1581, 8.507059e+37
        %v1583 = vand.u32 %v1571, 2147483648
        %v1584 = vor.u32 1.1754944e-38, %v1583
        %v1585 = vsel %vm1582, %v1584, %v1580
        %v1586 = vmul.f32 1.0, %v1585
        %v1587 = vtanh.pop %v1555
        %1589 = vrot.lane.b32.xlu0 %v1587, 96
        %v1590 = vpop.permute.xlu0 %1589
        %v1592 = vmul.f32 %v1586, %v1590
        %1594 = vrot.lane.b32.xlu0 %v1592, 32
        %v1595 = vpop.permute.xlu0 %1594
        %1597 = vst.msk [vmem:[#allocation2 + $0x8] sm:$0xc0] %vm1064, %v1595
        %v1598 = vld [vmem:[#allocation2] sm:$0xff]
        %v1599 = vld [vmem:[#allocation2 + $0x8] sm:$0xff]
        %v1600 = vld [vmem:[%s402] sm:$0xff]
        %v1601 = vld [vmem:[%s402 + $0x8] sm:$0xff]
        %v1602 = vld [vmem:[%s402 + $0x10] sm:$0xff]
        %v1603 = vld [vmem:[%s402 + $0x18] sm:$0xff]
        %v1604 = vld [vmem:[%s501] sm:$0x1]
        %v1606 = vperm.slane %v1604, 0
        %v1609 = vsel %vm556, %v1598, 0
        %v1612 = vsel %vm556, %v1599, 0
        %1614 = vmatpush.msra.mxu0 0.0
        %1615 = vmatpush.msra.mxu0 0.0
        %1616 = vmatpush.msra.mxu0 0.0
        %1617 = vmatpush.msra.mxu0 0.0
        %1618 = vmatpush.msra.mxu0 0.0
        %1619 = vmatpush.msra.mxu0 0.0
        %1620 = vmatpush.msra.mxu0 0.0
        %1621 = vmatpush.msra.mxu0 0.0
        %1622 = vmatpush.msra.mxu0 0.0
        %1623 = vmatpush.msra.mxu0 0.0
        %1624 = vmatpush.msra.mxu0 0.0
        %1625 = vmatpush.msra.mxu0 0.0
        %1626 = vmatpush.msra.mxu0 %v1603
        %1627 = vmatpush.msra.mxu0 %v1602
        %1628 = vmatpush.msra.mxu0 %v1601
        %1629 = vmatpush.msra.mxu0 %v1600
        %1630 = vmatmul.f32.gmra.mxu0 %v1609
        %v1631 = vpop.f32.mrf.mxu0
        %v1632 = vadd.f32 %v1606, %v1631
        %1633 = vmatmul.f32.gmra.mxu0 %v1612
        %v1634 = vpop.f32.mrf.mxu0
        %v1635 = vadd.f32 %v1606, %v1634
        %1636 = vdwg.mxu0
        %v1637 = vld [vmem:[%s412] sm:$0xff]
        %v1638 = vld [vmem:[%s412 + $0x8] sm:$0xff]
        %v1639 = vld [vmem:[%s412 + $0x10] sm:$0xff]
        %v1640 = vld [vmem:[%s412 + $0x18] sm:$0xff]
        %v1641 = vld [vmem:[%s504] sm:$0x1]
        %1642 = vmatpush.msra.mxu0 0.0
        %1643 = vmatpush.msra.mxu0 0.0
        %1644 = vmatpush.msra.mxu0 0.0
        %1645 = vmatpush.msra.mxu0 0.0
        %1646 = vmatpush.msra.mxu0 0.0
        %1647 = vmatpush.msra.mxu0 0.0
        %1648 = vmatpush.msra.mxu0 0.0
        %1649 = vmatpush.msra.mxu0 0.0
        %1650 = vmatpush.msra.mxu0 0.0
        %1651 = vmatpush.msra.mxu0 0.0
        %1652 = vmatpush.msra.mxu0 0.0
        %1653 = vmatpush.msra.mxu0 0.0
        %1654 = vmatpush.msra.mxu0 %v1640
        %1655 = vmatpush.msra.mxu0 %v1639
        %1656 = vmatpush.msra.mxu0 %v1638
        %1657 = vmatpush.msra.mxu0 %v1637
        %1658 = vmatmul.f32.gmra.mxu0 %v558
        %v1659 = vpop.f32.mrf.mxu0
        %v1660 = vadd.f32 0.0, %v1659
        %1661 = vdwg.mxu0
        %v1662 = vadd.f32 %v1632, %v1660
        %v1664 = vperm.slane %v1641, 0
        %v1666 = vmul.f32 %v1664, 0.0
        %v1667 = vadd.f32 %v1662, %v1666
        %v1668 = vxor.u32 %v1667, 2147483648
        %v1669 = vmul.f32 %v1668, 1.442695
        %v1670 = vpow.pop %v1669
        %v1671 = vadd.f32 %v1670, 1.0
        %v1672 = vrcp.pop %v1671
        %v1673 = vmul.f32 %v1671, %v1672
        %v1674 = vsub.f32 1.0, %v1673
        %v1675 = vmul.f32 %v1672, %v1674
        %v1676 = vadd.f32 %v1672, %v1675
        %vm1677 = vweird.f32 %v1671
        %vm1678 = vweird.f32 %v1672
        %vm1679 = vmor %vm1677, %vm1678
        %v1680 = vsel %vm1679, %v1672, %v1676
        %v1681 = vand.u32 2147483647, %v1671
        %vm1682 = vcmp.eq.f32.partialorder %v1681, 8.507059e+37
        %v1683 = vand.u32 %v1671, 2147483648
        %v1684 = vor.u32 1.1754944e-38, %v1683
        %v1685 = vsel %vm1682, %v1684, %v1680
        %v1686 = vmul.f32 1.0, %v1685
        %v1687 = vmul.f32 %v1686, 0.0
        %v1688 = vtanh.pop %v1662
        %1690 = vrot.lane.b32.xlu0 %v1688, 96
        %v1691 = vpop.permute.xlu0 %1690
        %v1693 = vmul.f32 %v1686, %v1691
        %1695 = vrot.lane.b32.xlu0 %v1693, 96
        %v1696 = vpop.permute.xlu0 %1695
        %v1698 = vadd.f32 %v1687, %v1696
        %1700 = vrot.lane.b32.xlu0 %v1698, 64
        %v1701 = vpop.permute.xlu0 %1700
        %v1703 = vmul.f32 %v1664, %v1701
        %1705 = vrot.lane.b32.xlu0 %v1703, 32
        %v1706 = vpop.permute.xlu0 %1705
        %v1708 = vadd.f32 %v1662, %v1706
        %v1709 = vxor.u32 %v1708, 2147483648
        %v1710 = vmul.f32 %v1709, 1.442695
        %v1711 = vpow.pop %v1710
        %v1712 = vadd.f32 %v1711, 1.0
        %v1713 = vrcp.pop %v1712
        %v1714 = vmul.f32 %v1712, %v1713
        %v1715 = vsub.f32 1.0, %v1714
        %v1716 = vmul.f32 %v1713, %v1715
        %v1717 = vadd.f32 %v1713, %v1716
        %vm1718 = vweird.f32 %v1712
        %vm1719 = vweird.f32 %v1713
        %vm1720 = vmor %vm1718, %vm1719
        %v1721 = vsel %vm1720, %v1713, %v1717
        %v1722 = vand.u32 2147483647, %v1712
        %vm1723 = vcmp.eq.f32.partialorder %v1722, 8.507059e+37
        %v1724 = vand.u32 %v1712, 2147483648
        %v1725 = vor.u32 1.1754944e-38, %v1724
        %v1726 = vsel %vm1723, %v1725, %v1721
        %v1727 = vmul.f32 1.0, %v1726
        %v1728 = vtanh.pop %v1698
        %1730 = vrot.lane.b32.xlu0 %v1728, 96
        %v1731 = vpop.permute.xlu0 %1730
        %v1733 = vmul.f32 %v1727, %v1731
        %1735 = vrot.lane.b32.xlu0 %v1733, 32
        %v1736 = vpop.permute.xlu0 %1735
        %1738 = vst.msk [vmem:[%s509] sm:$0x3] %vm656, %v1736
        %v1739 = vsel %vm556, %v1736, 0
        %1741 = vmatpush.msra.mxu0 0.0
        %1742 = vmatpush.msra.mxu0 0.0
        %1743 = vmatpush.msra.mxu0 0.0
        %1744 = vmatpush.msra.mxu0 0.0
        %1745 = vmatpush.msra.mxu0 0.0
        %1746 = vmatpush.msra.mxu0 0.0
        %1747 = vmatpush.msra.mxu0 0.0
        %1748 = vmatpush.msra.mxu0 0.0
        %1749 = vmatpush.msra.mxu0 0.0
        %1750 = vmatpush.msra.mxu0 0.0
        %1751 = vmatpush.msra.mxu0 0.0
        %1752 = vmatpush.msra.mxu0 0.0
        %1753 = vmatpush.msra.mxu0 %v1640
        %1754 = vmatpush.msra.mxu0 %v1639
        %1755 = vmatpush.msra.mxu0 %v1638
        %1756 = vmatpush.msra.mxu0 %v1637
        %1757 = vmatmul.f32.gmra.mxu0 %v1739
        %v1758 = vpop.f32.mrf.mxu0
        %v1759 = vadd.f32 0.0, %v1758
        %1760 = vdwg.mxu0
        %v1762 = vrot.slane %v1759, 6
        %v1764 = vadd.f32 %v1632, %v1762
        %v1765 = vmul.f32 %v1664, %v1698
        %v1767 = vrot.slane %v1765, 6
        %v1769 = vadd.f32 %v1764, %v1767
        %v1770 = vxor.u32 %v1769, 2147483648
        %v1771 = vmul.f32 %v1770, 1.442695
        %v1772 = vpow.pop %v1771
        %v1773 = vadd.f32 %v1772, 1.0
        %v1774 = vrcp.pop %v1773
        %v1775 = vmul.f32 %v1773, %v1774
        %v1776 = vsub.f32 1.0, %v1775
        %v1777 = vmul.f32 %v1774, %v1776
        %v1778 = vadd.f32 %v1774, %v1777
        %vm1779 = vweird.f32 %v1773
        %vm1780 = vweird.f32 %v1774
        %vm1781 = vmor %vm1779, %vm1780
        %v1782 = vsel %vm1781, %v1774, %v1778
        %v1783 = vand.u32 2147483647, %v1773
        %vm1784 = vcmp.eq.f32.partialorder %v1783, 8.507059e+37
        %v1785 = vand.u32 %v1773, 2147483648
        %v1786 = vor.u32 1.1754944e-38, %v1785
        %v1787 = vsel %vm1784, %v1786, %v1782
        %v1788 = vmul.f32 1.0, %v1787
        %1789 = vrot.lane.b32.xlu0 %v1698, 32
        %v1790 = vpop.permute.xlu0 %1789
        %v1792 = vmul.f32 %v1664, %v1790
        %v1794 = vrot.slane %v1792, 6
        %v1796 = vadd.f32 %v1764, %v1794
        %v1797 = vxor.u32 %v1796, 2147483648
        %v1798 = vmul.f32 %v1797, 1.442695
        %v1799 = vpow.pop %v1798
        %v1800 = vadd.f32 %v1799, 1.0
        %v1801 = vrcp.pop %v1800
        %v1802 = vmul.f32 %v1800, %v1801
        %v1803 = vsub.f32 1.0, %v1802
        %v1804 = vmul.f32 %v1801, %v1803
        %v1805 = vadd.f32 %v1801, %v1804
        %vm1806 = vweird.f32 %v1800
        %vm1807 = vweird.f32 %v1801
        %vm1808 = vmor %vm1806, %vm1807
        %v1809 = vsel %vm1808, %v1801, %v1805
        %v1810 = vand.u32 2147483647, %v1800
        %vm1811 = vcmp.eq.f32.partialorder %v1810, 8.507059e+37
        %v1812 = vand.u32 %v1800, 2147483648
        %v1813 = vor.u32 1.1754944e-38, %v1812
        %v1814 = vsel %vm1811, %v1813, %v1809
        %v1815 = vmul.f32 1.0, %v1814
        %v1816 = vrot.slane %v1698, 6
        %v1818 = vmul.f32 %v1788, %v1816
        %v1819 = vtanh.pop %v1764
        %1821 = vrot.lane.b32.xlu0 %v1819, 96
        %v1822 = vpop.permute.xlu0 %1821
        %v1824 = vmul.f32 %v1815, %v1822
        %1826 = vrot.lane.b32.xlu0 %v1824, 96
        %v1827 = vpop.permute.xlu0 %1826
        %v1829 = vadd.f32 %v1818, %v1827
        %v1831 = vrot.slane %v1829, 2
        %1832 = vrot.lane.b32.xlu0 %v1831, 64
        %v1833 = vpop.permute.xlu0 %1832
        %v1835 = vmul.f32 %v1664, %v1833
        %v1837 = vrot.slane %v1835, 6
        %1838 = vrot.lane.b32.xlu0 %v1837, 32
        %v1839 = vpop.permute.xlu0 %1838
        %v1841 = vadd.f32 %v1764, %v1839
        %v1842 = vxor.u32 %v1841, 2147483648
        %v1843 = vmul.f32 %v1842, 1.442695
        %v1844 = vpow.pop %v1843
        %v1845 = vadd.f32 %v1844, 1.0
        %v1846 = vrcp.pop %v1845
        %v1847 = vmul.f32 %v1845, %v1846
        %v1848 = vsub.f32 1.0, %v1847
        %v1849 = vmul.f32 %v1846, %v1848
        %v1850 = vadd.f32 %v1846, %v1849
        %vm1851 = vweird.f32 %v1845
        %vm1852 = vweird.f32 %v1846
        %vm1853 = vmor %vm1851, %vm1852
        %v1854 = vsel %vm1853, %v1846, %v1850
        %v1855 = vand.u32 2147483647, %v1845
        %vm1856 = vcmp.eq.f32.partialorder %v1855, 8.507059e+37
        %v1857 = vand.u32 %v1845, 2147483648
        %v1858 = vor.u32 1.1754944e-38, %v1857
        %v1859 = vsel %vm1856, %v1858, %v1854
        %v1860 = vmul.f32 1.0, %v1859
        %v1861 = vtanh.pop %v1829
        %1863 = vrot.lane.b32.xlu0 %v1861, 96
        %v1864 = vpop.permute.xlu0 %1863
        %v1866 = vmul.f32 %v1860, %v1864
        %1868 = vrot.lane.b32.xlu0 %v1866, 32
        %v1869 = vpop.permute.xlu0 %1868
        %1871 = vst.msk [vmem:[%s509] sm:$0xc] %vm790, %v1869
        %v1872 = vrot.slane %v1866, 2
        %1873 = vrot.lane.b32.xlu0 %v1872, 32
        %v1874 = vpop.permute.xlu0 %1873
        %v1875 = vsel %vm556, %v1874, 0
        %1877 = vmatpush.msra.mxu0 0.0
        %1878 = vmatpush.msra.mxu0 0.0
        %1879 = vmatpush.msra.mxu0 0.0
        %1880 = vmatpush.msra.mxu0 0.0
        %1881 = vmatpush.msra.mxu0 0.0
        %1882 = vmatpush.msra.mxu0 0.0
        %1883 = vmatpush.msra.mxu0 0.0
        %1884 = vmatpush.msra.mxu0 0.0
        %1885 = vmatpush.msra.mxu0 0.0
        %1886 = vmatpush.msra.mxu0 0.0
        %1887 = vmatpush.msra.mxu0 0.0
        %1888 = vmatpush.msra.mxu0 0.0
        %1889 = vmatpush.msra.mxu0 %v1640
        %1890 = vmatpush.msra.mxu0 %v1639
        %1891 = vmatpush.msra.mxu0 %v1638
        %1892 = vmatpush.msra.mxu0 %v1637
        %1893 = vmatmul.f32.gmra.mxu0 %v1875
        %v1894 = vpop.f32.mrf.mxu0
        %v1895 = vadd.f32 0.0, %v1894
        %1896 = vdwg.mxu0
        %v1898 = vrot.slane %v1895, 4
        %v1900 = vadd.f32 %v1632, %v1898
        %v1901 = vmul.f32 %v1664, %v1829
        %v1903 = vrot.slane %v1901, 6
        %v1905 = vadd.f32 %v1900, %v1903
        %v1906 = vxor.u32 %v1905, 2147483648
        %v1907 = vmul.f32 %v1906, 1.442695
        %v1908 = vpow.pop %v1907
        %v1909 = vadd.f32 %v1908, 1.0
        %v1910 = vrcp.pop %v1909
        %v1911 = vmul.f32 %v1909, %v1910
        %v1912 = vsub.f32 1.0, %v1911
        %v1913 = vmul.f32 %v1910, %v1912
        %v1914 = vadd.f32 %v1910, %v1913
        %vm1915 = vweird.f32 %v1909
        %vm1916 = vweird.f32 %v1910
        %vm1917 = vmor %vm1915, %vm1916
        %v1918 = vsel %vm1917, %v1910, %v1914
        %v1919 = vand.u32 2147483647, %v1909
        %vm1920 = vcmp.eq.f32.partialorder %v1919, 8.507059e+37
        %v1921 = vand.u32 %v1909, 2147483648
        %v1922 = vor.u32 1.1754944e-38, %v1921
        %v1923 = vsel %vm1920, %v1922, %v1918
        %v1924 = vmul.f32 1.0, %v1923
        %1925 = vrot.lane.b32.xlu0 %v1831, 32
        %v1926 = vpop.permute.xlu0 %1925
        %v1928 = vmul.f32 %v1664, %v1926
        %v1930 = vrot.slane %v1928, 4
        %v1932 = vadd.f32 %v1900, %v1930
        %v1933 = vxor.u32 %v1932, 2147483648
        %v1934 = vmul.f32 %v1933, 1.442695
        %v1935 = vpow.pop %v1934
        %v1936 = vadd.f32 %v1935, 1.0
        %v1937 = vrcp.pop %v1936
        %v1938 = vmul.f32 %v1936, %v1937
        %v1939 = vsub.f32 1.0, %v1938
        %v1940 = vmul.f32 %v1937, %v1939
        %v1941 = vadd.f32 %v1937, %v1940
        %vm1942 = vweird.f32 %v1936
        %vm1943 = vweird.f32 %v1937
        %vm1944 = vmor %vm1942, %vm1943
        %v1945 = vsel %vm1944, %v1937, %v1941
        %v1946 = vand.u32 2147483647, %v1936
        %vm1947 = vcmp.eq.f32.partialorder %v1946, 8.507059e+37
        %v1948 = vand.u32 %v1936, 2147483648
        %v1949 = vor.u32 1.1754944e-38, %v1948
        %v1950 = vsel %vm1947, %v1949, %v1945
        %v1951 = vmul.f32 1.0, %v1950
        %v1952 = vrot.slane %v1829, 6
        %v1954 = vmul.f32 %v1924, %v1952
        %v1955 = vtanh.pop %v1900
        %1957 = vrot.lane.b32.xlu0 %v1955, 96
        %v1958 = vpop.permute.xlu0 %1957
        %v1960 = vmul.f32 %v1951, %v1958
        %1962 = vrot.lane.b32.xlu0 %v1960, 96
        %v1963 = vpop.permute.xlu0 %1962
        %v1965 = vadd.f32 %v1954, %v1963
        %v1967 = vrot.slane %v1965, 4
        %1968 = vrot.lane.b32.xlu0 %v1967, 64
        %v1969 = vpop.permute.xlu0 %1968
        %v1971 = vmul.f32 %v1664, %v1969
        %v1973 = vrot.slane %v1971, 4
        %1974 = vrot.lane.b32.xlu0 %v1973, 32
        %v1975 = vpop.permute.xlu0 %1974
        %v1977 = vadd.f32 %v1900, %v1975
        %v1978 = vxor.u32 %v1977, 2147483648
        %v1979 = vmul.f32 %v1978, 1.442695
        %v1980 = vpow.pop %v1979
        %v1981 = vadd.f32 %v1980, 1.0
        %v1982 = vrcp.pop %v1981
        %v1983 = vmul.f32 %v1981, %v1982
        %v1984 = vsub.f32 1.0, %v1983
        %v1985 = vmul.f32 %v1982, %v1984
        %v1986 = vadd.f32 %v1982, %v1985
        %vm1987 = vweird.f32 %v1981
        %vm1988 = vweird.f32 %v1982
        %vm1989 = vmor %vm1987, %vm1988
        %v1990 = vsel %vm1989, %v1982, %v1986
        %v1991 = vand.u32 2147483647, %v1981
        %vm1992 = vcmp.eq.f32.partialorder %v1991, 8.507059e+37
        %v1993 = vand.u32 %v1981, 2147483648
        %v1994 = vor.u32 1.1754944e-38, %v1993
        %v1995 = vsel %vm1992, %v1994, %v1990
        %v1996 = vmul.f32 1.0, %v1995
        %v1997 = vtanh.pop %v1965
        %1999 = vrot.lane.b32.xlu0 %v1997, 96
        %v2000 = vpop.permute.xlu0 %1999
        %v2002 = vmul.f32 %v1996, %v2000
        %2004 = vrot.lane.b32.xlu0 %v2002, 32
        %v2005 = vpop.permute.xlu0 %2004
        %2007 = vst.msk [vmem:[%s509] sm:$0x30] %vm927, %v2005
        %v2008 = vrot.slane %v2002, 4
        %2009 = vrot.lane.b32.xlu0 %v2008, 32
        %v2010 = vpop.permute.xlu0 %2009
        %v2011 = vsel %vm556, %v2010, 0
        %2013 = vmatpush.msra.mxu0 0.0
        %2014 = vmatpush.msra.mxu0 0.0
        %2015 = vmatpush.msra.mxu0 0.0
        %2016 = vmatpush.msra.mxu0 0.0
        %2017 = vmatpush.msra.mxu0 0.0
        %2018 = vmatpush.msra.mxu0 0.0
        %2019 = vmatpush.msra.mxu0 0.0
        %2020 = vmatpush.msra.mxu0 0.0
        %2021 = vmatpush.msra.mxu0 0.0
        %2022 = vmatpush.msra.mxu0 0.0
        %2023 = vmatpush.msra.mxu0 0.0
        %2024 = vmatpush.msra.mxu0 0.0
        %2025 = vmatpush.msra.mxu0 %v1640
        %2026 = vmatpush.msra.mxu0 %v1639
        %2027 = vmatpush.msra.mxu0 %v1638
        %2028 = vmatpush.msra.mxu0 %v1637
        %2029 = vmatmul.f32.gmra.mxu0 %v2011
        %v2030 = vpop.f32.mrf.mxu0
        %v2031 = vadd.f32 0.0, %v2030
        %2032 = vdwg.mxu0
        %v2034 = vrot.slane %v2031, 2
        %v2036 = vadd.f32 %v1632, %v2034
        %v2037 = vmul.f32 %v1664, %v1965
        %v2039 = vrot.slane %v2037, 6
        %v2041 = vadd.f32 %v2036, %v2039
        %v2042 = vxor.u32 %v2041, 2147483648
        %v2043 = vmul.f32 %v2042, 1.442695
        %v2044 = vpow.pop %v2043
        %v2045 = vadd.f32 %v2044, 1.0
        %v2046 = vrcp.pop %v2045
        %v2047 = vmul.f32 %v2045, %v2046
        %v2048 = vsub.f32 1.0, %v2047
        %v2049 = vmul.f32 %v2046, %v2048
        %v2050 = vadd.f32 %v2046, %v2049
        %vm2051 = vweird.f32 %v2045
        %vm2052 = vweird.f32 %v2046
        %vm2053 = vmor %vm2051, %vm2052
        %v2054 = vsel %vm2053, %v2046, %v2050
        %v2055 = vand.u32 2147483647, %v2045
        %vm2056 = vcmp.eq.f32.partialorder %v2055, 8.507059e+37
        %v2057 = vand.u32 %v2045, 2147483648
        %v2058 = vor.u32 1.1754944e-38, %v2057
        %v2059 = vsel %vm2056, %v2058, %v2054
        %v2060 = vmul.f32 1.0, %v2059
        %2061 = vrot.lane.b32.xlu0 %v1967, 32
        %v2062 = vpop.permute.xlu0 %2061
        %v2064 = vmul.f32 %v1664, %v2062
        %v2066 = vrot.slane %v2064, 2
        %v2068 = vadd.f32 %v2036, %v2066
        %v2069 = vxor.u32 %v2068, 2147483648
        %v2070 = vmul.f32 %v2069, 1.442695
        %v2071 = vpow.pop %v2070
        %v2072 = vadd.f32 %v2071, 1.0
        %v2073 = vrcp.pop %v2072
        %v2074 = vmul.f32 %v2072, %v2073
        %v2075 = vsub.f32 1.0, %v2074
        %v2076 = vmul.f32 %v2073, %v2075
        %v2077 = vadd.f32 %v2073, %v2076
        %vm2078 = vweird.f32 %v2072
        %vm2079 = vweird.f32 %v2073
        %vm2080 = vmor %vm2078, %vm2079
        %v2081 = vsel %vm2080, %v2073, %v2077
        %v2082 = vand.u32 2147483647, %v2072
        %vm2083 = vcmp.eq.f32.partialorder %v2082, 8.507059e+37
        %v2084 = vand.u32 %v2072, 2147483648
        %v2085 = vor.u32 1.1754944e-38, %v2084
        %v2086 = vsel %vm2083, %v2085, %v2081
        %v2087 = vmul.f32 1.0, %v2086
        %v2088 = vrot.slane %v1965, 6
        %v2090 = vmul.f32 %v2060, %v2088
        %v2091 = vtanh.pop %v2036
        %2093 = vrot.lane.b32.xlu0 %v2091, 96
        %v2094 = vpop.permute.xlu0 %2093
        %v2096 = vmul.f32 %v2087, %v2094
        %2098 = vrot.lane.b32.xlu0 %v2096, 96
        %v2099 = vpop.permute.xlu0 %2098
        %v2101 = vadd.f32 %v2090, %v2099
        %v2103 = vrot.slane %v2101, 6
        %2104 = vrot.lane.b32.xlu0 %v2103, 64
        %v2105 = vpop.permute.xlu0 %2104
        %v2107 = vmul.f32 %v1664, %v2105
        %v2109 = vrot.slane %v2107, 2
        %2110 = vrot.lane.b32.xlu0 %v2109, 32
        %v2111 = vpop.permute.xlu0 %2110
        %v2113 = vadd.f32 %v2036, %v2111
        %v2114 = vxor.u32 %v2113, 2147483648
        %v2115 = vmul.f32 %v2114, 1.442695
        %v2116 = vpow.pop %v2115
        %v2117 = vadd.f32 %v2116, 1.0
        %v2118 = vrcp.pop %v2117
        %v2119 = vmul.f32 %v2117, %v2118
        %v2120 = vsub.f32 1.0, %v2119
        %v2121 = vmul.f32 %v2118, %v2120
        %v2122 = vadd.f32 %v2118, %v2121
        %vm2123 = vweird.f32 %v2117
        %vm2124 = vweird.f32 %v2118
        %vm2125 = vmor %vm2123, %vm2124
        %v2126 = vsel %vm2125, %v2118, %v2122
        %v2127 = vand.u32 2147483647, %v2117
        %vm2128 = vcmp.eq.f32.partialorder %v2127, 8.507059e+37
        %v2129 = vand.u32 %v2117, 2147483648
        %v2130 = vor.u32 1.1754944e-38, %v2129
        %v2131 = vsel %vm2128, %v2130, %v2126
        %v2132 = vmul.f32 1.0, %v2131
        %v2133 = vtanh.pop %v2101
        %2135 = vrot.lane.b32.xlu0 %v2133, 96
        %v2136 = vpop.permute.xlu0 %2135
        %v2138 = vmul.f32 %v2132, %v2136
        %2140 = vrot.lane.b32.xlu0 %v2138, 32
        %v2141 = vpop.permute.xlu0 %2140
        %2143 = vst.msk [vmem:[%s509] sm:$0xc0] %vm1064, %v2141
        %v2144 = vrot.slane %v2138, 6
        %2145 = vrot.lane.b32.xlu0 %v2144, 32
        %v2146 = vpop.permute.xlu0 %2145
        %v2147 = vsel %vm556, %v2146, 0
        %2149 = vmatpush.msra.mxu0 0.0
        %2150 = vmatpush.msra.mxu0 0.0
        %2151 = vmatpush.msra.mxu0 0.0
        %2152 = vmatpush.msra.mxu0 0.0
        %2153 = vmatpush.msra.mxu0 0.0
        %2154 = vmatpush.msra.mxu0 0.0
        %2155 = vmatpush.msra.mxu0 0.0
        %2156 = vmatpush.msra.mxu0 0.0
        %2157 = vmatpush.msra.mxu0 0.0
        %2158 = vmatpush.msra.mxu0 0.0
        %2159 = vmatpush.msra.mxu0 0.0
        %2160 = vmatpush.msra.mxu0 0.0
        %2161 = vmatpush.msra.mxu0 %v1640
        %2162 = vmatpush.msra.mxu0 %v1639
        %2163 = vmatpush.msra.mxu0 %v1638
        %2164 = vmatpush.msra.mxu0 %v1637
        %2165 = vmatmul.f32.gmra.mxu0 %v2147
        %v2166 = vpop.f32.mrf.mxu0
        %v2167 = vadd.f32 0.0, %v2166
        %2168 = vdwg.mxu0
        %v2169 = vadd.f32 %v1635, %v2167
        %v2170 = vmul.f32 %v1664, %v2101
        %v2172 = vrot.slane %v2170, 6
        %v2174 = vadd.f32 %v2169, %v2172
        %v2175 = vxor.u32 %v2174, 2147483648
        %v2176 = vmul.f32 %v2175, 1.442695
        %v2177 = vpow.pop %v2176
        %v2178 = vadd.f32 %v2177, 1.0
        %v2179 = vrcp.pop %v2178
        %v2180 = vmul.f32 %v2178, %v2179
        %v2181 = vsub.f32 1.0, %v2180
        %v2182 = vmul.f32 %v2179, %v2181
        %v2183 = vadd.f32 %v2179, %v2182
        %vm2184 = vweird.f32 %v2178
        %vm2185 = vweird.f32 %v2179
        %vm2186 = vmor %vm2184, %vm2185
        %v2187 = vsel %vm2186, %v2179, %v2183
        %v2188 = vand.u32 2147483647, %v2178
        %vm2189 = vcmp.eq.f32.partialorder %v2188, 8.507059e+37
        %v2190 = vand.u32 %v2178, 2147483648
        %v2191 = vor.u32 1.1754944e-38, %v2190
        %v2192 = vsel %vm2189, %v2191, %v2187
        %v2193 = vmul.f32 1.0, %v2192
        %2194 = vrot.lane.b32.xlu0 %v2103, 32
        %v2195 = vpop.permute.xlu0 %2194
        %v2197 = vmul.f32 %v1664, %v2195
        %v2198 = vadd.f32 %v2169, %v2197
        %v2199 = vxor.u32 %v2198, 2147483648
        %v2200 = vmul.f32 %v2199, 1.442695
        %v2201 = vpow.pop %v2200
        %v2202 = vadd.f32 %v2201, 1.0
        %v2203 = vrcp.pop %v2202
        %v2204 = vmul.f32 %v2202, %v2203
        %v2205 = vsub.f32 1.0, %v2204
        %v2206 = vmul.f32 %v2203, %v2205
        %v2207 = vadd.f32 %v2203, %v2206
        %vm2208 = vweird.f32 %v2202
        %vm2209 = vweird.f32 %v2203
        %vm2210 = vmor %vm2208, %vm2209
        %v2211 = vsel %vm2210, %v2203, %v2207
        %v2212 = vand.u32 2147483647, %v2202
        %vm2213 = vcmp.eq.f32.partialorder %v2212, 8.507059e+37
        %v2214 = vand.u32 %v2202, 2147483648
        %v2215 = vor.u32 1.1754944e-38, %v2214
        %v2216 = vsel %vm2213, %v2215, %v2211
        %v2217 = vmul.f32 1.0, %v2216
        %v2219 = vmul.f32 %v2193, %v2103
        %v2220 = vtanh.pop %v2169
        %2222 = vrot.lane.b32.xlu0 %v2220, 96
        %v2223 = vpop.permute.xlu0 %2222
        %v2225 = vmul.f32 %v2217, %v2223
        %2227 = vrot.lane.b32.xlu0 %v2225, 96
        %v2228 = vpop.permute.xlu0 %2227
        %v2230 = vadd.f32 %v2219, %v2228
        %2232 = vrot.lane.b32.xlu0 %v2230, 64
        %v2233 = vpop.permute.xlu0 %2232
        %v2235 = vmul.f32 %v1664, %v2233
        %2237 = vrot.lane.b32.xlu0 %v2235, 32
        %v2238 = vpop.permute.xlu0 %2237
        %v2240 = vadd.f32 %v2169, %v2238
        %v2241 = vxor.u32 %v2240, 2147483648
        %v2242 = vmul.f32 %v2241, 1.442695
        %v2243 = vpow.pop %v2242
        %v2244 = vadd.f32 %v2243, 1.0
        %v2245 = vrcp.pop %v2244
        %v2246 = vmul.f32 %v2244, %v2245
        %v2247 = vsub.f32 1.0, %v2246
        %v2248 = vmul.f32 %v2245, %v2247
        %v2249 = vadd.f32 %v2245, %v2248
        %vm2250 = vweird.f32 %v2244
        %vm2251 = vweird.f32 %v2245
        %vm2252 = vmor %vm2250, %vm2251
        %v2253 = vsel %vm2252, %v2245, %v2249
        %v2254 = vand.u32 2147483647, %v2244
        %vm2255 = vcmp.eq.f32.partialorder %v2254, 8.507059e+37
        %v2256 = vand.u32 %v2244, 2147483648
        %v2257 = vor.u32 1.1754944e-38, %v2256
        %v2258 = vsel %vm2255, %v2257, %v2253
        %v2259 = vmul.f32 1.0, %v2258
        %v2260 = vtanh.pop %v2230
        %2262 = vrot.lane.b32.xlu0 %v2260, 96
        %v2263 = vpop.permute.xlu0 %2262
        %v2265 = vmul.f32 %v2259, %v2263
        %2267 = vrot.lane.b32.xlu0 %v2265, 32
        %v2268 = vpop.permute.xlu0 %2267
        %2270 = vst.msk [vmem:[%s509 + $0x8] sm:$0x3] %vm656, %v2268
        %v2271 = vsel %vm556, %v2268, 0
        %2273 = vmatpush.msra.mxu0 0.0
        %2274 = vmatpush.msra.mxu0 0.0
        %2275 = vmatpush.msra.mxu0 0.0
        %2276 = vmatpush.msra.mxu0 0.0
        %2277 = vmatpush.msra.mxu0 0.0
        %2278 = vmatpush.msra.mxu0 0.0
        %2279 = vmatpush.msra.mxu0 0.0
        %2280 = vmatpush.msra.mxu0 0.0
        %2281 = vmatpush.msra.mxu0 0.0
        %2282 = vmatpush.msra.mxu0 0.0
        %2283 = vmatpush.msra.mxu0 0.0
        %2284 = vmatpush.msra.mxu0 0.0
        %2285 = vmatpush.msra.mxu0 %v1640
        %2286 = vmatpush.msra.mxu0 %v1639
        %2287 = vmatpush.msra.mxu0 %v1638
        %2288 = vmatpush.msra.mxu0 %v1637
        %2289 = vmatmul.f32.gmra.mxu0 %v2271
        %v2290 = vpop.f32.mrf.mxu0
        %v2291 = vadd.f32 0.0, %v2290
        %2292 = vdwg.mxu0
        %v2294 = vrot.slane %v2291, 6
        %v2296 = vadd.f32 %v1635, %v2294
        %v2297 = vmul.f32 %v1664, %v2230
        %v2299 = vrot.slane %v2297, 6
        %v2301 = vadd.f32 %v2296, %v2299
        %v2302 = vxor.u32 %v2301, 2147483648
        %v2303 = vmul.f32 %v2302, 1.442695
        %v2304 = vpow.pop %v2303
        %v2305 = vadd.f32 %v2304, 1.0
        %v2306 = vrcp.pop %v2305
        %v2307 = vmul.f32 %v2305, %v2306
        %v2308 = vsub.f32 1.0, %v2307
        %v2309 = vmul.f32 %v2306, %v2308
        %v2310 = vadd.f32 %v2306, %v2309
        %vm2311 = vweird.f32 %v2305
        %vm2312 = vweird.f32 %v2306
        %vm2313 = vmor %vm2311, %vm2312
        %v2314 = vsel %vm2313, %v2306, %v2310
        %v2315 = vand.u32 2147483647, %v2305
        %vm2316 = vcmp.eq.f32.partialorder %v2315, 8.507059e+37
        %v2317 = vand.u32 %v2305, 2147483648
        %v2318 = vor.u32 1.1754944e-38, %v2317
        %v2319 = vsel %vm2316, %v2318, %v2314
        %v2320 = vmul.f32 1.0, %v2319
        %2321 = vrot.lane.b32.xlu0 %v2230, 32
        %v2322 = vpop.permute.xlu0 %2321
        %v2324 = vmul.f32 %v1664, %v2322
        %v2326 = vrot.slane %v2324, 6
        %v2328 = vadd.f32 %v2296, %v2326
        %v2329 = vxor.u32 %v2328, 2147483648
        %v2330 = vmul.f32 %v2329, 1.442695
        %v2331 = vpow.pop %v2330
        %v2332 = vadd.f32 %v2331, 1.0
        %v2333 = vrcp.pop %v2332
        %v2334 = vmul.f32 %v2332, %v2333
        %v2335 = vsub.f32 1.0, %v2334
        %v2336 = vmul.f32 %v2333, %v2335
        %v2337 = vadd.f32 %v2333, %v2336
        %vm2338 = vweird.f32 %v2332
        %vm2339 = vweird.f32 %v2333
        %vm2340 = vmor %vm2338, %vm2339
        %v2341 = vsel %vm2340, %v2333, %v2337
        %v2342 = vand.u32 2147483647, %v2332
        %vm2343 = vcmp.eq.f32.partialorder %v2342, 8.507059e+37
        %v2344 = vand.u32 %v2332, 2147483648
        %v2345 = vor.u32 1.1754944e-38, %v2344
        %v2346 = vsel %vm2343, %v2345, %v2341
        %v2347 = vmul.f32 1.0, %v2346
        %v2348 = vrot.slane %v2230, 6
        %v2350 = vmul.f32 %v2320, %v2348
        %v2351 = vtanh.pop %v2296
        %2353 = vrot.lane.b32.xlu0 %v2351, 96
        %v2354 = vpop.permute.xlu0 %2353
        %v2356 = vmul.f32 %v2347, %v2354
        %2358 = vrot.lane.b32.xlu0 %v2356, 96
        %v2359 = vpop.permute.xlu0 %2358
        %v2361 = vadd.f32 %v2350, %v2359
        %v2363 = vrot.slane %v2361, 2
        %2364 = vrot.lane.b32.xlu0 %v2363, 64
        %v2365 = vpop.permute.xlu0 %2364
        %v2367 = vmul.f32 %v1664, %v2365
        %v2369 = vrot.slane %v2367, 6
        %2370 = vrot.lane.b32.xlu0 %v2369, 32
        %v2371 = vpop.permute.xlu0 %2370
        %v2373 = vadd.f32 %v2296, %v2371
        %v2374 = vxor.u32 %v2373, 2147483648
        %v2375 = vmul.f32 %v2374, 1.442695
        %v2376 = vpow.pop %v2375
        %v2377 = vadd.f32 %v2376, 1.0
        %v2378 = vrcp.pop %v2377
        %v2379 = vmul.f32 %v2377, %v2378
        %v2380 = vsub.f32 1.0, %v2379
        %v2381 = vmul.f32 %v2378, %v2380
        %v2382 = vadd.f32 %v2378, %v2381
        %vm2383 = vweird.f32 %v2377
        %vm2384 = vweird.f32 %v2378
        %vm2385 = vmor %vm2383, %vm2384
        %v2386 = vsel %vm2385, %v2378, %v2382
        %v2387 = vand.u32 2147483647, %v2377
        %vm2388 = vcmp.eq.f32.partialorder %v2387, 8.507059e+37
        %v2389 = vand.u32 %v2377, 2147483648
        %v2390 = vor.u32 1.1754944e-38, %v2389
        %v2391 = vsel %vm2388, %v2390, %v2386
        %v2392 = vmul.f32 1.0, %v2391
        %v2393 = vtanh.pop %v2361
        %2395 = vrot.lane.b32.xlu0 %v2393, 96
        %v2396 = vpop.permute.xlu0 %2395
        %v2398 = vmul.f32 %v2392, %v2396
        %2400 = vrot.lane.b32.xlu0 %v2398, 32
        %v2401 = vpop.permute.xlu0 %2400
        %2403 = vst.msk [vmem:[%s509 + $0x8] sm:$0xc] %vm790, %v2401
        %v2404 = vrot.slane %v2398, 2
        %2405 = vrot.lane.b32.xlu0 %v2404, 32
        %v2406 = vpop.permute.xlu0 %2405
        %v2407 = vsel %vm556, %v2406, 0
        %2409 = vmatpush.msra.mxu0 0.0
        %2410 = vmatpush.msra.mxu0 0.0
        %2411 = vmatpush.msra.mxu0 0.0
        %2412 = vmatpush.msra.mxu0 0.0
        %2413 = vmatpush.msra.mxu0 0.0
        %2414 = vmatpush.msra.mxu0 0.0
        %2415 = vmatpush.msra.mxu0 0.0
        %2416 = vmatpush.msra.mxu0 0.0
        %2417 = vmatpush.msra.mxu0 0.0
        %2418 = vmatpush.msra.mxu0 0.0
        %2419 = vmatpush.msra.mxu0 0.0
        %2420 = vmatpush.msra.mxu0 0.0
        %2421 = vmatpush.msra.mxu0 %v1640
        %2422 = vmatpush.msra.mxu0 %v1639
        %2423 = vmatpush.msra.mxu0 %v1638
        %2424 = vmatpush.msra.mxu0 %v1637
        %2425 = vmatmul.f32.gmra.mxu0 %v2407
        %v2426 = vpop.f32.mrf.mxu0
        %v2427 = vadd.f32 0.0, %v2426
        %2428 = vdwg.mxu0
        %v2430 = vrot.slane %v2427, 4
        %v2432 = vadd.f32 %v1635, %v2430
        %v2433 = vmul.f32 %v1664, %v2361
        %v2435 = vrot.slane %v2433, 6
        %v2437 = vadd.f32 %v2432, %v2435
        %v2438 = vxor.u32 %v2437, 2147483648
        %v2439 = vmul.f32 %v2438, 1.442695
        %v2440 = vpow.pop %v2439
        %v2441 = vadd.f32 %v2440, 1.0
        %v2442 = vrcp.pop %v2441
        %v2443 = vmul.f32 %v2441, %v2442
        %v2444 = vsub.f32 1.0, %v2443
        %v2445 = vmul.f32 %v2442, %v2444
        %v2446 = vadd.f32 %v2442, %v2445
        %vm2447 = vweird.f32 %v2441
        %vm2448 = vweird.f32 %v2442
        %vm2449 = vmor %vm2447, %vm2448
        %v2450 = vsel %vm2449, %v2442, %v2446
        %v2451 = vand.u32 2147483647, %v2441
        %vm2452 = vcmp.eq.f32.partialorder %v2451, 8.507059e+37
        %v2453 = vand.u32 %v2441, 2147483648
        %v2454 = vor.u32 1.1754944e-38, %v2453
        %v2455 = vsel %vm2452, %v2454, %v2450
        %v2456 = vmul.f32 1.0, %v2455
        %2457 = vrot.lane.b32.xlu0 %v2363, 32
        %v2458 = vpop.permute.xlu0 %2457
        %v2460 = vmul.f32 %v1664, %v2458
        %v2462 = vrot.slane %v2460, 4
        %v2464 = vadd.f32 %v2432, %v2462
        %v2465 = vxor.u32 %v2464, 2147483648
        %v2466 = vmul.f32 %v2465, 1.442695
        %v2467 = vpow.pop %v2466
        %v2468 = vadd.f32 %v2467, 1.0
        %v2469 = vrcp.pop %v2468
        %v2470 = vmul.f32 %v2468, %v2469
        %v2471 = vsub.f32 1.0, %v2470
        %v2472 = vmul.f32 %v2469, %v2471
        %v2473 = vadd.f32 %v2469, %v2472
        %vm2474 = vweird.f32 %v2468
        %vm2475 = vweird.f32 %v2469
        %vm2476 = vmor %vm2474, %vm2475
        %v2477 = vsel %vm2476, %v2469, %v2473
        %v2478 = vand.u32 2147483647, %v2468
        %vm2479 = vcmp.eq.f32.partialorder %v2478, 8.507059e+37
        %v2480 = vand.u32 %v2468, 2147483648
        %v2481 = vor.u32 1.1754944e-38, %v2480
        %v2482 = vsel %vm2479, %v2481, %v2477
        %v2483 = vmul.f32 1.0, %v2482
        %v2484 = vrot.slane %v2361, 6
        %v2486 = vmul.f32 %v2456, %v2484
        %v2487 = vtanh.pop %v2432
        %2489 = vrot.lane.b32.xlu0 %v2487, 96
        %v2490 = vpop.permute.xlu0 %2489
        %v2492 = vmul.f32 %v2483, %v2490
        %2494 = vrot.lane.b32.xlu0 %v2492, 96
        %v2495 = vpop.permute.xlu0 %2494
        %v2497 = vadd.f32 %v2486, %v2495
        %v2499 = vrot.slane %v2497, 4
        %2500 = vrot.lane.b32.xlu0 %v2499, 64
        %v2501 = vpop.permute.xlu0 %2500
        %v2503 = vmul.f32 %v1664, %v2501
        %v2505 = vrot.slane %v2503, 4
        %2506 = vrot.lane.b32.xlu0 %v2505, 32
        %v2507 = vpop.permute.xlu0 %2506
        %v2509 = vadd.f32 %v2432, %v2507
        %v2510 = vxor.u32 %v2509, 2147483648
        %v2511 = vmul.f32 %v2510, 1.442695
        %v2512 = vpow.pop %v2511
        %v2513 = vadd.f32 %v2512, 1.0
        %v2514 = vrcp.pop %v2513
        %v2515 = vmul.f32 %v2513, %v2514
        %v2516 = vsub.f32 1.0, %v2515
        %v2517 = vmul.f32 %v2514, %v2516
        %v2518 = vadd.f32 %v2514, %v2517
        %vm2519 = vweird.f32 %v2513
        %vm2520 = vweird.f32 %v2514
        %vm2521 = vmor %vm2519, %vm2520
        %v2522 = vsel %vm2521, %v2514, %v2518
        %v2523 = vand.u32 2147483647, %v2513
        %vm2524 = vcmp.eq.f32.partialorder %v2523, 8.507059e+37
        %v2525 = vand.u32 %v2513, 2147483648
        %v2526 = vor.u32 1.1754944e-38, %v2525
        %v2527 = vsel %vm2524, %v2526, %v2522
        %v2528 = vmul.f32 1.0, %v2527
        %v2529 = vtanh.pop %v2497
        %2531 = vrot.lane.b32.xlu0 %v2529, 96
        %v2532 = vpop.permute.xlu0 %2531
        %v2534 = vmul.f32 %v2528, %v2532
        %2536 = vrot.lane.b32.xlu0 %v2534, 32
        %v2537 = vpop.permute.xlu0 %2536
        %2539 = vst.msk [vmem:[%s509 + $0x8] sm:$0x30] %vm927, %v2537
        %v2540 = vrot.slane %v2534, 4
        %2541 = vrot.lane.b32.xlu0 %v2540, 32
        %v2542 = vpop.permute.xlu0 %2541
        %v2543 = vsel %vm556, %v2542, 0
        %2545 = vmatpush.msra.mxu0 0.0
        %2546 = vmatpush.msra.mxu0 0.0
        %2547 = vmatpush.msra.mxu0 0.0
        %2548 = vmatpush.msra.mxu0 0.0
        %2549 = vmatpush.msra.mxu0 0.0
        %2550 = vmatpush.msra.mxu0 0.0
        %2551 = vmatpush.msra.mxu0 0.0
        %2552 = vmatpush.msra.mxu0 0.0
        %2553 = vmatpush.msra.mxu0 0.0
        %2554 = vmatpush.msra.mxu0 0.0
        %2555 = vmatpush.msra.mxu0 0.0
        %2556 = vmatpush.msra.mxu0 0.0
        %2557 = vmatpush.msra.mxu0 %v1640
        %2558 = vmatpush.msra.mxu0 %v1639
        %2559 = vmatpush.msra.mxu0 %v1638
        %2560 = vmatpush.msra.mxu0 %v1637
        %2561 = vmatmul.f32.gmra.mxu0 %v2543
        %v2562 = vpop.f32.mrf.mxu0
        %v2563 = vadd.f32 0.0, %v2562
        %2564 = vdwg.mxu0
        %v2566 = vrot.slane %v2563, 2
        %v2568 = vadd.f32 %v1635, %v2566
        %v2569 = vmul.f32 %v1664, %v2497
        %v2571 = vrot.slane %v2569, 6
        %v2573 = vadd.f32 %v2568, %v2571
        %v2574 = vxor.u32 %v2573, 2147483648
        %v2575 = vmul.f32 %v2574, 1.442695
        %v2576 = vpow.pop %v2575
        %v2577 = vadd.f32 %v2576, 1.0
        %v2578 = vrcp.pop %v2577
        %v2579 = vmul.f32 %v2577, %v2578
        %v2580 = vsub.f32 1.0, %v2579
        %v2581 = vmul.f32 %v2578, %v2580
        %v2582 = vadd.f32 %v2578, %v2581
        %vm2583 = vweird.f32 %v2577
        %vm2584 = vweird.f32 %v2578
        %vm2585 = vmor %vm2583, %vm2584
        %v2586 = vsel %vm2585, %v2578, %v2582
        %v2587 = vand.u32 2147483647, %v2577
        %vm2588 = vcmp.eq.f32.partialorder %v2587, 8.507059e+37
        %v2589 = vand.u32 %v2577, 2147483648
        %v2590 = vor.u32 1.1754944e-38, %v2589
        %v2591 = vsel %vm2588, %v2590, %v2586
        %v2592 = vmul.f32 1.0, %v2591
        %2593 = vrot.lane.b32.xlu0 %v2499, 32
        %v2594 = vpop.permute.xlu0 %2593
        %v2596 = vmul.f32 %v1664, %v2594
        %v2598 = vrot.slane %v2596, 2
        %v2600 = vadd.f32 %v2568, %v2598
        %v2601 = vxor.u32 %v2600, 2147483648
        %v2602 = vmul.f32 %v2601, 1.442695
        %v2603 = vpow.pop %v2602
        %v2604 = vadd.f32 %v2603, 1.0
        %v2605 = vrcp.pop %v2604
        %v2606 = vmul.f32 %v2604, %v2605
        %v2607 = vsub.f32 1.0, %v2606
        %v2608 = vmul.f32 %v2605, %v2607
        %v2609 = vadd.f32 %v2605, %v2608
        %vm2610 = vweird.f32 %v2604
        %vm2611 = vweird.f32 %v2605
        %vm2612 = vmor %vm2610, %vm2611
        %v2613 = vsel %vm2612, %v2605, %v2609
        %v2614 = vand.u32 2147483647, %v2604
        %vm2615 = vcmp.eq.f32.partialorder %v2614, 8.507059e+37
        %v2616 = vand.u32 %v2604, 2147483648
        %v2617 = vor.u32 1.1754944e-38, %v2616
        %v2618 = vsel %vm2615, %v2617, %v2613
        %v2619 = vmul.f32 1.0, %v2618
        %v2620 = vrot.slane %v2497, 6
        %v2622 = vmul.f32 %v2592, %v2620
        %v2623 = vtanh.pop %v2568
        %2625 = vrot.lane.b32.xlu0 %v2623, 96
        %v2626 = vpop.permute.xlu0 %2625
        %v2628 = vmul.f32 %v2619, %v2626
        %2630 = vrot.lane.b32.xlu0 %v2628, 96
        %v2631 = vpop.permute.xlu0 %2630
        %v2633 = vadd.f32 %v2622, %v2631
        %v2635 = vrot.slane %v2633, 6
        %2636 = vrot.lane.b32.xlu0 %v2635, 64
        %v2637 = vpop.permute.xlu0 %2636
        %v2639 = vmul.f32 %v1664, %v2637
        %v2641 = vrot.slane %v2639, 2
        %2642 = vrot.lane.b32.xlu0 %v2641, 32
        %v2643 = vpop.permute.xlu0 %2642
        %v2645 = vadd.f32 %v2568, %v2643
        %v2646 = vxor.u32 %v2645, 2147483648
        %v2647 = vmul.f32 %v2646, 1.442695
        %v2648 = vpow.pop %v2647
        %v2649 = vadd.f32 %v2648, 1.0
        %v2650 = vrcp.pop %v2649
        %v2651 = vmul.f32 %v2649, %v2650
        %v2652 = vsub.f32 1.0, %v2651
        %v2653 = vmul.f32 %v2650, %v2652
        %v2654 = vadd.f32 %v2650, %v2653
        %vm2655 = vweird.f32 %v2649
        %vm2656 = vweird.f32 %v2650
        %vm2657 = vmor %vm2655, %vm2656
        %v2658 = vsel %vm2657, %v2650, %v2654
        %v2659 = vand.u32 2147483647, %v2649
        %vm2660 = vcmp.eq.f32.partialorder %v2659, 8.507059e+37
        %v2661 = vand.u32 %v2649, 2147483648
        %v2662 = vor.u32 1.1754944e-38, %v2661
        %v2663 = vsel %vm2660, %v2662, %v2658
        %v2664 = vmul.f32 1.0, %v2663
        %v2665 = vtanh.pop %v2633
        %2667 = vrot.lane.b32.xlu0 %v2665, 96
        %v2668 = vpop.permute.xlu0 %2667
        %v2670 = vmul.f32 %v2664, %v2668
        %2672 = vrot.lane.b32.xlu0 %v2670, 32
        %v2673 = vpop.permute.xlu0 %2672
        %2675 = vst.msk [vmem:[%s509 + $0x8] sm:$0xc0] %vm1064, %v2673
        %p2676 = scmp.lt.s32.totalorder %s26, 1
        %s2677 = scalar_select %p2676, %s26, 1
        %s2678 = smul.addr %s2677, 2
        %s2679 = smul.addr %s2678, 8
        %s2680 = scalar_lea.vmem %s9, %s2679
        // Predicated region
        $region65: #{custom_lstm_peephole_bid.1} parent=55 // pred_check
          %p2681 = pneg %p278
        $region66: #{custom_lstm_peephole_bid.1} parent=55 // pred_check_branch
          %2683 = sbr.rel (%p2681) target = $region68
        $region67: #{custom_lstm_peephole_bid.1} parent=55 // pred_region
          _
        $region68: #{custom_lstm_peephole_bid.1} parent=55 // pred_fallthru
          _
      $region56: #{custom_lstm_peephole_bid.1} parent=5 // pred_fallthru
        _
      %p2684 = scmp.le.s32.totalorder 2, %s21
      // Predicated region
      $region69: #{custom_lstm_peephole_bid.1} parent=5 // pred_check
        %p2685 = pneg %p2684
      $region70: #{custom_lstm_peephole_bid.1} parent=5 // pred_check_branch
        %2687 = sbr.rel (%p2685) target = $region72
      $region71: #{custom_lstm_peephole_bid.1} parent=5 // pred_region
        %s2688 = ssub.s32 %s21, 2
        // Predicated region
        $region73: #{custom_lstm_peephole_bid.1} parent=71 // pred_check
          %p2689 = pneg %p284
        $region74: #{custom_lstm_peephole_bid.1} parent=71 // pred_check_branch
          %2691 = sbr.rel (%p2689) target = $region76
        $region75: #{custom_lstm_peephole_bid.1} parent=71 // pred_region
          %p2692 = scmp.lt.s32.totalorder %s27, 1
          %s2693 = scalar_select %p2692, %s27, 1
          %s2694 = smul.addr %s2693, 2
          %s2695 = smul.addr %s2694, 8
          %s2696 = scalar_lea.vmem %s9, %s2695
        $region76: #{custom_lstm_peephole_bid.1} parent=71 // pred_fallthru
          _
      $region72: #{custom_lstm_peephole_bid.1} parent=5 // pred_fallthru
        _
    $region6: #{custom_lstm_peephole_bid.1} parent=1 // loop_footer
      %s25 = sadd.s32 1, %s21
    $region7: #{custom_lstm_peephole_bid.1} parent=1 // loop_footer_branch
      %20 = sbr.rel target = $region3
    $region8: #{custom_lstm_peephole_bid.1} parent=1 // loop_exit
      _
    %2697 = vsyncpa [#allocation4], 1
    %s2698 = scalar_lea.sflag [#allocation4], 1
    %2699 = vsyncpa %s2698, 1
    %2700 = vsyncpa [#allocation6], 1
    %s2701 = scalar_lea.sflag [#allocation6], 1
    %2702 = vsyncpa %s2701, 1

</llo_original>
